<compile_context>
chip_gen: v7x
topology: tpu7x:2x2x1
jax: 0.10.0
libtpu: 0.0.40
codegen_flags: <defaults>
</compile_context>

<pallas_src>
import jax
import jax.numpy as jnp
from jax.experimental import pallas as pl
from jax.experimental.pallas import tpu as pltpu

NUM_LAYERS = 3
HIDDEN = 64          # H: LSTM hidden size (half of a 128-lane slot)
INPUT_SIZE = 128
SLOT = 128           # one full vreg-lane slot per gate
GATES = 4 * SLOT     # padded gate width (i, f, g, o), each in its own slot


def lstm_kernel(x_ref, w_ih0_ref, w_hh0_ref, w_fused_ref, b_ref,
                fc_w_ref, fc_b_ref, out_ref, xp_ref):
    """Whole 3-layer LSTM + FC head, grid-less, fully resident in VMEM.

    x_ref      : (T, Bp, 128)     f32   time-major input, batch padded to 8
    w_ih0_ref  : (128, 512)       bf16  layer-0 W_ih^T, gate-slot padded cols
    w_hh0_ref  : (128, 512)       bf16  layer-0 W_hh^T, rows [64:128) = 0
    w_fused_ref: (L-1, 256, 512)  bf16  layers 1..2 [W_ih^T; W_hh^T] stacked,
                                        rows [64:128) and [192:256) = 0
    b_ref      : (L, 1, 512)      f32   b_ih + b_hh, gate-slot padded
    fc_w_ref   : (1, 128)         f32   FC weight, lanes [64:128) = 0
    fc_b_ref   : (1, 1)           f32
    out_ref    : (T, Bp)          f32   FC output (time-major)
    xp_ref     : (T, Bp, 512)     f32   scratch: hoisted layer-0 projection
    """
    T, Bp, D = x_ref.shape
    L = NUM_LAYERS

    # ---- hoisted layer-0 input projection: ONE (T*Bp, 128) x (128, 512) MXU
    # matmul with the bias folded in; off the serial recurrence chain. ----
    x2 = x_ref[...].reshape(T * Bp, D).astype(jnp.bfloat16)
    xp = jnp.dot(x2, w_ih0_ref[...], preferred_element_type=jnp.float32) + b_ref[0]
    xp_ref[...] = xp.reshape(T, Bp, GATES)

    # h/c live in lanes [0:H) of a 128-lane vector; lanes [H:128) stay exactly 0
    # because the corresponding weight rows / bias columns are zero-padded.
    h_state = [jnp.zeros((Bp, SLOT), jnp.float32) for _ in range(L)]
    c_state = [jnp.zeros((Bp, SLOT), jnp.float32) for _ in range(L)]
    top_h = [None] * T

    # ---- layer-time wavefront: all cells with l + t == s depend only on
    # step s-1 outputs, so they are emitted together and interleave on the
    # MXU / EUP / VPU.  Critical chain: T + L - 1 = 7 cells, not T*L = 15. ----
    for s in range(T + L - 1):
        h_in = list(h_state)            # snapshot of step s-1 outputs
        c_in = list(c_state)
        for l in range(L):
            t = s - l
            if t < 0 or t >= T:
                continue
            if l == 0:
                # xp already holds x_t @ W_ih + b; only h @ W_hh is serial.
                pre = xp_ref[t] + jnp.dot(
                    h_in[0].astype(jnp.bfloat16), w_hh0_ref[...],
                    preferred_element_type=jnp.float32)
            else:
                # Fused input + recurrent matmul: one K=256 MXU push per cell.
                lhs = jnp.concatenate([h_in[l - 1], h_in[l]], axis=1)
                pre = jnp.dot(
                    lhs.astype(jnp.bfloat16), w_fused_ref[l - 1],
                    preferred_element_type=jnp.float32) + b_ref[l]

            # Each gate sits in its own 128-lane slot: every slice below is
            # vreg-aligned, and the c/h update needs no rolls and no masks.
            i = jax.nn.sigmoid(pre[:, 0 * SLOT:1 * SLOT])
            f = jax.nn.sigmoid(pre[:, 1 * SLOT:2 * SLOT])
            g = jnp.tanh(pre[:, 2 * SLOT:3 * SLOT])
            o = jax.nn.sigmoid(pre[:, 3 * SLOT:4 * SLOT])
            c = f * c_in[l] + i * g
            h = o * jnp.tanh(c)

            c_state[l] = c
            h_state[l] = h
            if l == L - 1:
                top_h[t] = h

    # ---- FC head: VPU multiply + XLU lane reduction (no N=1 MXU matmul) ----
    hs = jnp.stack(top_h, axis=0)                        # (T, Bp, 128)
    out_ref[...] = jnp.sum(hs * fc_w_ref[...], axis=-1) + fc_b_ref[...]


def _slot_pad_gates(w):
    """Put each 64-wide gate block (order i, f, g, o) into its own 128-lane slot."""
    pad = [(0, 0)] * (w.ndim - 1) + [(0, SLOT - HIDDEN)]
    parts = [jnp.pad(w[..., g * HIDDEN:(g + 1) * HIDDEN], pad) for g in range(4)]
    return jnp.concatenate(parts, axis=-1)


def _row_pad(w):
    """Zero-pad rows [H:128): they multiply the (zero) padding lanes of h."""
    return jnp.pad(w, ((0, SLOT - w.shape[0]), (0, 0)))


def init_params(key):
    """Random params (PyTorch-style U(-1/sqrt(H), 1/sqrt(H))) in two layouts.

    Returns (kernel_params, raw_params).  To load real PyTorch weights:
    transpose each (4H, D) weight to (D, 4H) keeping gate order (i, f, g, o),
    use b = b_ih + b_hh, then apply the same padding below.
    """
    H, L, G = HIDDEN, NUM_LAYERS, 4 * HIDDEN
    bound = 1.0 / jnp.sqrt(jnp.float32(H))
    keys = jax.random.split(key, 3 * L + 2)
    u = lambda kk, shape: jax.random.uniform(kk, shape, jnp.float32, -bound, bound)

    # bf16 round-trip so the f32 reference sees exactly the kernel's weights.
    rt = lambda w: w.astype(jnp.bfloat16).astype(jnp.float32)
    w_ih = [rt(u(keys[3 * l], (INPUT_SIZE if l == 0 else H, G))) for l in range(L)]
    w_hh = [rt(u(keys[3 * l + 1], (H, G))) for l in range(L)]
    b = [u(keys[3 * l + 2], (G,)) for l in range(L)]      # stands in for b_ih + b_hh
    fc_w = u(keys[3 * L], (H,))
    fc_b = u(keys[3 * L + 1], (1,))

    fused = []
    for l in range(1, L):
        fused.append(jnp.concatenate(
            [_row_pad(_slot_pad_gates(w_ih[l])),
             _row_pad(_slot_pad_gates(w_hh[l]))], axis=0))            # (256, 512)

    kernel_params = dict(
        w_ih0=_slot_pad_gates(w_ih[0]).astype(jnp.bfloat16),            # (128, 512)
        w_hh0=_row_pad(_slot_pad_gates(w_hh[0])).astype(jnp.bfloat16),  # (128, 512)
        w_fused=jnp.stack(fused, axis=0).astype(jnp.bfloat16),          # (2, 256, 512)
        b=jnp.stack([_slot_pad_gates(bl) for bl in b], 0).reshape(L, 1, GATES),
        fc_w=jnp.pad(fc_w, (0, SLOT - H)).reshape(1, SLOT),
        fc_b=fc_b.reshape(1, 1),
    )
    raw_params = dict(w_ih=w_ih, w_hh=w_hh, b=b, fc_w=fc_w, fc_b=fc_b)
    return kernel_params, raw_params


@jax.jit
def lstm_forward(x, params):
    """x: (B, T, 128) batch-first, like PyTorch.  Returns (B*T, 1)."""
    B, T, _ = x.shape
    Bp = ((B + 7) // 8) * 8                    # pad batch to the 8-sublane tile
    x_tm = jnp.transpose(x, (1, 0, 2))         # time-major (T, B, 128)
    x_tm = jnp.pad(x_tm, ((0, 0), (0, Bp - B), (0, 0)))
    out_tm = pl.pallas_call(
        lstm_kernel,
        out_shape=jax.ShapeDtypeStruct((T, Bp), jnp.float32),
        scratch_shapes=[pltpu.VMEM((T, Bp, GATES), jnp.float32)],
    )(x_tm, params["w_ih0"], params["w_hh0"], params["w_fused"],
      params["b"], params["fc_w"], params["fc_b"])
    # (T, Bp) -> (B, T) -> (B*T, 1): matches torch .reshape(-1, H) row order.
    return jnp.transpose(out_tm[:, :B], (1, 0)).reshape(B * T, 1)


def lstm_reference(x, raw):
    """Pure-JAX f32 reference (weights already bf16-rounded like the kernel)."""
    B, T, _ = x.shape
    hp = jax.lax.Precision.HIGHEST
    h = [jnp.zeros((B, HIDDEN), jnp.float32) for _ in range(NUM_LAYERS)]
    c = [jnp.zeros((B, HIDDEN), jnp.float32) for _ in range(NUM_LAYERS)]
    outs = []
    for t in range(T):
        inp = x[:, t, :]
        for l in range(NUM_LAYERS):
            pre = (jnp.dot(inp, raw["w_ih"][l], precision=hp)
                   + jnp.dot(h[l], raw["w_hh"][l], precision=hp) + raw["b"][l])
            i, f, g, o = jnp.split(pre, 4, axis=1)
            c[l] = jax.nn.sigmoid(f) * c[l] + jax.nn.sigmoid(i) * jnp.tanh(g)
            h[l] = jax.nn.sigmoid(o) * jnp.tanh(c[l])
            inp = h[l]
        outs.append(h[-1])
    hs = jnp.stack(outs, axis=1).reshape(-1, HIDDEN)      # (B*T, H), batch-major
    return (jnp.dot(hs, raw["fc_w"].reshape(HIDDEN, 1), precision=hp)
            + raw["fc_b"].reshape(1, 1))


if __name__ == "__main__":
    key = jax.random.PRNGKey(0)
    k_param, k_x = jax.random.split(key)
    kernel_params, raw_params = init_params(k_param)

    # matches: sample_input = torch.rand(size=(4, 5, 128))
    x = jax.random.uniform(k_x, (4, 5, 128), jnp.float32)

    out = jax.block_until_ready(lstm_forward(x, kernel_params))
    assert out.shape == (4 * 5, 1), out.shape

    ref = lstm_reference(x, raw_params)
    max_err = float(jnp.max(jnp.abs(out - ref)))
    assert max_err < 5e-2, f"max abs error vs reference: {max_err}"

    print("KERNEL_OK")
</pallas_src>

<mosaic_0001>
module attributes {stable_mosaic.version = 11 : i64} {
  func.func @lstm_kernel(%arg0: memref<5x8x128xf32, #tpu.memory_space<vmem>>, %arg1: memref<128x512xbf16, #tpu.memory_space<vmem>>, %arg2: memref<128x512xbf16, #tpu.memory_space<vmem>>, %arg3: memref<2x256x512xbf16, #tpu.memory_space<vmem>>, %arg4: memref<3x1x512xf32, #tpu.memory_space<vmem>>, %arg5: memref<1x128xf32, #tpu.memory_space<vmem>>, %arg6: memref<1x1xf32, #tpu.memory_space<vmem>>, %arg7: memref<5x8xf32, #tpu.memory_space<vmem>>, %arg8: memref<5x8x512xf32, #tpu.memory_space<vmem>>) attributes {dimension_semantics = [], scalar_prefetch = 0 : i64, scratch_operands = 1 : i64, tpu.core_type = #tpu.core_type<tc>} {
    %c0 = arith.constant 0 : index
    %c0_0 = arith.constant 0 : index
    %c0_1 = arith.constant 0 : index
    %0 = vector.load %arg0[%c0, %c0_0, %c0_1] : memref<5x8x128xf32, #tpu.memory_space<vmem>>, vector<5x8x128xf32>
    %1 = vector.shape_cast %0 : vector<5x8x128xf32> to vector<40x128xf32>
    %2 = arith.truncf %1 : vector<40x128xf32> to vector<40x128xbf16>
    %c0_2 = arith.constant 0 : index
    %c0_3 = arith.constant 0 : index
    %3 = vector.load %arg1[%c0_2, %c0_3] : memref<128x512xbf16, #tpu.memory_space<vmem>>, vector<128x512xbf16>
    %cst = arith.constant dense<0.000000e+00> : vector<40x512xf32>
    %4 = tpu.matmul %2, %3, %cst {dimension_numbers = #tpu.dot_dimension_numbers<[1], [0], [0], [1], [0, 0, 1, 1], [], []>} : vector<40x128xbf16>, vector<128x512xbf16>, vector<40x512xf32> -> vector<40x512xf32>
    %c0_4 = arith.constant 0 : index
    %c0_5 = arith.constant 0 : index
    %c0_6 = arith.constant 0 : index
    %5 = vector.load %arg4[%c0_4, %c0_5, %c0_6] : memref<3x1x512xf32, #tpu.memory_space<vmem>>, vector<1x1x512xf32>
    %6 = vector.shape_cast %5 : vector<1x1x512xf32> to vector<1x512xf32>
    %7 = vector.broadcast %6 : vector<1x512xf32> to vector<40x512xf32>
    %8 = arith.addf %4, %7 : vector<40x512xf32>
    %9 = vector.shape_cast %8 : vector<40x512xf32> to vector<5x8x512xf32>
    %c0_7 = arith.constant 0 : index
    %c0_8 = arith.constant 0 : index
    %c0_9 = arith.constant 0 : index
    %10 = vector.load %arg8[%c0_7, %c0_8, %c0_9] : memref<5x8x512xf32, #tpu.memory_space<vmem>>, vector<5x8x512xf32>
    tpu.vector_store %arg8[%c0_7, %c0_8, %c0_9], %9 {strides = array<i32>} : memref<5x8x512xf32, #tpu.memory_space<vmem>>, vector<5x8x512xf32>,
    %cst_10 = arith.constant 0.000000e+00 : f32
    %11 = vector.broadcast %cst_10 : f32 to vector<8x128xf32>
    %cst_11 = arith.constant 0.000000e+00 : f32
    %12 = vector.broadcast %cst_11 : f32 to vector<8x128xf32>
    %cst_12 = arith.constant 0.000000e+00 : f32
    %13 = vector.broadcast %cst_12 : f32 to vector<8x128xf32>
    %cst_13 = arith.constant 0.000000e+00 : f32
    %14 = vector.broadcast %cst_13 : f32 to vector<8x128xf32>
    %cst_14 = arith.constant 0.000000e+00 : f32
    %15 = vector.broadcast %cst_14 : f32 to vector<8x128xf32>
    %cst_15 = arith.constant 0.000000e+00 : f32
    %16 = vector.broadcast %cst_15 : f32 to vector<8x128xf32>
    %c0_16 = arith.constant 0 : index
    %c0_17 = arith.constant 0 : index
    %c0_18 = arith.constant 0 : index
    %17 = vector.load %arg8[%c0_16, %c0_17, %c0_18] : memref<5x8x512xf32, #tpu.memory_space<vmem>>, vector<1x8x512xf32>
    %18 = vector.shape_cast %17 : vector<1x8x512xf32> to vector<8x512xf32>
    %19 = arith.truncf %11 : vector<8x128xf32> to vector<8x128xbf16>
    %c0_19 = arith.constant 0 : index
    %c0_20 = arith.constant 0 : index
    %20 = vector.load %arg2[%c0_19, %c0_20] : memref<128x512xbf16, #tpu.memory_space<vmem>>, vector<128x512xbf16>
    %cst_21 = arith.constant dense<0.000000e+00> : vector<8x512xf32>
    %21 = tpu.matmul %19, %20, %cst_21 {dimension_numbers = #tpu.dot_dimension_numbers<[1], [0], [0], [1], [0, 0, 1, 1], [], []>} : vector<8x128xbf16>, vector<128x512xbf16>, vector<8x512xf32> -> vector<8x512xf32>
    %22 = arith.addf %18, %21 : vector<8x512xf32>
    %23 = vector.extract_strided_slice %22 {offsets = [0, 0], sizes = [8, 128], strides = [1, 1]} : vector<8x512xf32> to vector<8x128xf32>
    %24 = arith.negf %23 : vector<8x128xf32>
    %25 = math.exp %24 : vector<8x128xf32>
    %cst_22 = arith.constant 1.000000e+00 : f32
    %26 = vector.broadcast %cst_22 : f32 to vector<8x128xf32>
    %27 = arith.addf %26, %25 : vector<8x128xf32>
    %28 = arith.divf %26, %27 : vector<8x128xf32>
    %29 = vector.extract_strided_slice %22 {offsets = [0, 128], sizes = [8, 128], strides = [1, 1]} : vector<8x512xf32> to vector<8x128xf32>
    %30 = arith.negf %29 : vector<8x128xf32>
    %31 = math.exp %30 : vector<8x128xf32>
    %cst_23 = arith.constant 1.000000e+00 : f32
    %32 = vector.broadcast %cst_23 : f32 to vector<8x128xf32>
    %33 = arith.addf %32, %31 : vector<8x128xf32>
    %34 = arith.divf %32, %33 : vector<8x128xf32>
    %35 = vector.extract_strided_slice %22 {offsets = [0, 256], sizes = [8, 128], strides = [1, 1]} : vector<8x512xf32> to vector<8x128xf32>
    %36 = math.tanh %35 : vector<8x128xf32>
    %37 = vector.extract_strided_slice %22 {offsets = [0, 384], sizes = [8, 128], strides = [1, 1]} : vector<8x512xf32> to vector<8x128xf32>
    %38 = arith.negf %37 : vector<8x128xf32>
    %39 = math.exp %38 : vector<8x128xf32>
    %cst_24 = arith.constant 1.000000e+00 : f32
    %40 = vector.broadcast %cst_24 : f32 to vector<8x128xf32>
    %41 = arith.addf %40, %39 : vector<8x128xf32>
    %42 = arith.divf %40, %41 : vector<8x128xf32>
    %43 = arith.mulf %34, %14 : vector<8x128xf32>
    %44 = arith.mulf %28, %36 : vector<8x128xf32>
    %45 = arith.addf %43, %44 : vector<8x128xf32>
    %46 = math.tanh %45 : vector<8x128xf32>
    %47 = arith.mulf %42, %46 : vector<8x128xf32>
    %c1 = arith.constant 1 : index
    %c0_25 = arith.constant 0 : index
    %c0_26 = arith.constant 0 : index
    %48 = vector.load %arg8[%c1, %c0_25, %c0_26] : memref<5x8x512xf32, #tpu.memory_space<vmem>>, vector<1x8x512xf32>
    %49 = vector.shape_cast %48 : vector<1x8x512xf32> to vector<8x512xf32>
    %50 = arith.truncf %47 : vector<8x128xf32> to vector<8x128xbf16>
    %c0_27 = arith.constant 0 : index
    %c0_28 = arith.constant 0 : index
    %51 = vector.load %arg2[%c0_27, %c0_28] : memref<128x512xbf16, #tpu.memory_space<vmem>>, vector<128x512xbf16>
    %cst_29 = arith.constant dense<0.000000e+00> : vector<8x512xf32>
    %52 = tpu.matmul %50, %51, %cst_29 {dimension_numbers = #tpu.dot_dimension_numbers<[1], [0], [0], [1], [0, 0, 1, 1], [], []>} : vector<8x128xbf16>, vector<128x512xbf16>, vector<8x512xf32> -> vector<8x512xf32>
    %53 = arith.addf %49, %52 : vector<8x512xf32>
    %54 = vector.extract_strided_slice %53 {offsets = [0, 0], sizes = [8, 128], strides = [1, 1]} : vector<8x512xf32> to vector<8x128xf32>
    %55 = arith.negf %54 : vector<8x128xf32>
    %56 = math.exp %55 : vector<8x128xf32>
    %cst_30 = arith.constant 1.000000e+00 : f32
    %57 = vector.broadcast %cst_30 : f32 to vector<8x128xf32>
    %58 = arith.addf %57, %56 : vector<8x128xf32>
    %59 = arith.divf %57, %58 : vector<8x128xf32>
    %60 = vector.extract_strided_slice %53 {offsets = [0, 128], sizes = [8, 128], strides = [1, 1]} : vector<8x512xf32> to vector<8x128xf32>
    %61 = arith.negf %60 : vector<8x128xf32>
    %62 = math.exp %61 : vector<8x128xf32>
    %cst_31 = arith.constant 1.000000e+00 : f32
    %63 = vector.broadcast %cst_31 : f32 to vector<8x128xf32>
    %64 = arith.addf %63, %62 : vector<8x128xf32>
    %65 = arith.divf %63, %64 : vector<8x128xf32>
    %66 = vector.extract_strided_slice %53 {offsets = [0, 256], sizes = [8, 128], strides = [1, 1]} : vector<8x512xf32> to vector<8x128xf32>
    %67 = math.tanh %66 : vector<8x128xf32>
    %68 = vector.extract_strided_slice %53 {offsets = [0, 384], sizes = [8, 128], strides = [1, 1]} : vector<8x512xf32> to vector<8x128xf32>
    %69 = arith.negf %68 : vector<8x128xf32>
    %70 = math.exp %69 : vector<8x128xf32>
    %cst_32 = arith.constant 1.000000e+00 : f32
    %71 = vector.broadcast %cst_32 : f32 to vector<8x128xf32>
    %72 = arith.addf %71, %70 : vector<8x128xf32>
    %73 = arith.divf %71, %72 : vector<8x128xf32>
    %74 = arith.mulf %65, %45 : vector<8x128xf32>
    %75 = arith.mulf %59, %67 : vector<8x128xf32>
    %76 = arith.addf %74, %75 : vector<8x128xf32>
    %77 = math.tanh %76 : vector<8x128xf32>
    %78 = arith.mulf %73, %77 : vector<8x128xf32>
    %79 = tpu.concatenate %47, %12 in 1 : vector<8x128xf32>, vector<8x128xf32> -> vector<8x256xf32>
    %80 = arith.truncf %79 : vector<8x256xf32> to vector<8x256xbf16>
    %c0_33 = arith.constant 0 : index
    %c0_34 = arith.constant 0 : index
    %c0_35 = arith.constant 0 : index
    %81 = vector.load %arg3[%c0_33, %c0_34, %c0_35] : memref<2x256x512xbf16, #tpu.memory_space<vmem>>, vector<1x256x512xbf16>
    %82 = vector.shape_cast %81 : vector<1x256x512xbf16> to vector<256x512xbf16>
    %cst_36 = arith.constant dense<0.000000e+00> : vector<8x512xf32>
    %83 = tpu.matmul %80, %82, %cst_36 {dimension_numbers = #tpu.dot_dimension_numbers<[1], [0], [0], [1], [0, 0, 1, 1], [], []>} : vector<8x256xbf16>, vector<256x512xbf16>, vector<8x512xf32> -> vector<8x512xf32>
    %c1_37 = arith.constant 1 : index
    %c0_38 = arith.constant 0 : index
    %c0_39 = arith.constant 0 : index
    %84 = vector.load %arg4[%c1_37, %c0_38, %c0_39] : memref<3x1x512xf32, #tpu.memory_space<vmem>>, vector<1x1x512xf32>
    %85 = vector.shape_cast %84 : vector<1x1x512xf32> to vector<1x512xf32>
    %86 = vector.broadcast %85 : vector<1x512xf32> to vector<8x512xf32>
    %87 = arith.addf %83, %86 : vector<8x512xf32>
    %88 = vector.extract_strided_slice %87 {offsets = [0, 0], sizes = [8, 128], strides = [1, 1]} : vector<8x512xf32> to vector<8x128xf32>
    %89 = arith.negf %88 : vector<8x128xf32>
    %90 = math.exp %89 : vector<8x128xf32>
    %cst_40 = arith.constant 1.000000e+00 : f32
    %91 = vector.broadcast %cst_40 : f32 to vector<8x128xf32>
    %92 = arith.addf %91, %90 : vector<8x128xf32>
    %93 = arith.divf %91, %92 : vector<8x128xf32>
    %94 = vector.extract_strided_slice %87 {offsets = [0, 128], sizes = [8, 128], strides = [1, 1]} : vector<8x512xf32> to vector<8x128xf32>
    %95 = arith.negf %94 : vector<8x128xf32>
    %96 = math.exp %95 : vector<8x128xf32>
    %cst_41 = arith.constant 1.000000e+00 : f32
    %97 = vector.broadcast %cst_41 : f32 to vector<8x128xf32>
    %98 = arith.addf %97, %96 : vector<8x128xf32>
    %99 = arith.divf %97, %98 : vector<8x128xf32>
    %100 = vector.extract_strided_slice %87 {offsets = [0, 256], sizes = [8, 128], strides = [1, 1]} : vector<8x512xf32> to vector<8x128xf32>
    %101 = math.tanh %100 : vector<8x128xf32>
    %102 = vector.extract_strided_slice %87 {offsets = [0, 384], sizes = [8, 128], strides = [1, 1]} : vector<8x512xf32> to vector<8x128xf32>
    %103 = arith.negf %102 : vector<8x128xf32>
    %104 = math.exp %103 : vector<8x128xf32>
    %cst_42 = arith.constant 1.000000e+00 : f32
    %105 = vector.broadcast %cst_42 : f32 to vector<8x128xf32>
    %106 = arith.addf %105, %104 : vector<8x128xf32>
    %107 = arith.divf %105, %106 : vector<8x128xf32>
    %108 = arith.mulf %99, %15 : vector<8x128xf32>
    %109 = arith.mulf %93, %101 : vector<8x128xf32>
    %110 = arith.addf %108, %109 : vector<8x128xf32>
    %111 = math.tanh %110 : vector<8x128xf32>
    %112 = arith.mulf %107, %111 : vector<8x128xf32>
    %c2 = arith.constant 2 : index
    %c0_43 = arith.constant 0 : index
    %c0_44 = arith.constant 0 : index
    %113 = vector.load %arg8[%c2, %c0_43, %c0_44] : memref<5x8x512xf32, #tpu.memory_space<vmem>>, vector<1x8x512xf32>
    %114 = vector.shape_cast %113 : vector<1x8x512xf32> to vector<8x512xf32>
    %115 = arith.truncf %78 : vector<8x128xf32> to vector<8x128xbf16>
    %c0_45 = arith.constant 0 : index
    %c0_46 = arith.constant 0 : index
    %116 = vector.load %arg2[%c0_45, %c0_46] : memref<128x512xbf16, #tpu.memory_space<vmem>>, vector<128x512xbf16>
    %cst_47 = arith.constant dense<0.000000e+00> : vector<8x512xf32>
    %117 = tpu.matmul %115, %116, %cst_47 {dimension_numbers = #tpu.dot_dimension_numbers<[1], [0], [0], [1], [0, 0, 1, 1], [], []>} : vector<8x128xbf16>, vector<128x512xbf16>, vector<8x512xf32> -> vector<8x512xf32>
    %118 = arith.addf %114, %117 : vector<8x512xf32>
    %119 = vector.extract_strided_slice %118 {offsets = [0, 0], sizes = [8, 128], strides = [1, 1]} : vector<8x512xf32> to vector<8x128xf32>
    %120 = arith.negf %119 : vector<8x128xf32>
    %121 = math.exp %120 : vector<8x128xf32>
    %cst_48 = arith.constant 1.000000e+00 : f32
    %122 = vector.broadcast %cst_48 : f32 to vector<8x128xf32>
    %123 = arith.addf %122, %121 : vector<8x128xf32>
    %124 = arith.divf %122, %123 : vector<8x128xf32>
    %125 = vector.extract_strided_slice %118 {offsets = [0, 128], sizes = [8, 128], strides = [1, 1]} : vector<8x512xf32> to vector<8x128xf32>
    %126 = arith.negf %125 : vector<8x128xf32>
    %127 = math.exp %126 : vector<8x128xf32>
    %cst_49 = arith.constant 1.000000e+00 : f32
    %128 = vector.broadcast %cst_49 : f32 to vector<8x128xf32>
    %129 = arith.addf %128, %127 : vector<8x128xf32>
    %130 = arith.divf %128, %129 : vector<8x128xf32>
    %131 = vector.extract_strided_slice %118 {offsets = [0, 256], sizes = [8, 128], strides = [1, 1]} : vector<8x512xf32> to vector<8x128xf32>
    %132 = math.tanh %131 : vector<8x128xf32>
    %133 = vector.extract_strided_slice %118 {offsets = [0, 384], sizes = [8, 128], strides = [1, 1]} : vector<8x512xf32> to vector<8x128xf32>
    %134 = arith.negf %133 : vector<8x128xf32>
    %135 = math.exp %134 : vector<8x128xf32>
    %cst_50 = arith.constant 1.000000e+00 : f32
    %136 = vector.broadcast %cst_50 : f32 to vector<8x128xf32>
    %137 = arith.addf %136, %135 : vector<8x128xf32>
    %138 = arith.divf %136, %137 : vector<8x128xf32>
    %139 = arith.mulf %130, %76 : vector<8x128xf32>
    %140 = arith.mulf %124, %132 : vector<8x128xf32>
    %141 = arith.addf %139, %140 : vector<8x128xf32>
    %142 = math.tanh %141 : vector<8x128xf32>
    %143 = arith.mulf %138, %142 : vector<8x128xf32>
    %144 = tpu.concatenate %78, %112 in 1 : vector<8x128xf32>, vector<8x128xf32> -> vector<8x256xf32>
    %145 = arith.truncf %144 : vector<8x256xf32> to vector<8x256xbf16>
    %c0_51 = arith.constant 0 : index
    %c0_52 = arith.constant 0 : index
    %c0_53 = arith.constant 0 : index
    %146 = vector.load %arg3[%c0_51, %c0_52, %c0_53] : memref<2x256x512xbf16, #tpu.memory_space<vmem>>, vector<1x256x512xbf16>
    %147 = vector.shape_cast %146 : vector<1x256x512xbf16> to vector<256x512xbf16>
    %cst_54 = arith.constant dense<0.000000e+00> : vector<8x512xf32>
    %148 = tpu.matmul %145, %147, %cst_54 {dimension_numbers = #tpu.dot_dimension_numbers<[1], [0], [0], [1], [0, 0, 1, 1], [], []>} : vector<8x256xbf16>, vector<256x512xbf16>, vector<8x512xf32> -> vector<8x512xf32>
    %c1_55 = arith.constant 1 : index
    %c0_56 = arith.constant 0 : index
    %c0_57 = arith.constant 0 : index
    %149 = vector.load %arg4[%c1_55, %c0_56, %c0_57] : memref<3x1x512xf32, #tpu.memory_space<vmem>>, vector<1x1x512xf32>
    %150 = vector.shape_cast %149 : vector<1x1x512xf32> to vector<1x512xf32>
    %151 = vector.broadcast %150 : vector<1x512xf32> to vector<8x512xf32>
    %152 = arith.addf %148, %151 : vector<8x512xf32>
    %153 = vector.extract_strided_slice %152 {offsets = [0, 0], sizes = [8, 128], strides = [1, 1]} : vector<8x512xf32> to vector<8x128xf32>
    %154 = arith.negf %153 : vector<8x128xf32>
    %155 = math.exp %154 : vector<8x128xf32>
    %cst_58 = arith.constant 1.000000e+00 : f32
    %156 = vector.broadcast %cst_58 : f32 to vector<8x128xf32>
    %157 = arith.addf %156, %155 : vector<8x128xf32>
    %158 = arith.divf %156, %157 : vector<8x128xf32>
    %159 = vector.extract_strided_slice %152 {offsets = [0, 128], sizes = [8, 128], strides = [1, 1]} : vector<8x512xf32> to vector<8x128xf32>
    %160 = arith.negf %159 : vector<8x128xf32>
    %161 = math.exp %160 : vector<8x128xf32>
    %cst_59 = arith.constant 1.000000e+00 : f32
    %162 = vector.broadcast %cst_59 : f32 to vector<8x128xf32>
    %163 = arith.addf %162, %161 : vector<8x128xf32>
    %164 = arith.divf %162, %163 : vector<8x128xf32>
    %165 = vector.extract_strided_slice %152 {offsets = [0, 256], sizes = [8, 128], strides = [1, 1]} : vector<8x512xf32> to vector<8x128xf32>
    %166 = math.tanh %165 : vector<8x128xf32>
    %167 = vector.extract_strided_slice %152 {offsets = [0, 384], sizes = [8, 128], strides = [1, 1]} : vector<8x512xf32> to vector<8x128xf32>
    %168 = arith.negf %167 : vector<8x128xf32>
    %169 = math.exp %168 : vector<8x128xf32>
    %cst_60 = arith.constant 1.000000e+00 : f32
    %170 = vector.broadcast %cst_60 : f32 to vector<8x128xf32>
    %171 = arith.addf %170, %169 : vector<8x128xf32>
    %172 = arith.divf %170, %171 : vector<8x128xf32>
    %173 = arith.mulf %164, %110 : vector<8x128xf32>
    %174 = arith.mulf %158, %166 : vector<8x128xf32>
    %175 = arith.addf %173, %174 : vector<8x128xf32>
    %176 = math.tanh %175 : vector<8x128xf32>
    %177 = arith.mulf %172, %176 : vector<8x128xf32>
    %178 = tpu.concatenate %112, %13 in 1 : vector<8x128xf32>, vector<8x128xf32> -> vector<8x256xf32>
    %179 = arith.truncf %178 : vector<8x256xf32> to vector<8x256xbf16>
    %c1_61 = arith.constant 1 : index
    %c0_62 = arith.constant 0 : index
    %c0_63 = arith.constant 0 : index
    %180 = vector.load %arg3[%c1_61, %c0_62, %c0_63] : memref<2x256x512xbf16, #tpu.memory_space<vmem>>, vector<1x256x512xbf16>
    %181 = vector.shape_cast %180 : vector<1x256x512xbf16> to vector<256x512xbf16>
    %cst_64 = arith.constant dense<0.000000e+00> : vector<8x512xf32>
    %182 = tpu.matmul %179, %181, %cst_64 {dimension_numbers = #tpu.dot_dimension_numbers<[1], [0], [0], [1], [0, 0, 1, 1], [], []>} : vector<8x256xbf16>, vector<256x512xbf16>, vector<8x512xf32> -> vector<8x512xf32>
    %c2_65 = arith.constant 2 : index
    %c0_66 = arith.constant 0 : index
    %c0_67 = arith.constant 0 : index
    %183 = vector.load %arg4[%c2_65, %c0_66, %c0_67] : memref<3x1x512xf32, #tpu.memory_space<vmem>>, vector<1x1x512xf32>
    %184 = vector.shape_cast %183 : vector<1x1x512xf32> to vector<1x512xf32>
    %185 = vector.broadcast %184 : vector<1x512xf32> to vector<8x512xf32>
    %186 = arith.addf %182, %185 : vector<8x512xf32>
    %187 = vector.extract_strided_slice %186 {offsets = [0, 0], sizes = [8, 128], strides = [1, 1]} : vector<8x512xf32> to vector<8x128xf32>
    %188 = arith.negf %187 : vector<8x128xf32>
    %189 = math.exp %188 : vector<8x128xf32>
    %cst_68 = arith.constant 1.000000e+00 : f32
    %190 = vector.broadcast %cst_68 : f32 to vector<8x128xf32>
    %191 = arith.addf %190, %189 : vector<8x128xf32>
    %192 = arith.divf %190, %191 : vector<8x128xf32>
    %193 = vector.extract_strided_slice %186 {offsets = [0, 128], sizes = [8, 128], strides = [1, 1]} : vector<8x512xf32> to vector<8x128xf32>
    %194 = arith.negf %193 : vector<8x128xf32>
    %195 = math.exp %194 : vector<8x128xf32>
    %cst_69 = arith.constant 1.000000e+00 : f32
    %196 = vector.broadcast %cst_69 : f32 to vector<8x128xf32>
    %197 = arith.addf %196, %195 : vector<8x128xf32>
    %198 = arith.divf %196, %197 : vector<8x128xf32>
    %199 = vector.extract_strided_slice %186 {offsets = [0, 256], sizes = [8, 128], strides = [1, 1]} : vector<8x512xf32> to vector<8x128xf32>
    %200 = math.tanh %199 : vector<8x128xf32>
    %201 = vector.extract_strided_slice %186 {offsets = [0, 384], sizes = [8, 128], strides = [1, 1]} : vector<8x512xf32> to vector<8x128xf32>
    %202 = arith.negf %201 : vector<8x128xf32>
    %203 = math.exp %202 : vector<8x128xf32>
    %cst_70 = arith.constant 1.000000e+00 : f32
    %204 = vector.broadcast %cst_70 : f32 to vector<8x128xf32>
    %205 = arith.addf %204, %203 : vector<8x128xf32>
    %206 = arith.divf %204, %205 : vector<8x128xf32>
    %207 = arith.mulf %198, %16 : vector<8x128xf32>
    %208 = arith.mulf %192, %200 : vector<8x128xf32>
    %209 = arith.addf %207, %208 : vector<8x128xf32>
    %210 = math.tanh %209 : vector<8x128xf32>
    %211 = arith.mulf %206, %210 : vector<8x128xf32>
    %c3 = arith.constant 3 : index
    %c0_71 = arith.constant 0 : index
    %c0_72 = arith.constant 0 : index
    %212 = vector.load %arg8[%c3, %c0_71, %c0_72] : memref<5x8x512xf32, #tpu.memory_space<vmem>>, vector<1x8x512xf32>
    %213 = vector.shape_cast %212 : vector<1x8x512xf32> to vector<8x512xf32>
    %214 = arith.truncf %143 : vector<8x128xf32> to vector<8x128xbf16>
    %c0_73 = arith.constant 0 : index
    %c0_74 = arith.constant 0 : index
    %215 = vector.load %arg2[%c0_73, %c0_74] : memref<128x512xbf16, #tpu.memory_space<vmem>>, vector<128x512xbf16>
    %cst_75 = arith.constant dense<0.000000e+00> : vector<8x512xf32>
    %216 = tpu.matmul %214, %215, %cst_75 {dimension_numbers = #tpu.dot_dimension_numbers<[1], [0], [0], [1], [0, 0, 1, 1], [], []>} : vector<8x128xbf16>, vector<128x512xbf16>, vector<8x512xf32> -> vector<8x512xf32>
    %217 = arith.addf %213, %216 : vector<8x512xf32>
    %218 = vector.extract_strided_slice %217 {offsets = [0, 0], sizes = [8, 128], strides = [1, 1]} : vector<8x512xf32> to vector<8x128xf32>
    %219 = arith.negf %218 : vector<8x128xf32>
    %220 = math.exp %219 : vector<8x128xf32>
    %cst_76 = arith.constant 1.000000e+00 : f32
    %221 = vector.broadcast %cst_76 : f32 to vector<8x128xf32>
    %222 = arith.addf %221, %220 : vector<8x128xf32>
    %223 = arith.divf %221, %222 : vector<8x128xf32>
    %224 = vector.extract_strided_slice %217 {offsets = [0, 128], sizes = [8, 128], strides = [1, 1]} : vector<8x512xf32> to vector<8x128xf32>
    %225 = arith.negf %224 : vector<8x128xf32>
    %226 = math.exp %225 : vector<8x128xf32>
    %cst_77 = arith.constant 1.000000e+00 : f32
    %227 = vector.broadcast %cst_77 : f32 to vector<8x128xf32>
    %228 = arith.addf %227, %226 : vector<8x128xf32>
    %229 = arith.divf %227, %228 : vector<8x128xf32>
    %230 = vector.extract_strided_slice %217 {offsets = [0, 256], sizes = [8, 128], strides = [1, 1]} : vector<8x512xf32> to vector<8x128xf32>
    %231 = math.tanh %230 : vector<8x128xf32>
    %232 = vector.extract_strided_slice %217 {offsets = [0, 384], sizes = [8, 128], strides = [1, 1]} : vector<8x512xf32> to vector<8x128xf32>
    %233 = arith.negf %232 : vector<8x128xf32>
    %234 = math.exp %233 : vector<8x128xf32>
    %cst_78 = arith.constant 1.000000e+00 : f32
    %235 = vector.broadcast %cst_78 : f32 to vector<8x128xf32>
    %236 = arith.addf %235, %234 : vector<8x128xf32>
    %237 = arith.divf %235, %236 : vector<8x128xf32>
    %238 = arith.mulf %229, %141 : vector<8x128xf32>
    %239 = arith.mulf %223, %231 : vector<8x128xf32>
    %240 = arith.addf %238, %239 : vector<8x128xf32>
    %241 = math.tanh %240 : vector<8x128xf32>
    %242 = arith.mulf %237, %241 : vector<8x128xf32>
    %243 = tpu.concatenate %143, %177 in 1 : vector<8x128xf32>, vector<8x128xf32> -> vector<8x256xf32>
    %244 = arith.truncf %243 : vector<8x256xf32> to vector<8x256xbf16>
    %c0_79 = arith.constant 0 : index
    %c0_80 = arith.constant 0 : index
    %c0_81 = arith.constant 0 : index
    %245 = vector.load %arg3[%c0_79, %c0_80, %c0_81] : memref<2x256x512xbf16, #tpu.memory_space<vmem>>, vector<1x256x512xbf16>
    %246 = vector.shape_cast %245 : vector<1x256x512xbf16> to vector<256x512xbf16>
    %cst_82 = arith.constant dense<0.000000e+00> : vector<8x512xf32>
    %247 = tpu.matmul %244, %246, %cst_82 {dimension_numbers = #tpu.dot_dimension_numbers<[1], [0], [0], [1], [0, 0, 1, 1], [], []>} : vector<8x256xbf16>, vector<256x512xbf16>, vector<8x512xf32> -> vector<8x512xf32>
    %c1_83 = arith.constant 1 : index
    %c0_84 = arith.constant 0 : index
    %c0_85 = arith.constant 0 : index
    %248 = vector.load %arg4[%c1_83, %c0_84, %c0_85] : memref<3x1x512xf32, #tpu.memory_space<vmem>>, vector<1x1x512xf32>
    %249 = vector.shape_cast %248 : vector<1x1x512xf32> to vector<1x512xf32>
    %250 = vector.broadcast %249 : vector<1x512xf32> to vector<8x512xf32>
    %251 = arith.addf %247, %250 : vector<8x512xf32>
    %252 = vector.extract_strided_slice %251 {offsets = [0, 0], sizes = [8, 128], strides = [1, 1]} : vector<8x512xf32> to vector<8x128xf32>
    %253 = arith.negf %252 : vector<8x128xf32>
    %254 = math.exp %253 : vector<8x128xf32>
    %cst_86 = arith.constant 1.000000e+00 : f32
    %255 = vector.broadcast %cst_86 : f32 to vector<8x128xf32>
    %256 = arith.addf %255, %254 : vector<8x128xf32>
    %257 = arith.divf %255, %256 : vector<8x128xf32>
    %258 = vector.extract_strided_slice %251 {offsets = [0, 128], sizes = [8, 128], strides = [1, 1]} : vector<8x512xf32> to vector<8x128xf32>
    %259 = arith.negf %258 : vector<8x128xf32>
    %260 = math.exp %259 : vector<8x128xf32>
    %cst_87 = arith.constant 1.000000e+00 : f32
    %261 = vector.broadcast %cst_87 : f32 to vector<8x128xf32>
    %262 = arith.addf %261, %260 : vector<8x128xf32>
    %263 = arith.divf %261, %262 : vector<8x128xf32>
    %264 = vector.extract_strided_slice %251 {offsets = [0, 256], sizes = [8, 128], strides = [1, 1]} : vector<8x512xf32> to vector<8x128xf32>
    %265 = math.tanh %264 : vector<8x128xf32>
    %266 = vector.extract_strided_slice %251 {offsets = [0, 384], sizes = [8, 128], strides = [1, 1]} : vector<8x512xf32> to vector<8x128xf32>
    %267 = arith.negf %266 : vector<8x128xf32>
    %268 = math.exp %267 : vector<8x128xf32>
    %cst_88 = arith.constant 1.000000e+00 : f32
    %269 = vector.broadcast %cst_88 : f32 to vector<8x128xf32>
    %270 = arith.addf %269, %268 : vector<8x128xf32>
    %271 = arith.divf %269, %270 : vector<8x128xf32>
    %272 = arith.mulf %263, %175 : vector<8x128xf32>
    %273 = arith.mulf %257, %265 : vector<8x128xf32>
    %274 = arith.addf %272, %273 : vector<8x128xf32>
    %275 = math.tanh %274 : vector<8x128xf32>
    %276 = arith.mulf %271, %275 : vector<8x128xf32>
    %277 = tpu.concatenate %177, %211 in 1 : vector<8x128xf32>, vector<8x128xf32> -> vector<8x256xf32>
    %278 = arith.truncf %277 : vector<8x256xf32> to vector<8x256xbf16>
    %c1_89 = arith.constant 1 : index
    %c0_90 = arith.constant 0 : index
    %c0_91 = arith.constant 0 : index
    %279 = vector.load %arg3[%c1_89, %c0_90, %c0_91] : memref<2x256x512xbf16, #tpu.memory_space<vmem>>, vector<1x256x512xbf16>
    %280 = vector.shape_cast %279 : vector<1x256x512xbf16> to vector<256x512xbf16>
    %cst_92 = arith.constant dense<0.000000e+00> : vector<8x512xf32>
    %281 = tpu.matmul %278, %280, %cst_92 {dimension_numbers = #tpu.dot_dimension_numbers<[1], [0], [0], [1], [0, 0, 1, 1], [], []>} : vector<8x256xbf16>, vector<256x512xbf16>, vector<8x512xf32> -> vector<8x512xf32>
    %c2_93 = arith.constant 2 : index
    %c0_94 = arith.constant 0 : index
    %c0_95 = arith.constant 0 : index
    %282 = vector.load %arg4[%c2_93, %c0_94, %c0_95] : memref<3x1x512xf32, #tpu.memory_space<vmem>>, vector<1x1x512xf32>
    %283 = vector.shape_cast %282 : vector<1x1x512xf32> to vector<1x512xf32>
    %284 = vector.broadcast %283 : vector<1x512xf32> to vector<8x512xf32>
    %285 = arith.addf %281, %284 : vector<8x512xf32>
    %286 = vector.extract_strided_slice %285 {offsets = [0, 0], sizes = [8, 128], strides = [1, 1]} : vector<8x512xf32> to vector<8x128xf32>
    %287 = arith.negf %286 : vector<8x128xf32>
    %288 = math.exp %287 : vector<8x128xf32>
    %cst_96 = arith.constant 1.000000e+00 : f32
    %289 = vector.broadcast %cst_96 : f32 to vector<8x128xf32>
    %290 = arith.addf %289, %288 : vector<8x128xf32>
    %291 = arith.divf %289, %290 : vector<8x128xf32>
    %292 = vector.extract_strided_slice %285 {offsets = [0, 128], sizes = [8, 128], strides = [1, 1]} : vector<8x512xf32> to vector<8x128xf32>
    %293 = arith.negf %292 : vector<8x128xf32>
    %294 = math.exp %293 : vector<8x128xf32>
    %cst_97 = arith.constant 1.000000e+00 : f32
    %295 = vector.broadcast %cst_97 : f32 to vector<8x128xf32>
    %296 = arith.addf %295, %294 : vector<8x128xf32>
    %297 = arith.divf %295, %296 : vector<8x128xf32>
    %298 = vector.extract_strided_slice %285 {offsets = [0, 256], sizes = [8, 128], strides = [1, 1]} : vector<8x512xf32> to vector<8x128xf32>
    %299 = math.tanh %298 : vector<8x128xf32>
    %300 = vector.extract_strided_slice %285 {offsets = [0, 384], sizes = [8, 128], strides = [1, 1]} : vector<8x512xf32> to vector<8x128xf32>
    %301 = arith.negf %300 : vector<8x128xf32>
    %302 = math.exp %301 : vector<8x128xf32>
    %cst_98 = arith.constant 1.000000e+00 : f32
    %303 = vector.broadcast %cst_98 : f32 to vector<8x128xf32>
    %304 = arith.addf %303, %302 : vector<8x128xf32>
    %305 = arith.divf %303, %304 : vector<8x128xf32>
    %306 = arith.mulf %297, %209 : vector<8x128xf32>
    %307 = arith.mulf %291, %299 : vector<8x128xf32>
    %308 = arith.addf %306, %307 : vector<8x128xf32>
    %309 = math.tanh %308 : vector<8x128xf32>
    %310 = arith.mulf %305, %309 : vector<8x128xf32>
    %c4 = arith.constant 4 : index
    %c0_99 = arith.constant 0 : index
    %c0_100 = arith.constant 0 : index
    %311 = vector.load %arg8[%c4, %c0_99, %c0_100] : memref<5x8x512xf32, #tpu.memory_space<vmem>>, vector<1x8x512xf32>
    %312 = vector.shape_cast %311 : vector<1x8x512xf32> to vector<8x512xf32>
    %313 = arith.truncf %242 : vector<8x128xf32> to vector<8x128xbf16>
    %c0_101 = arith.constant 0 : index
    %c0_102 = arith.constant 0 : index
    %314 = vector.load %arg2[%c0_101, %c0_102] : memref<128x512xbf16, #tpu.memory_space<vmem>>, vector<128x512xbf16>
    %cst_103 = arith.constant dense<0.000000e+00> : vector<8x512xf32>
    %315 = tpu.matmul %313, %314, %cst_103 {dimension_numbers = #tpu.dot_dimension_numbers<[1], [0], [0], [1], [0, 0, 1, 1], [], []>} : vector<8x128xbf16>, vector<128x512xbf16>, vector<8x512xf32> -> vector<8x512xf32>
    %316 = arith.addf %312, %315 : vector<8x512xf32>
    %317 = vector.extract_strided_slice %316 {offsets = [0, 0], sizes = [8, 128], strides = [1, 1]} : vector<8x512xf32> to vector<8x128xf32>
    %318 = arith.negf %317 : vector<8x128xf32>
    %319 = math.exp %318 : vector<8x128xf32>
    %cst_104 = arith.constant 1.000000e+00 : f32
    %320 = vector.broadcast %cst_104 : f32 to vector<8x128xf32>
    %321 = arith.addf %320, %319 : vector<8x128xf32>
    %322 = arith.divf %320, %321 : vector<8x128xf32>
    %323 = vector.extract_strided_slice %316 {offsets = [0, 128], sizes = [8, 128], strides = [1, 1]} : vector<8x512xf32> to vector<8x128xf32>
    %324 = arith.negf %323 : vector<8x128xf32>
    %325 = math.exp %324 : vector<8x128xf32>
    %cst_105 = arith.constant 1.000000e+00 : f32
    %326 = vector.broadcast %cst_105 : f32 to vector<8x128xf32>
    %327 = arith.addf %326, %325 : vector<8x128xf32>
    %328 = arith.divf %326, %327 : vector<8x128xf32>
    %329 = vector.extract_strided_slice %316 {offsets = [0, 256], sizes = [8, 128], strides = [1, 1]} : vector<8x512xf32> to vector<8x128xf32>
    %330 = math.tanh %329 : vector<8x128xf32>
    %331 = vector.extract_strided_slice %316 {offsets = [0, 384], sizes = [8, 128], strides = [1, 1]} : vector<8x512xf32> to vector<8x128xf32>
    %332 = arith.negf %331 : vector<8x128xf32>
    %333 = math.exp %332 : vector<8x128xf32>
    %cst_106 = arith.constant 1.000000e+00 : f32
    %334 = vector.broadcast %cst_106 : f32 to vector<8x128xf32>
    %335 = arith.addf %334, %333 : vector<8x128xf32>
    %336 = arith.divf %334, %335 : vector<8x128xf32>
    %337 = arith.mulf %328, %240 : vector<8x128xf32>
    %338 = arith.mulf %322, %330 : vector<8x128xf32>
    %339 = arith.addf %337, %338 : vector<8x128xf32>
    %340 = math.tanh %339 : vector<8x128xf32>
    %341 = arith.mulf %336, %340 : vector<8x128xf32>
    %342 = tpu.concatenate %242, %276 in 1 : vector<8x128xf32>, vector<8x128xf32> -> vector<8x256xf32>
    %343 = arith.truncf %342 : vector<8x256xf32> to vector<8x256xbf16>
    %c0_107 = arith.constant 0 : index
    %c0_108 = arith.constant 0 : index
    %c0_109 = arith.constant 0 : index
    %344 = vector.load %arg3[%c0_107, %c0_108, %c0_109] : memref<2x256x512xbf16, #tpu.memory_space<vmem>>, vector<1x256x512xbf16>
    %345 = vector.shape_cast %344 : vector<1x256x512xbf16> to vector<256x512xbf16>
    %cst_110 = arith.constant dense<0.000000e+00> : vector<8x512xf32>
    %346 = tpu.matmul %343, %345, %cst_110 {dimension_numbers = #tpu.dot_dimension_numbers<[1], [0], [0], [1], [0, 0, 1, 1], [], []>} : vector<8x256xbf16>, vector<256x512xbf16>, vector<8x512xf32> -> vector<8x512xf32>
    %c1_111 = arith.constant 1 : index
    %c0_112 = arith.constant 0 : index
    %c0_113 = arith.constant 0 : index
    %347 = vector.load %arg4[%c1_111, %c0_112, %c0_113] : memref<3x1x512xf32, #tpu.memory_space<vmem>>, vector<1x1x512xf32>
    %348 = vector.shape_cast %347 : vector<1x1x512xf32> to vector<1x512xf32>
    %349 = vector.broadcast %348 : vector<1x512xf32> to vector<8x512xf32>
    %350 = arith.addf %346, %349 : vector<8x512xf32>
    %351 = vector.extract_strided_slice %350 {offsets = [0, 0], sizes = [8, 128], strides = [1, 1]} : vector<8x512xf32> to vector<8x128xf32>
    %352 = arith.negf %351 : vector<8x128xf32>
    %353 = math.exp %352 : vector<8x128xf32>
    %cst_114 = arith.constant 1.000000e+00 : f32
    %354 = vector.broadcast %cst_114 : f32 to vector<8x128xf32>
    %355 = arith.addf %354, %353 : vector<8x128xf32>
    %356 = arith.divf %354, %355 : vector<8x128xf32>
    %357 = vector.extract_strided_slice %350 {offsets = [0, 128], sizes = [8, 128], strides = [1, 1]} : vector<8x512xf32> to vector<8x128xf32>
    %358 = arith.negf %357 : vector<8x128xf32>
    %359 = math.exp %358 : vector<8x128xf32>
    %cst_115 = arith.constant 1.000000e+00 : f32
    %360 = vector.broadcast %cst_115 : f32 to vector<8x128xf32>
    %361 = arith.addf %360, %359 : vector<8x128xf32>
    %362 = arith.divf %360, %361 : vector<8x128xf32>
    %363 = vector.extract_strided_slice %350 {offsets = [0, 256], sizes = [8, 128], strides = [1, 1]} : vector<8x512xf32> to vector<8x128xf32>
    %364 = math.tanh %363 : vector<8x128xf32>
    %365 = vector.extract_strided_slice %350 {offsets = [0, 384], sizes = [8, 128], strides = [1, 1]} : vector<8x512xf32> to vector<8x128xf32>
    %366 = arith.negf %365 : vector<8x128xf32>
    %367 = math.exp %366 : vector<8x128xf32>
    %cst_116 = arith.constant 1.000000e+00 : f32
    %368 = vector.broadcast %cst_116 : f32 to vector<8x128xf32>
    %369 = arith.addf %368, %367 : vector<8x128xf32>
    %370 = arith.divf %368, %369 : vector<8x128xf32>
    %371 = arith.mulf %362, %274 : vector<8x128xf32>
    %372 = arith.mulf %356, %364 : vector<8x128xf32>
    %373 = arith.addf %371, %372 : vector<8x128xf32>
    %374 = math.tanh %373 : vector<8x128xf32>
    %375 = arith.mulf %370, %374 : vector<8x128xf32>
    %376 = tpu.concatenate %276, %310 in 1 : vector<8x128xf32>, vector<8x128xf32> -> vector<8x256xf32>
    %377 = arith.truncf %376 : vector<8x256xf32> to vector<8x256xbf16>
    %c1_117 = arith.constant 1 : index
    %c0_118 = arith.constant 0 : index
    %c0_119 = arith.constant 0 : index
    %378 = vector.load %arg3[%c1_117, %c0_118, %c0_119] : memref<2x256x512xbf16, #tpu.memory_space<vmem>>, vector<1x256x512xbf16>
    %379 = vector.shape_cast %378 : vector<1x256x512xbf16> to vector<256x512xbf16>
    %cst_120 = arith.constant dense<0.000000e+00> : vector<8x512xf32>
    %380 = tpu.matmul %377, %379, %cst_120 {dimension_numbers = #tpu.dot_dimension_numbers<[1], [0], [0], [1], [0, 0, 1, 1], [], []>} : vector<8x256xbf16>, vector<256x512xbf16>, vector<8x512xf32> -> vector<8x512xf32>
    %c2_121 = arith.constant 2 : index
    %c0_122 = arith.constant 0 : index
    %c0_123 = arith.constant 0 : index
    %381 = vector.load %arg4[%c2_121, %c0_122, %c0_123] : memref<3x1x512xf32, #tpu.memory_space<vmem>>, vector<1x1x512xf32>
    %382 = vector.shape_cast %381 : vector<1x1x512xf32> to vector<1x512xf32>
    %383 = vector.broadcast %382 : vector<1x512xf32> to vector<8x512xf32>
    %384 = arith.addf %380, %383 : vector<8x512xf32>
    %385 = vector.extract_strided_slice %384 {offsets = [0, 0], sizes = [8, 128], strides = [1, 1]} : vector<8x512xf32> to vector<8x128xf32>
    %386 = arith.negf %385 : vector<8x128xf32>
    %387 = math.exp %386 : vector<8x128xf32>
    %cst_124 = arith.constant 1.000000e+00 : f32
    %388 = vector.broadcast %cst_124 : f32 to vector<8x128xf32>
    %389 = arith.addf %388, %387 : vector<8x128xf32>
    %390 = arith.divf %388, %389 : vector<8x128xf32>
    %391 = vector.extract_strided_slice %384 {offsets = [0, 128], sizes = [8, 128], strides = [1, 1]} : vector<8x512xf32> to vector<8x128xf32>
    %392 = arith.negf %391 : vector<8x128xf32>
    %393 = math.exp %392 : vector<8x128xf32>
    %cst_125 = arith.constant 1.000000e+00 : f32
    %394 = vector.broadcast %cst_125 : f32 to vector<8x128xf32>
    %395 = arith.addf %394, %393 : vector<8x128xf32>
    %396 = arith.divf %394, %395 : vector<8x128xf32>
    %397 = vector.extract_strided_slice %384 {offsets = [0, 256], sizes = [8, 128], strides = [1, 1]} : vector<8x512xf32> to vector<8x128xf32>
    %398 = math.tanh %397 : vector<8x128xf32>
    %399 = vector.extract_strided_slice %384 {offsets = [0, 384], sizes = [8, 128], strides = [1, 1]} : vector<8x512xf32> to vector<8x128xf32>
    %400 = arith.negf %399 : vector<8x128xf32>
    %401 = math.exp %400 : vector<8x128xf32>
    %cst_126 = arith.constant 1.000000e+00 : f32
    %402 = vector.broadcast %cst_126 : f32 to vector<8x128xf32>
    %403 = arith.addf %402, %401 : vector<8x128xf32>
    %404 = arith.divf %402, %403 : vector<8x128xf32>
    %405 = arith.mulf %396, %308 : vector<8x128xf32>
    %406 = arith.mulf %390, %398 : vector<8x128xf32>
    %407 = arith.addf %405, %406 : vector<8x128xf32>
    %408 = math.tanh %407 : vector<8x128xf32>
    %409 = arith.mulf %404, %408 : vector<8x128xf32>
    %410 = tpu.concatenate %341, %375 in 1 : vector<8x128xf32>, vector<8x128xf32> -> vector<8x256xf32>
    %411 = arith.truncf %410 : vector<8x256xf32> to vector<8x256xbf16>
    %c0_127 = arith.constant 0 : index
    %c0_128 = arith.constant 0 : index
    %c0_129 = arith.constant 0 : index
    %412 = vector.load %arg3[%c0_127, %c0_128, %c0_129] : memref<2x256x512xbf16, #tpu.memory_space<vmem>>, vector<1x256x512xbf16>
    %413 = vector.shape_cast %412 : vector<1x256x512xbf16> to vector<256x512xbf16>
    %cst_130 = arith.constant dense<0.000000e+00> : vector<8x512xf32>
    %414 = tpu.matmul %411, %413, %cst_130 {dimension_numbers = #tpu.dot_dimension_numbers<[1], [0], [0], [1], [0, 0, 1, 1], [], []>} : vector<8x256xbf16>, vector<256x512xbf16>, vector<8x512xf32> -> vector<8x512xf32>
    %c1_131 = arith.constant 1 : index
    %c0_132 = arith.constant 0 : index
    %c0_133 = arith.constant 0 : index
    %415 = vector.load %arg4[%c1_131, %c0_132, %c0_133] : memref<3x1x512xf32, #tpu.memory_space<vmem>>, vector<1x1x512xf32>
    %416 = vector.shape_cast %415 : vector<1x1x512xf32> to vector<1x512xf32>
    %417 = vector.broadcast %416 : vector<1x512xf32> to vector<8x512xf32>
    %418 = arith.addf %414, %417 : vector<8x512xf32>
    %419 = vector.extract_strided_slice %418 {offsets = [0, 0], sizes = [8, 128], strides = [1, 1]} : vector<8x512xf32> to vector<8x128xf32>
    %420 = arith.negf %419 : vector<8x128xf32>
    %421 = math.exp %420 : vector<8x128xf32>
    %cst_134 = arith.constant 1.000000e+00 : f32
    %422 = vector.broadcast %cst_134 : f32 to vector<8x128xf32>
    %423 = arith.addf %422, %421 : vector<8x128xf32>
    %424 = arith.divf %422, %423 : vector<8x128xf32>
    %425 = vector.extract_strided_slice %418 {offsets = [0, 128], sizes = [8, 128], strides = [1, 1]} : vector<8x512xf32> to vector<8x128xf32>
    %426 = arith.negf %425 : vector<8x128xf32>
    %427 = math.exp %426 : vector<8x128xf32>
    %cst_135 = arith.constant 1.000000e+00 : f32
    %428 = vector.broadcast %cst_135 : f32 to vector<8x128xf32>
    %429 = arith.addf %428, %427 : vector<8x128xf32>
    %430 = arith.divf %428, %429 : vector<8x128xf32>
    %431 = vector.extract_strided_slice %418 {offsets = [0, 256], sizes = [8, 128], strides = [1, 1]} : vector<8x512xf32> to vector<8x128xf32>
    %432 = math.tanh %431 : vector<8x128xf32>
    %433 = vector.extract_strided_slice %418 {offsets = [0, 384], sizes = [8, 128], strides = [1, 1]} : vector<8x512xf32> to vector<8x128xf32>
    %434 = arith.negf %433 : vector<8x128xf32>
    %435 = math.exp %434 : vector<8x128xf32>
    %cst_136 = arith.constant 1.000000e+00 : f32
    %436 = vector.broadcast %cst_136 : f32 to vector<8x128xf32>
    %437 = arith.addf %436, %435 : vector<8x128xf32>
    %438 = arith.divf %436, %437 : vector<8x128xf32>
    %439 = arith.mulf %430, %373 : vector<8x128xf32>
    %440 = arith.mulf %424, %432 : vector<8x128xf32>
    %441 = arith.addf %439, %440 : vector<8x128xf32>
    %442 = math.tanh %441 : vector<8x128xf32>
    %443 = arith.mulf %438, %442 : vector<8x128xf32>
    %444 = tpu.concatenate %375, %409 in 1 : vector<8x128xf32>, vector<8x128xf32> -> vector<8x256xf32>
    %445 = arith.truncf %444 : vector<8x256xf32> to vector<8x256xbf16>
    %c1_137 = arith.constant 1 : index
    %c0_138 = arith.constant 0 : index
    %c0_139 = arith.constant 0 : index
    %446 = vector.load %arg3[%c1_137, %c0_138, %c0_139] : memref<2x256x512xbf16, #tpu.memory_space<vmem>>, vector<1x256x512xbf16>
    %447 = vector.shape_cast %446 : vector<1x256x512xbf16> to vector<256x512xbf16>
    %cst_140 = arith.constant dense<0.000000e+00> : vector<8x512xf32>
    %448 = tpu.matmul %445, %447, %cst_140 {dimension_numbers = #tpu.dot_dimension_numbers<[1], [0], [0], [1], [0, 0, 1, 1], [], []>} : vector<8x256xbf16>, vector<256x512xbf16>, vector<8x512xf32> -> vector<8x512xf32>
    %c2_141 = arith.constant 2 : index
    %c0_142 = arith.constant 0 : index
    %c0_143 = arith.constant 0 : index
    %449 = vector.load %arg4[%c2_141, %c0_142, %c0_143] : memref<3x1x512xf32, #tpu.memory_space<vmem>>, vector<1x1x512xf32>
    %450 = vector.shape_cast %449 : vector<1x1x512xf32> to vector<1x512xf32>
    %451 = vector.broadcast %450 : vector<1x512xf32> to vector<8x512xf32>
    %452 = arith.addf %448, %451 : vector<8x512xf32>
    %453 = vector.extract_strided_slice %452 {offsets = [0, 0], sizes = [8, 128], strides = [1, 1]} : vector<8x512xf32> to vector<8x128xf32>
    %454 = arith.negf %453 : vector<8x128xf32>
    %455 = math.exp %454 : vector<8x128xf32>
    %cst_144 = arith.constant 1.000000e+00 : f32
    %456 = vector.broadcast %cst_144 : f32 to vector<8x128xf32>
    %457 = arith.addf %456, %455 : vector<8x128xf32>
    %458 = arith.divf %456, %457 : vector<8x128xf32>
    %459 = vector.extract_strided_slice %452 {offsets = [0, 128], sizes = [8, 128], strides = [1, 1]} : vector<8x512xf32> to vector<8x128xf32>
    %460 = arith.negf %459 : vector<8x128xf32>
    %461 = math.exp %460 : vector<8x128xf32>
    %cst_145 = arith.constant 1.000000e+00 : f32
    %462 = vector.broadcast %cst_145 : f32 to vector<8x128xf32>
    %463 = arith.addf %462, %461 : vector<8x128xf32>
    %464 = arith.divf %462, %463 : vector<8x128xf32>
    %465 = vector.extract_strided_slice %452 {offsets = [0, 256], sizes = [8, 128], strides = [1, 1]} : vector<8x512xf32> to vector<8x128xf32>
    %466 = math.tanh %465 : vector<8x128xf32>
    %467 = vector.extract_strided_slice %452 {offsets = [0, 384], sizes = [8, 128], strides = [1, 1]} : vector<8x512xf32> to vector<8x128xf32>
    %468 = arith.negf %467 : vector<8x128xf32>
    %469 = math.exp %468 : vector<8x128xf32>
    %cst_146 = arith.constant 1.000000e+00 : f32
    %470 = vector.broadcast %cst_146 : f32 to vector<8x128xf32>
    %471 = arith.addf %470, %469 : vector<8x128xf32>
    %472 = arith.divf %470, %471 : vector<8x128xf32>
    %473 = arith.mulf %464, %407 : vector<8x128xf32>
    %474 = arith.mulf %458, %466 : vector<8x128xf32>
    %475 = arith.addf %473, %474 : vector<8x128xf32>
    %476 = math.tanh %475 : vector<8x128xf32>
    %477 = arith.mulf %472, %476 : vector<8x128xf32>
    %478 = tpu.concatenate %443, %477 in 1 : vector<8x128xf32>, vector<8x128xf32> -> vector<8x256xf32>
    %479 = arith.truncf %478 : vector<8x256xf32> to vector<8x256xbf16>
    %c1_147 = arith.constant 1 : index
    %c0_148 = arith.constant 0 : index
    %c0_149 = arith.constant 0 : index
    %480 = vector.load %arg3[%c1_147, %c0_148, %c0_149] : memref<2x256x512xbf16, #tpu.memory_space<vmem>>, vector<1x256x512xbf16>
    %481 = vector.shape_cast %480 : vector<1x256x512xbf16> to vector<256x512xbf16>
    %cst_150 = arith.constant dense<0.000000e+00> : vector<8x512xf32>
    %482 = tpu.matmul %479, %481, %cst_150 {dimension_numbers = #tpu.dot_dimension_numbers<[1], [0], [0], [1], [0, 0, 1, 1], [], []>} : vector<8x256xbf16>, vector<256x512xbf16>, vector<8x512xf32> -> vector<8x512xf32>
    %c2_151 = arith.constant 2 : index
    %c0_152 = arith.constant 0 : index
    %c0_153 = arith.constant 0 : index
    %483 = vector.load %arg4[%c2_151, %c0_152, %c0_153] : memref<3x1x512xf32, #tpu.memory_space<vmem>>, vector<1x1x512xf32>
    %484 = vector.shape_cast %483 : vector<1x1x512xf32> to vector<1x512xf32>
    %485 = vector.broadcast %484 : vector<1x512xf32> to vector<8x512xf32>
    %486 = arith.addf %482, %485 : vector<8x512xf32>
    %487 = vector.extract_strided_slice %486 {offsets = [0, 0], sizes = [8, 128], strides = [1, 1]} : vector<8x512xf32> to vector<8x128xf32>
    %488 = arith.negf %487 : vector<8x128xf32>
    %489 = math.exp %488 : vector<8x128xf32>
    %cst_154 = arith.constant 1.000000e+00 : f32
    %490 = vector.broadcast %cst_154 : f32 to vector<8x128xf32>
    %491 = arith.addf %490, %489 : vector<8x128xf32>
    %492 = arith.divf %490, %491 : vector<8x128xf32>
    %493 = vector.extract_strided_slice %486 {offsets = [0, 128], sizes = [8, 128], strides = [1, 1]} : vector<8x512xf32> to vector<8x128xf32>
    %494 = arith.negf %493 : vector<8x128xf32>
    %495 = math.exp %494 : vector<8x128xf32>
    %cst_155 = arith.constant 1.000000e+00 : f32
    %496 = vector.broadcast %cst_155 : f32 to vector<8x128xf32>
    %497 = arith.addf %496, %495 : vector<8x128xf32>
    %498 = arith.divf %496, %497 : vector<8x128xf32>
    %499 = vector.extract_strided_slice %486 {offsets = [0, 256], sizes = [8, 128], strides = [1, 1]} : vector<8x512xf32> to vector<8x128xf32>
    %500 = math.tanh %499 : vector<8x128xf32>
    %501 = vector.extract_strided_slice %486 {offsets = [0, 384], sizes = [8, 128], strides = [1, 1]} : vector<8x512xf32> to vector<8x128xf32>
    %502 = arith.negf %501 : vector<8x128xf32>
    %503 = math.exp %502 : vector<8x128xf32>
    %cst_156 = arith.constant 1.000000e+00 : f32
    %504 = vector.broadcast %cst_156 : f32 to vector<8x128xf32>
    %505 = arith.addf %504, %503 : vector<8x128xf32>
    %506 = arith.divf %504, %505 : vector<8x128xf32>
    %507 = arith.mulf %498, %475 : vector<8x128xf32>
    %508 = arith.mulf %492, %500 : vector<8x128xf32>
    %509 = arith.addf %507, %508 : vector<8x128xf32>
    %510 = math.tanh %509 : vector<8x128xf32>
    %511 = arith.mulf %506, %510 : vector<8x128xf32>
    %512 = vector.shape_cast %211 : vector<8x128xf32> to vector<1x8x128xf32>
    %513 = vector.shape_cast %310 : vector<8x128xf32> to vector<1x8x128xf32>
    %514 = vector.shape_cast %409 : vector<8x128xf32> to vector<1x8x128xf32>
    %515 = vector.shape_cast %477 : vector<8x128xf32> to vector<1x8x128xf32>
    %516 = vector.shape_cast %511 : vector<8x128xf32> to vector<1x8x128xf32>
    %517 = tpu.concatenate %512, %513, %514, %515, %516 in 0 : vector<1x8x128xf32>, vector<1x8x128xf32>, vector<1x8x128xf32>, vector<1x8x128xf32>, vector<1x8x128xf32> -> vector<5x8x128xf32>
    %c0_157 = arith.constant 0 : index
    %c0_158 = arith.constant 0 : index
    %518 = vector.load %arg5[%c0_157, %c0_158] : memref<1x128xf32, #tpu.memory_space<vmem>>, vector<1x128xf32>
    %519 = vector.shape_cast %518 : vector<1x128xf32> to vector<1x1x128xf32>
    %520 = vector.broadcast %519 : vector<1x1x128xf32> to vector<5x8x128xf32>
    %521 = arith.mulf %517, %520 : vector<5x8x128xf32>
    %cst_159 = arith.constant dense<0.000000e+00> : vector<5x8xf32>
    %522 = vector.multi_reduction <add>, %521, %cst_159 [2] : vector<5x8x128xf32> to vector<5x8xf32>
    %c0_160 = arith.constant 0 : index
    %c0_161 = arith.constant 0 : index
    %523 = vector.load %arg6[%c0_160, %c0_161] : memref<1x1xf32, #tpu.memory_space<vmem>>, vector<1x1xf32>
    %524 = vector.broadcast %523 : vector<1x1xf32> to vector<5x8xf32>
    %525 = arith.addf %522, %524 : vector<5x8xf32>
    %c0_162 = arith.constant 0 : index
    %c0_163 = arith.constant 0 : index
    %526 = vector.load %arg7[%c0_162, %c0_163] : memref<5x8xf32, #tpu.memory_space<vmem>>, vector<5x8xf32>
    tpu.vector_store %arg7[%c0_162, %c0_163], %525 {strides = array<i32>} : memref<5x8xf32, #tpu.memory_space<vmem>>, vector<5x8xf32>,
    return
  }
}

</mosaic_0001>

<llo_original>
// kernel: lstm_forward.1
$region0: #{lstm_forward.1}
  #allocation0 [shape = 'u32[]', space=smem, size = 0x4, offset = 0x4, fixed_abs, tag = 'smem constant byte address 0x4 - core index']
  #allocation1 [shape = 'u32[144,128]{1,0:T(1,128)}', space=vmem, size = 0x12000, scoped, tag = 'internal scratch']
  #allocation2 [shape = 'f32[5,8,512]{2,1,0:T(8,128)}', space=vmem, size = 0x14000, scoped, tag = 'scratch operand']
  #allocation3 [shape = 'f32[1,1]{1,0:T(1,128)S(1)}', space=vmem, size = 0x200, scoped, tag = 'scoped memory for lstm_forward.1']
  %s0 = inlined_call_operand.vmem [shape: f32[5,8,128], index: 0, kind: input, shape index: {}]
  %s1 = inlined_call_operand.hbm [shape: bf16[128,512], index: 1, kind: input, shape index: {}]
  %s2 = inlined_call_operand.hbm [shape: bf16[128,512], index: 2, kind: input, shape index: {}]
  %s3 = inlined_call_operand.hbm [shape: bf16[2,256,512], index: 3, kind: input, shape index: {}]
  %s4 = inlined_call_operand.vmem [shape: f32[3,1,512], index: 4, kind: input, shape index: {}]
  %s5 = inlined_call_operand.vmem [shape: f32[1,128], index: 5, kind: input, shape index: {}]
  %s6 = inlined_call_operand.<no memory space> [shape: f32[1,1], index: 6, kind: input, shape index: {}]
  %s7 = inlined_call_operand.vmem [shape: f32[5,8], index: 7, kind: output, shape index: {}]
  %s8 = sld [smem:[#allocation0]]
  $region50: #{lstm_forward.1} parent=0
    _
  %s10 = ssub.s32 1, %s8
  %s11 = scalar_select 0, %s10, %s8
  %v12 = vstv %s6
  %13 = vst [vmem:[#allocation3] sm:$0x1] %v12
  $region1: #{lstm_forward.1} parent=0
    #allocation4 [shape = 'u8[131072]{0}', space=vmem, size = 0x20000, scoped, tag = 'input window, operand 1, single buffered']
    #allocation5 [shape = 's32[1]{0}', space=sflag, size = 0x4, scoped, tag = 'scoped memory for lstm_forward.1']
    #allocation6 [shape = 'u8[131072]{0}', space=vmem, size = 0x20000, scoped, tag = 'input window, operand 2, single buffered']
    #allocation7 [shape = 's32[1]{0}', space=sflag, size = 0x4, scoped, tag = 'scoped memory for lstm_forward.1']
    #allocation8 [shape = 'u8[524288]{0}', space=vmem, size = 0x80000, scoped, tag = 'input window, operand 3, single buffered']
    %14 = vsyncpa [#allocation5], 0
    %15 = vsyncpa [#allocation7], 0
    // Predicated region
    $region2: #{lstm_forward.1} parent=1 // pred_check
      _
    $region3: #{lstm_forward.1} parent=1 // pred_check_branch
      %17 = sbr.rel (0) target = $region5
    $region4: #{lstm_forward.1} parent=1 // pred_region
      _
    $region5: #{lstm_forward.1} parent=1 // pred_fallthru
      _
    // Predicated region
    $region6: #{lstm_forward.1} parent=1 // pred_check
      _
    $region7: #{lstm_forward.1} parent=1 // pred_check_branch
      %19 = sbr.rel (0) target = $region9
    $region8: #{lstm_forward.1} parent=1 // pred_region
      %s21 = ssub.s32 4096, 4096
      %22 = vsyncadd [#allocation5], %s21
      %s23 = sshll.u32 [#allocation4], 4
      %s24 = int_to_ptr.vmem [resolvable:$true] %s23
      %29 = dma.hbm_to_vmem [thread:$0]  %s1, 4096, %s24, [#allocation5], 256, 256, 16
    $region9: #{lstm_forward.1} parent=1 // pred_fallthru
      _
    // Predicated region
    $region10: #{lstm_forward.1} parent=1 // pred_check
      _
    $region11: #{lstm_forward.1} parent=1 // pred_check_branch
      %31 = sbr.rel (0) target = $region13
    $region12: #{lstm_forward.1} parent=1 // pred_region
      %s33 = ssub.s32 4096, 4096
      %34 = vsyncadd [#allocation7], %s33
      %s35 = sshll.u32 [#allocation6], 4
      %s36 = int_to_ptr.vmem [resolvable:$true] %s35
      %41 = dma.hbm_to_vmem [thread:$0]  %s2, 4096, %s36, [#allocation7], 256, 256, 16
    $region13: #{lstm_forward.1} parent=1 // pred_fallthru
      _
    // Predicated region
    $region14: #{lstm_forward.1} parent=1 // pred_check
      _
    $region15: #{lstm_forward.1} parent=1 // pred_check_branch
      %43 = sbr.rel (0) target = $region17
    $region16: #{lstm_forward.1} parent=1 // pred_region
      %s45 = ssub.s32 16384, 16384
      %46 = vsyncadd [#allocation7], %s45
      %s47 = sshll.u32 [#allocation8], 4
      %s48 = int_to_ptr.vmem [resolvable:$true] %s47
      %53 = dma.hbm_to_vmem [thread:$0]  %s3, 16384, %s48, [#allocation7], 256, 256, 16
    $region17: #{lstm_forward.1} parent=1 // pred_fallthru
      _
    // Predicated region
    $region18: #{lstm_forward.1} parent=1 // pred_check
      _
    $region19: #{lstm_forward.1} parent=1 // pred_check_branch
      %55 = sbr.rel (0) target = $region21
    $region20: #{lstm_forward.1} parent=1 // pred_region
      _
    $region21: #{lstm_forward.1} parent=1 // pred_fallthru
      _
    // Predicated region
    $region22: #{lstm_forward.1} parent=1 // pred_check
      _
    $region23: #{lstm_forward.1} parent=1 // pred_check_branch
      %57 = sbr.rel (0) target = $region25
    $region24: #{lstm_forward.1} parent=1 // pred_region
      _
    $region25: #{lstm_forward.1} parent=1 // pred_fallthru
      _
    // Predicated region
    $region26: #{lstm_forward.1} parent=1 // pred_check
      _
    $region27: #{lstm_forward.1} parent=1 // pred_check_branch
      %59 = sbr.rel (0) target = $region29
    $region28: #{lstm_forward.1} parent=1 // pred_region
      _
    $region29: #{lstm_forward.1} parent=1 // pred_fallthru
      _
    // Predicated region
    $region30: #{lstm_forward.1} parent=1 // pred_check
      _
    $region31: #{lstm_forward.1} parent=1 // pred_check_branch
      %61 = sbr.rel (0) target = $region33
    $region32: #{lstm_forward.1} parent=1 // pred_region
      %62 = dma.done [#allocation5], 4096
    $region33: #{lstm_forward.1} parent=1 // pred_fallthru
      _
    // Predicated region
    $region34: #{lstm_forward.1} parent=1 // pred_check
      _
    $region35: #{lstm_forward.1} parent=1 // pred_check_branch
      %64 = sbr.rel (0) target = $region37
    $region36: #{lstm_forward.1} parent=1 // pred_region
      %65 = dma.done [#allocation7], 4096
    $region37: #{lstm_forward.1} parent=1 // pred_fallthru
      _
    // Predicated region
    $region38: #{lstm_forward.1} parent=1 // pred_check
      _
    $region39: #{lstm_forward.1} parent=1 // pred_check_branch
      %67 = sbr.rel (0) target = $region41
    $region40: #{lstm_forward.1} parent=1 // pred_region
      %68 = dma.done [#allocation7], 16384
    $region41: #{lstm_forward.1} parent=1 // pred_fallthru
      _
    %v70 = vld [vmem:[%s0] sm:$0xff]
    %v71 = vld [vmem:[%s0 + $0x8] sm:$0xff]
    %v72 = vld [vmem:[%s0 + $0x10] sm:$0xff]
    %v73 = vld [vmem:[%s0 + $0x18] sm:$0xff]
    %v74 = vld [vmem:[%s0 + $0x20] sm:$0xff]
    %v75 = vpack.c.bf16 %v71, %v70
    %v76 = vpack.c.bf16 %v73, %v72
    %v77 = vpack.c.bf16 %v74, %v74
    %v78 = vld [vmem:[#allocation4] sm:$0xff]
    %v79 = vld [vmem:[#allocation4 + $0x8] sm:$0xff]
    %v80 = vld [vmem:[#allocation4 + $0x10] sm:$0xff]
    %v81 = vld [vmem:[#allocation4 + $0x18] sm:$0xff]
    %v82 = vld [vmem:[#allocation4 + $0x20] sm:$0xff]
    %v83 = vld [vmem:[#allocation4 + $0x28] sm:$0xff]
    %v84 = vld [vmem:[#allocation4 + $0x30] sm:$0xff]
    %v85 = vld [vmem:[#allocation4 + $0x38] sm:$0xff]
    %v86 = vld [vmem:[#allocation4 + $0x40] sm:$0xff]
    %v87 = vld [vmem:[#allocation4 + $0x48] sm:$0xff]
    %v88 = vld [vmem:[#allocation4 + $0x50] sm:$0xff]
    %v89 = vld [vmem:[#allocation4 + $0x58] sm:$0xff]
    %v90 = vld [vmem:[#allocation4 + $0x60] sm:$0xff]
    %v91 = vld [vmem:[#allocation4 + $0x68] sm:$0xff]
    %v92 = vld [vmem:[#allocation4 + $0x70] sm:$0xff]
    %v93 = vld [vmem:[#allocation4 + $0x78] sm:$0xff]
    %v94 = vld [vmem:[#allocation4 + $0x80] sm:$0xff]
    %v95 = vld [vmem:[#allocation4 + $0x88] sm:$0xff]
    %v96 = vld [vmem:[#allocation4 + $0x90] sm:$0xff]
    %v97 = vld [vmem:[#allocation4 + $0x98] sm:$0xff]
    %v98 = vld [vmem:[#allocation4 + $0xa0] sm:$0xff]
    %v99 = vld [vmem:[#allocation4 + $0xa8] sm:$0xff]
    %v100 = vld [vmem:[#allocation4 + $0xb0] sm:$0xff]
    %v101 = vld [vmem:[#allocation4 + $0xb8] sm:$0xff]
    %v102 = vld [vmem:[#allocation4 + $0xc0] sm:$0xff]
    %v103 = vld [vmem:[#allocation4 + $0xc8] sm:$0xff]
    %v104 = vld [vmem:[#allocation4 + $0xd0] sm:$0xff]
    %v105 = vld [vmem:[#allocation4 + $0xd8] sm:$0xff]
    %v106 = vld [vmem:[#allocation4 + $0xe0] sm:$0xff]
    %v107 = vld [vmem:[#allocation4 + $0xe8] sm:$0xff]
    %v108 = vld [vmem:[#allocation4 + $0xf0] sm:$0xff]
    %v109 = vld [vmem:[#allocation4 + $0xf8] sm:$0xff]
    %v110 = vld [vmem:[%s4] sm:$0xf]
    %v112 = vlaneseq
    %v113 = vshrl.u32 %v112, 7
    %v114 = vsub.s32 0, %v113
    %v115 = vrot.slane %v110, %v114
    %v116 = vlaneseq
    %v117 = vshrl.u32 %v116, 7
    %v118 = vsub.s32 1, %v117
    %v119 = vrot.slane %v110, %v118
    %v120 = vlaneseq
    %v121 = vshrl.u32 %v120, 7
    %v122 = vsub.s32 2, %v121
    %v123 = vrot.slane %v110, %v122
    %v124 = vlaneseq
    %v125 = vshrl.u32 %v124, 7
    %v126 = vsub.s32 3, %v125
    %v127 = vrot.slane %v110, %v126
    %v164 = vunpack.c.l.b16 %v78
    %v165 = vunpack.c.h.b16 %v78
    %v166 = vunpack.c.l.b16 %v79
    %v167 = vunpack.c.h.b16 %v79
    %v168 = vunpack.c.l.b16 %v80
    %v169 = vunpack.c.h.b16 %v80
    %v170 = vunpack.c.l.b16 %v81
    %v171 = vunpack.c.h.b16 %v81
    %v172 = vunpack.c.l.b16 %v82
    %v173 = vunpack.c.h.b16 %v82
    %v174 = vunpack.c.l.b16 %v83
    %v175 = vunpack.c.h.b16 %v83
    %v176 = vunpack.c.l.b16 %v84
    %v177 = vunpack.c.h.b16 %v84
    %v178 = vunpack.c.l.b16 %v85
    %v179 = vunpack.c.h.b16 %v85
    %v180 = vunpack.c.l.b16 %v86
    %v181 = vunpack.c.h.b16 %v86
    %v182 = vunpack.c.l.b16 %v87
    %v183 = vunpack.c.h.b16 %v87
    %v184 = vunpack.c.l.b16 %v88
    %v185 = vunpack.c.h.b16 %v88
    %v186 = vunpack.c.l.b16 %v89
    %v187 = vunpack.c.h.b16 %v89
    %v188 = vunpack.c.l.b16 %v90
    %v189 = vunpack.c.h.b16 %v90
    %v190 = vunpack.c.l.b16 %v91
    %v191 = vunpack.c.h.b16 %v91
    %v192 = vunpack.c.l.b16 %v92
    %v193 = vunpack.c.h.b16 %v92
    %v194 = vunpack.c.l.b16 %v93
    %v195 = vunpack.c.h.b16 %v93
    %v196 = vunpack.c.l.b16 %v94
    %v197 = vunpack.c.h.b16 %v94
    %v198 = vunpack.c.l.b16 %v95
    %v199 = vunpack.c.h.b16 %v95
    %v200 = vunpack.c.l.b16 %v96
    %v201 = vunpack.c.h.b16 %v96
    %v202 = vunpack.c.l.b16 %v97
    %v203 = vunpack.c.h.b16 %v97
    %v204 = vunpack.c.l.b16 %v98
    %v205 = vunpack.c.h.b16 %v98
    %v206 = vunpack.c.l.b16 %v99
    %v207 = vunpack.c.h.b16 %v99
    %v208 = vunpack.c.l.b16 %v100
    %v209 = vunpack.c.h.b16 %v100
    %v210 = vunpack.c.l.b16 %v101
    %v211 = vunpack.c.h.b16 %v101
    %v212 = vunpack.c.l.b16 %v102
    %v213 = vunpack.c.h.b16 %v102
    %v214 = vunpack.c.l.b16 %v103
    %v215 = vunpack.c.h.b16 %v103
    %v216 = vunpack.c.l.b16 %v104
    %v217 = vunpack.c.h.b16 %v104
    %v218 = vunpack.c.l.b16 %v105
    %v219 = vunpack.c.h.b16 %v105
    %v220 = vunpack.c.l.b16 %v106
    %v221 = vunpack.c.h.b16 %v106
    %v222 = vunpack.c.l.b16 %v107
    %v223 = vunpack.c.h.b16 %v107
    %v224 = vunpack.c.l.b16 %v108
    %v225 = vunpack.c.h.b16 %v108
    %v226 = vunpack.c.l.b16 %v109
    %v227 = vunpack.c.h.b16 %v109
    %v228 = vpack.c.b16 %v168, %v164
    %v229 = vpack.c.b16 %v169, %v165
    %v230 = vpack.c.b16 %v170, %v166
    %v231 = vpack.c.b16 %v171, %v167
    %v232 = vpack.c.b16 %v176, %v172
    %v233 = vpack.c.b16 %v177, %v173
    %v234 = vpack.c.b16 %v178, %v174
    %v235 = vpack.c.b16 %v179, %v175
    %v236 = vpack.c.b16 %v184, %v180
    %v237 = vpack.c.b16 %v185, %v181
    %v238 = vpack.c.b16 %v186, %v182
    %v239 = vpack.c.b16 %v187, %v183
    %v240 = vpack.c.b16 %v192, %v188
    %v241 = vpack.c.b16 %v193, %v189
    %v242 = vpack.c.b16 %v194, %v190
    %v243 = vpack.c.b16 %v195, %v191
    %v244 = vpack.c.b16 %v200, %v196
    %v245 = vpack.c.b16 %v201, %v197
    %v246 = vpack.c.b16 %v202, %v198
    %v247 = vpack.c.b16 %v203, %v199
    %v248 = vpack.c.b16 %v208, %v204
    %v249 = vpack.c.b16 %v209, %v205
    %v250 = vpack.c.b16 %v210, %v206
    %v251 = vpack.c.b16 %v211, %v207
    %v252 = vpack.c.b16 %v216, %v212
    %v253 = vpack.c.b16 %v217, %v213
    %v254 = vpack.c.b16 %v218, %v214
    %v255 = vpack.c.b16 %v219, %v215
    %v256 = vpack.c.b16 %v224, %v220
    %v257 = vpack.c.b16 %v225, %v221
    %v258 = vpack.c.b16 %v226, %v222
    %v259 = vpack.c.b16 %v227, %v223
    %292 = vmatprep.subr.bf16.mxu0 %v229
    %293 = vmatpush1.bf16.msra.mxu0 %v228
    %294 = vmatprep.subr.bf16.mxu0 %v233
    %295 = vmatpush1.bf16.msra.mxu0 %v232
    %296 = vmatprep.subr.bf16.mxu0 %v237
    %297 = vmatpush1.bf16.msra.mxu0 %v236
    %298 = vmatprep.subr.bf16.mxu0 %v241
    %299 = vmatpush1.bf16.msra.mxu0 %v240
    %300 = vmatprep.subr.bf16.mxu0 %v245
    %301 = vmatpush1.bf16.msra.mxu0 %v244
    %302 = vmatprep.subr.bf16.mxu0 %v249
    %303 = vmatpush1.bf16.msra.mxu0 %v248
    %304 = vmatprep.subr.bf16.mxu0 %v253
    %305 = vmatpush1.bf16.msra.mxu0 %v252
    %306 = vmatprep.subr.bf16.mxu0 %v257
    %307 = vmatpush1.bf16.msra.mxu0 %v256
    %308 = vmatprep.subr.bf16.mxu0 0
    %309 = vmatpush1.bf16.msra.mxu0 0
    %310 = vmatprep.subr.bf16.mxu0 0
    %311 = vmatpush1.bf16.msra.mxu0 0
    %312 = vmatprep.subr.bf16.mxu0 0
    %313 = vmatpush1.bf16.msra.mxu0 0
    %314 = vmatprep.subr.bf16.mxu0 0
    %315 = vmatpush1.bf16.msra.mxu0 0
    %316 = vmatprep.subr.bf16.mxu0 0
    %317 = vmatpush1.bf16.msra.mxu0 0
    %318 = vmatprep.subr.bf16.mxu0 0
    %319 = vmatpush1.bf16.msra.mxu0 0
    %320 = vmatprep.subr.bf16.mxu0 0
    %321 = vmatpush1.bf16.msra.mxu0 0
    %322 = vmatprep.subr.bf16.mxu0 0
    %323 = vmatpush1.bf16.msra.mxu0 0
    %324 = vmatprep.mubr.bf16.mxu0 0
    %325 = vmatmul.mubr.bf16.gmra.mrb[0].mxu0 %v75
    %v326 = vpop.f32.mrb[0].mxu0
    %v327 = vadd.f32 %v115, %v326
    %v328 = vpop.f32.mrb[0].mxu0
    %v329 = vadd.f32 %v119, %v328
    %v330 = vpop.f32.mrb[0].mxu0
    %v331 = vadd.f32 %v115, %v330
    %v332 = vpop.f32.mrb[0].mxu0
    %v333 = vadd.f32 %v119, %v332
    %334 = vmatprep.mubr.bf16.mxu0 0
    %335 = vmatmul.mubr.bf16.gmra.mrb[0].mxu0 %v76
    %v336 = vpop.f32.mrb[0].mxu0
    %v337 = vadd.f32 %v115, %v336
    %v338 = vpop.f32.mrb[0].mxu0
    %v339 = vadd.f32 %v119, %v338
    %v340 = vpop.f32.mrb[0].mxu0
    %v341 = vadd.f32 %v115, %v340
    %v342 = vpop.f32.mrb[0].mxu0
    %v343 = vadd.f32 %v119, %v342
    %344 = vmatprep.mubr.bf16.mxu0 0
    %345 = vmatmul.mubr.bf16.gmra.mrb[0].mxu0 %v77
    %v346 = vpop.f32.mrb[0].mxu0
    %v347 = vadd.f32 %v115, %v346
    %v348 = vpop.f32.mrb[0].mxu0
    %v349 = vadd.f32 %v119, %v348
    %v350 = vpop.f32.mrb[0].mxu0
    %v351 = vpop.f32.mrb[0].mxu0
    %352 = vdwg.mxu0
    %353 = vmatprep.subr.bf16.mxu0 %v231
    %354 = vmatpush1.bf16.msra.mxu0 %v230
    %355 = vmatprep.subr.bf16.mxu0 %v235
    %356 = vmatpush1.bf16.msra.mxu0 %v234
    %357 = vmatprep.subr.bf16.mxu0 %v239
    %358 = vmatpush1.bf16.msra.mxu0 %v238
    %359 = vmatprep.subr.bf16.mxu0 %v243
    %360 = vmatpush1.bf16.msra.mxu0 %v242
    %361 = vmatprep.subr.bf16.mxu0 %v247
    %362 = vmatpush1.bf16.msra.mxu0 %v246
    %363 = vmatprep.subr.bf16.mxu0 %v251
    %364 = vmatpush1.bf16.msra.mxu0 %v250
    %365 = vmatprep.subr.bf16.mxu0 %v255
    %366 = vmatpush1.bf16.msra.mxu0 %v254
    %367 = vmatprep.subr.bf16.mxu0 %v259
    %368 = vmatpush1.bf16.msra.mxu0 %v258
    %369 = vmatprep.subr.bf16.mxu0 0
    %370 = vmatpush1.bf16.msra.mxu0 0
    %371 = vmatprep.subr.bf16.mxu0 0
    %372 = vmatpush1.bf16.msra.mxu0 0
    %373 = vmatprep.subr.bf16.mxu0 0
    %374 = vmatpush1.bf16.msra.mxu0 0
    %375 = vmatprep.subr.bf16.mxu0 0
    %376 = vmatpush1.bf16.msra.mxu0 0
    %377 = vmatprep.subr.bf16.mxu0 0
    %378 = vmatpush1.bf16.msra.mxu0 0
    %379 = vmatprep.subr.bf16.mxu0 0
    %380 = vmatpush1.bf16.msra.mxu0 0
    %381 = vmatprep.subr.bf16.mxu0 0
    %382 = vmatpush1.bf16.msra.mxu0 0
    %383 = vmatprep.subr.bf16.mxu0 0
    %384 = vmatpush1.bf16.msra.mxu0 0
    %385 = vmatprep.mubr.bf16.mxu0 0
    %386 = vmatmul.mubr.bf16.gmra.mrb[0].mxu0 %v75
    %v387 = vpop.f32.mrb[0].mxu0
    %v388 = vadd.f32 %v123, %v387
    %v389 = vpop.f32.mrb[0].mxu0
    %v390 = vadd.f32 %v127, %v389
    %v391 = vpop.f32.mrb[0].mxu0
    %v392 = vadd.f32 %v123, %v391
    %v393 = vpop.f32.mrb[0].mxu0
    %v394 = vadd.f32 %v127, %v393
    %395 = vmatprep.mubr.bf16.mxu0 0
    %396 = vmatmul.mubr.bf16.gmra.mrb[0].mxu0 %v76
    %v397 = vpop.f32.mrb[0].mxu0
    %v398 = vadd.f32 %v123, %v397
    %v399 = vpop.f32.mrb[0].mxu0
    %v400 = vadd.f32 %v127, %v399
    %v401 = vpop.f32.mrb[0].mxu0
    %v402 = vadd.f32 %v123, %v401
    %v403 = vpop.f32.mrb[0].mxu0
    %v404 = vadd.f32 %v127, %v403
    %405 = vmatprep.mubr.bf16.mxu0 0
    %406 = vmatmul.mubr.bf16.gmra.mrb[0].mxu0 %v77
    %v407 = vpop.f32.mrb[0].mxu0
    %v408 = vadd.f32 %v123, %v407
    %v409 = vpop.f32.mrb[0].mxu0
    %v410 = vadd.f32 %v127, %v409
    %v411 = vpop.f32.mrb[0].mxu0
    %v412 = vpop.f32.mrb[0].mxu0
    %413 = vdwg.mxu0
    %414 = vst [vmem:[#allocation2] sm:$0xff] %v327
    %415 = vst [vmem:[#allocation2 + $0x8] sm:$0xff] %v329
    %416 = vst [vmem:[#allocation2 + $0x10] sm:$0xff] %v388
    %417 = vst [vmem:[#allocation2 + $0x18] sm:$0xff] %v390
    %418 = vst [vmem:[#allocation2 + $0x20] sm:$0xff] %v331
    %419 = vst [vmem:[#allocation2 + $0x28] sm:$0xff] %v333
    %420 = vst [vmem:[#allocation2 + $0x30] sm:$0xff] %v392
    %421 = vst [vmem:[#allocation2 + $0x38] sm:$0xff] %v394
    %422 = vst [vmem:[#allocation2 + $0x40] sm:$0xff] %v337
    %423 = vst [vmem:[#allocation2 + $0x48] sm:$0xff] %v339
    %424 = vst [vmem:[#allocation2 + $0x50] sm:$0xff] %v398
    %425 = vst [vmem:[#allocation2 + $0x58] sm:$0xff] %v400
    %426 = vst [vmem:[#allocation2 + $0x60] sm:$0xff] %v341
    %427 = vst [vmem:[#allocation2 + $0x68] sm:$0xff] %v343
    %428 = vst [vmem:[#allocation2 + $0x70] sm:$0xff] %v402
    %429 = vst [vmem:[#allocation2 + $0x78] sm:$0xff] %v404
    %430 = vst [vmem:[#allocation2 + $0x80] sm:$0xff] %v347
    %431 = vst [vmem:[#allocation2 + $0x88] sm:$0xff] %v349
    %432 = vst [vmem:[#allocation2 + $0x90] sm:$0xff] %v408
    %433 = vst [vmem:[#allocation2 + $0x98] sm:$0xff] %v410
    %v434 = vld [vmem:[#allocation2] sm:$0xff]
    %v435 = vld [vmem:[#allocation2 + $0x8] sm:$0xff]
    %v436 = vld [vmem:[#allocation2 + $0x10] sm:$0xff]
    %v437 = vld [vmem:[#allocation2 + $0x18] sm:$0xff]
    %v438 = vld [vmem:[#allocation6] sm:$0xff]
    %v439 = vld [vmem:[#allocation6 + $0x8] sm:$0xff]
    %v440 = vld [vmem:[#allocation6 + $0x10] sm:$0xff]
    %v441 = vld [vmem:[#allocation6 + $0x18] sm:$0xff]
    %v442 = vld [vmem:[#allocation6 + $0x20] sm:$0xff]
    %v443 = vld [vmem:[#allocation6 + $0x28] sm:$0xff]
    %v444 = vld [vmem:[#allocation6 + $0x30] sm:$0xff]
    %v445 = vld [vmem:[#allocation6 + $0x38] sm:$0xff]
    %v446 = vld [vmem:[#allocation6 + $0x40] sm:$0xff]
    %v447 = vld [vmem:[#allocation6 + $0x48] sm:$0xff]
    %v448 = vld [vmem:[#allocation6 + $0x50] sm:$0xff]
    %v449 = vld [vmem:[#allocation6 + $0x58] sm:$0xff]
    %v450 = vld [vmem:[#allocation6 + $0x60] sm:$0xff]
    %v451 = vld [vmem:[#allocation6 + $0x68] sm:$0xff]
    %v452 = vld [vmem:[#allocation6 + $0x70] sm:$0xff]
    %v453 = vld [vmem:[#allocation6 + $0x78] sm:$0xff]
    %v454 = vld [vmem:[#allocation6 + $0x80] sm:$0xff]
    %v455 = vld [vmem:[#allocation6 + $0x88] sm:$0xff]
    %v456 = vld [vmem:[#allocation6 + $0x90] sm:$0xff]
    %v457 = vld [vmem:[#allocation6 + $0x98] sm:$0xff]
    %v458 = vld [vmem:[#allocation6 + $0xa0] sm:$0xff]
    %v459 = vld [vmem:[#allocation6 + $0xa8] sm:$0xff]
    %v460 = vld [vmem:[#allocation6 + $0xb0] sm:$0xff]
    %v461 = vld [vmem:[#allocation6 + $0xb8] sm:$0xff]
    %v462 = vld [vmem:[#allocation6 + $0xc0] sm:$0xff]
    %v463 = vld [vmem:[#allocation6 + $0xc8] sm:$0xff]
    %v464 = vld [vmem:[#allocation6 + $0xd0] sm:$0xff]
    %v465 = vld [vmem:[#allocation6 + $0xd8] sm:$0xff]
    %v466 = vld [vmem:[#allocation6 + $0xe0] sm:$0xff]
    %v467 = vld [vmem:[#allocation6 + $0xe8] sm:$0xff]
    %v468 = vld [vmem:[#allocation6 + $0xf0] sm:$0xff]
    %v469 = vld [vmem:[#allocation6 + $0xf8] sm:$0xff]
    %v502 = vunpack.c.l.b16 %v438
    %v503 = vunpack.c.h.b16 %v438
    %v504 = vunpack.c.l.b16 %v439
    %v505 = vunpack.c.h.b16 %v439
    %v506 = vunpack.c.l.b16 %v440
    %v507 = vunpack.c.h.b16 %v440
    %v508 = vunpack.c.l.b16 %v441
    %v509 = vunpack.c.h.b16 %v441
    %v510 = vunpack.c.l.b16 %v442
    %v511 = vunpack.c.h.b16 %v442
    %v512 = vunpack.c.l.b16 %v443
    %v513 = vunpack.c.h.b16 %v443
    %v514 = vunpack.c.l.b16 %v444
    %v515 = vunpack.c.h.b16 %v444
    %v516 = vunpack.c.l.b16 %v445
    %v517 = vunpack.c.h.b16 %v445
    %v518 = vunpack.c.l.b16 %v446
    %v519 = vunpack.c.h.b16 %v446
    %v520 = vunpack.c.l.b16 %v447
    %v521 = vunpack.c.h.b16 %v447
    %v522 = vunpack.c.l.b16 %v448
    %v523 = vunpack.c.h.b16 %v448
    %v524 = vunpack.c.l.b16 %v449
    %v525 = vunpack.c.h.b16 %v449
    %v526 = vunpack.c.l.b16 %v450
    %v527 = vunpack.c.h.b16 %v450
    %v528 = vunpack.c.l.b16 %v451
    %v529 = vunpack.c.h.b16 %v451
    %v530 = vunpack.c.l.b16 %v452
    %v531 = vunpack.c.h.b16 %v452
    %v532 = vunpack.c.l.b16 %v453
    %v533 = vunpack.c.h.b16 %v453
    %v534 = vunpack.c.l.b16 %v454
    %v535 = vunpack.c.h.b16 %v454
    %v536 = vunpack.c.l.b16 %v455
    %v537 = vunpack.c.h.b16 %v455
    %v538 = vunpack.c.l.b16 %v456
    %v539 = vunpack.c.h.b16 %v456
    %v540 = vunpack.c.l.b16 %v457
    %v541 = vunpack.c.h.b16 %v457
    %v542 = vunpack.c.l.b16 %v458
    %v543 = vunpack.c.h.b16 %v458
    %v544 = vunpack.c.l.b16 %v459
    %v545 = vunpack.c.h.b16 %v459
    %v546 = vunpack.c.l.b16 %v460
    %v547 = vunpack.c.h.b16 %v460
    %v548 = vunpack.c.l.b16 %v461
    %v549 = vunpack.c.h.b16 %v461
    %v550 = vunpack.c.l.b16 %v462
    %v551 = vunpack.c.h.b16 %v462
    %v552 = vunpack.c.l.b16 %v463
    %v553 = vunpack.c.h.b16 %v463
    %v554 = vunpack.c.l.b16 %v464
    %v555 = vunpack.c.h.b16 %v464
    %v556 = vunpack.c.l.b16 %v465
    %v557 = vunpack.c.h.b16 %v465
    %v558 = vunpack.c.l.b16 %v466
    %v559 = vunpack.c.h.b16 %v466
    %v560 = vunpack.c.l.b16 %v467
    %v561 = vunpack.c.h.b16 %v467
    %v562 = vunpack.c.l.b16 %v468
    %v563 = vunpack.c.h.b16 %v468
    %v564 = vunpack.c.l.b16 %v469
    %v565 = vunpack.c.h.b16 %v469
    %v566 = vpack.c.b16 %v506, %v502
    %v567 = vpack.c.b16 %v507, %v503
    %v568 = vpack.c.b16 %v508, %v504
    %v569 = vpack.c.b16 %v509, %v505
    %v570 = vpack.c.b16 %v514, %v510
    %v571 = vpack.c.b16 %v515, %v511
    %v572 = vpack.c.b16 %v516, %v512
    %v573 = vpack.c.b16 %v517, %v513
    %v574 = vpack.c.b16 %v522, %v518
    %v575 = vpack.c.b16 %v523, %v519
    %v576 = vpack.c.b16 %v524, %v520
    %v577 = vpack.c.b16 %v525, %v521
    %v578 = vpack.c.b16 %v530, %v526
    %v579 = vpack.c.b16 %v531, %v527
    %v580 = vpack.c.b16 %v532, %v528
    %v581 = vpack.c.b16 %v533, %v529
    %v582 = vpack.c.b16 %v538, %v534
    %v583 = vpack.c.b16 %v539, %v535
    %v584 = vpack.c.b16 %v540, %v536
    %v585 = vpack.c.b16 %v541, %v537
    %v586 = vpack.c.b16 %v546, %v542
    %v587 = vpack.c.b16 %v547, %v543
    %v588 = vpack.c.b16 %v548, %v544
    %v589 = vpack.c.b16 %v549, %v545
    %v590 = vpack.c.b16 %v554, %v550
    %v591 = vpack.c.b16 %v555, %v551
    %v592 = vpack.c.b16 %v556, %v552
    %v593 = vpack.c.b16 %v557, %v553
    %v594 = vpack.c.b16 %v562, %v558
    %v595 = vpack.c.b16 %v563, %v559
    %v596 = vpack.c.b16 %v564, %v560
    %v597 = vpack.c.b16 %v565, %v561
    %630 = vmatprep.subr.bf16.mxu0 %v567
    %631 = vmatpush1.bf16.msra.mxu0 %v566
    %632 = vmatprep.subr.bf16.mxu0 %v571
    %633 = vmatpush1.bf16.msra.mxu0 %v570
    %634 = vmatprep.subr.bf16.mxu0 %v575
    %635 = vmatpush1.bf16.msra.mxu0 %v574
    %636 = vmatprep.subr.bf16.mxu0 %v579
    %637 = vmatpush1.bf16.msra.mxu0 %v578
    %638 = vmatprep.subr.bf16.mxu0 %v583
    %639 = vmatpush1.bf16.msra.mxu0 %v582
    %640 = vmatprep.subr.bf16.mxu0 %v587
    %641 = vmatpush1.bf16.msra.mxu0 %v586
    %642 = vmatprep.subr.bf16.mxu0 %v591
    %643 = vmatpush1.bf16.msra.mxu0 %v590
    %644 = vmatprep.subr.bf16.mxu0 %v595
    %645 = vmatpush1.bf16.msra.mxu0 %v594
    %646 = vmatprep.subr.bf16.mxu0 0
    %647 = vmatpush1.bf16.msra.mxu0 0
    %648 = vmatprep.subr.bf16.mxu0 0
    %649 = vmatpush1.bf16.msra.mxu0 0
    %650 = vmatprep.subr.bf16.mxu0 0
    %651 = vmatpush1.bf16.msra.mxu0 0
    %652 = vmatprep.subr.bf16.mxu0 0
    %653 = vmatpush1.bf16.msra.mxu0 0
    %654 = vmatprep.subr.bf16.mxu0 0
    %655 = vmatpush1.bf16.msra.mxu0 0
    %656 = vmatprep.subr.bf16.mxu0 0
    %657 = vmatpush1.bf16.msra.mxu0 0
    %658 = vmatprep.subr.bf16.mxu0 0
    %659 = vmatpush1.bf16.msra.mxu0 0
    %660 = vmatprep.subr.bf16.mxu0 0
    %661 = vmatpush1.bf16.msra.mxu0 0
    %662 = vmatprep.mubr.bf16.mxu0 0
    %663 = vmatmul.mubr.bf16.gmra.mrb[0].mxu0 0
    %v664 = vpop.f32.mrb[0].mxu0
    %v665 = vadd.f32 0.0, %v664
    %v666 = vpop.f32.mrb[0].mxu0
    %v667 = vadd.f32 0.0, %v666
    %v668 = vpop.f32.mrb[0].mxu0
    %v669 = vpop.f32.mrb[0].mxu0
    %670 = vdwg.mxu0
    %671 = vmatprep.subr.bf16.mxu0 %v569
    %672 = vmatpush1.bf16.msra.mxu0 %v568
    %673 = vmatprep.subr.bf16.mxu0 %v573
    %674 = vmatpush1.bf16.msra.mxu0 %v572
    %675 = vmatprep.subr.bf16.mxu0 %v577
    %676 = vmatpush1.bf16.msra.mxu0 %v576
    %677 = vmatprep.subr.bf16.mxu0 %v581
    %678 = vmatpush1.bf16.msra.mxu0 %v580
    %679 = vmatprep.subr.bf16.mxu0 %v585
    %680 = vmatpush1.bf16.msra.mxu0 %v584
    %681 = vmatprep.subr.bf16.mxu0 %v589
    %682 = vmatpush1.bf16.msra.mxu0 %v588
    %683 = vmatprep.subr.bf16.mxu0 %v593
    %684 = vmatpush1.bf16.msra.mxu0 %v592
    %685 = vmatprep.subr.bf16.mxu0 %v597
    %686 = vmatpush1.bf16.msra.mxu0 %v596
    %687 = vmatprep.subr.bf16.mxu0 0
    %688 = vmatpush1.bf16.msra.mxu0 0
    %689 = vmatprep.subr.bf16.mxu0 0
    %690 = vmatpush1.bf16.msra.mxu0 0
    %691 = vmatprep.subr.bf16.mxu0 0
    %692 = vmatpush1.bf16.msra.mxu0 0
    %693 = vmatprep.subr.bf16.mxu0 0
    %694 = vmatpush1.bf16.msra.mxu0 0
    %695 = vmatprep.subr.bf16.mxu0 0
    %696 = vmatpush1.bf16.msra.mxu0 0
    %697 = vmatprep.subr.bf16.mxu0 0
    %698 = vmatpush1.bf16.msra.mxu0 0
    %699 = vmatprep.subr.bf16.mxu0 0
    %700 = vmatpush1.bf16.msra.mxu0 0
    %701 = vmatprep.subr.bf16.mxu0 0
    %702 = vmatpush1.bf16.msra.mxu0 0
    %703 = vmatprep.mubr.bf16.mxu0 0
    %704 = vmatmul.mubr.bf16.gmra.mrb[0].mxu0 0
    %v705 = vpop.f32.mrb[0].mxu0
    %v706 = vadd.f32 0.0, %v705
    %v707 = vpop.f32.mrb[0].mxu0
    %v708 = vadd.f32 0.0, %v707
    %v709 = vpop.f32.mrb[0].mxu0
    %v710 = vpop.f32.mrb[0].mxu0
    %711 = vdwg.mxu0
    %v712 = vadd.f32 %v434, %v665
    %v713 = vadd.f32 %v435, %v667
    %v714 = vadd.f32 %v436, %v706
    %v715 = vadd.f32 %v437, %v708
    %v716 = vxor.u32 %v712, 2147483648
    %v717 = vmul.f32 %v716, 1.442695
    %v718 = vpow.pop %v717
    %v719 = vadd.f32 %v718, 1.0
    %v720 = vrcp.pop %v719
    %v721 = vmul.f32 1.0, %v720
    %v722 = vxor.u32 %v713, 2147483648
    %v723 = vmul.f32 %v722, 1.442695
    %v724 = vpow.pop %v723
    %v725 = vadd.f32 %v724, 1.0
    %v726 = vrcp.pop %v725
    %v727 = vmul.f32 1.0, %v726
    %v728 = vtanh.pop %v714
    %v729 = vxor.u32 %v715, 2147483648
    %v730 = vmul.f32 %v729, 1.442695
    %v731 = vpow.pop %v730
    %v732 = vadd.f32 %v731, 1.0
    %v733 = vrcp.pop %v732
    %v734 = vmul.f32 1.0, %v733
    %v735 = vmul.f32 %v727, 0.0
    %v736 = vmul.f32 %v721, %v728
    %v737 = vadd.f32 %v735, %v736
    %v738 = vtanh.pop %v737
    %v739 = vmul.f32 %v734, %v738
    %s740 = scalar_lea.vmem [#allocation2], 32
    %v741 = vld [vmem:[%s740] sm:$0xff]
    %v742 = vld [vmem:[%s740 + $0x8] sm:$0xff]
    %v743 = vld [vmem:[%s740 + $0x10] sm:$0xff]
    %v744 = vld [vmem:[%s740 + $0x18] sm:$0xff]
    %v745 = vpack.c.bf16 %v739, %v739
    %746 = vmatprep.subr.bf16.mxu0 %v567
    %747 = vmatpush1.bf16.msra.mxu0 %v566
    %748 = vmatprep.subr.bf16.mxu0 %v571
    %749 = vmatpush1.bf16.msra.mxu0 %v570
    %750 = vmatprep.subr.bf16.mxu0 %v575
    %751 = vmatpush1.bf16.msra.mxu0 %v574
    %752 = vmatprep.subr.bf16.mxu0 %v579
    %753 = vmatpush1.bf16.msra.mxu0 %v578
    %754 = vmatprep.subr.bf16.mxu0 %v583
    %755 = vmatpush1.bf16.msra.mxu0 %v582
    %756 = vmatprep.subr.bf16.mxu0 %v587
    %757 = vmatpush1.bf16.msra.mxu0 %v586
    %758 = vmatprep.subr.bf16.mxu0 %v591
    %759 = vmatpush1.bf16.msra.mxu0 %v590
    %760 = vmatprep.subr.bf16.mxu0 %v595
    %761 = vmatpush1.bf16.msra.mxu0 %v594
    %762 = vmatprep.subr.bf16.mxu0 0
    %763 = vmatpush1.bf16.msra.mxu0 0
    %764 = vmatprep.subr.bf16.mxu0 0
    %765 = vmatpush1.bf16.msra.mxu0 0
    %766 = vmatprep.subr.bf16.mxu0 0
    %767 = vmatpush1.bf16.msra.mxu0 0
    %768 = vmatprep.subr.bf16.mxu0 0
    %769 = vmatpush1.bf16.msra.mxu0 0
    %770 = vmatprep.subr.bf16.mxu0 0
    %771 = vmatpush1.bf16.msra.mxu0 0
    %772 = vmatprep.subr.bf16.mxu0 0
    %773 = vmatpush1.bf16.msra.mxu0 0
    %774 = vmatprep.subr.bf16.mxu0 0
    %775 = vmatpush1.bf16.msra.mxu0 0
    %776 = vmatprep.subr.bf16.mxu0 0
    %777 = vmatpush1.bf16.msra.mxu0 0
    %778 = vmatprep.mubr.bf16.mxu0 0
    %779 = vmatmul.mubr.bf16.gmra.mrb[0].mxu0 %v745
    %v780 = vpop.f32.mrb[0].mxu0
    %v781 = vadd.f32 0.0, %v780
    %v782 = vpop.f32.mrb[0].mxu0
    %v783 = vadd.f32 0.0, %v782
    %v784 = vpop.f32.mrb[0].mxu0
    %v785 = vpop.f32.mrb[0].mxu0
    %786 = vdwg.mxu0
    %787 = vmatprep.subr.bf16.mxu0 %v569
    %788 = vmatpush1.bf16.msra.mxu0 %v568
    %789 = vmatprep.subr.bf16.mxu0 %v573
    %790 = vmatpush1.bf16.msra.mxu0 %v572
    %791 = vmatprep.subr.bf16.mxu0 %v577
    %792 = vmatpush1.bf16.msra.mxu0 %v576
    %793 = vmatprep.subr.bf16.mxu0 %v581
    %794 = vmatpush1.bf16.msra.mxu0 %v580
    %795 = vmatprep.subr.bf16.mxu0 %v585
    %796 = vmatpush1.bf16.msra.mxu0 %v584
    %797 = vmatprep.subr.bf16.mxu0 %v589
    %798 = vmatpush1.bf16.msra.mxu0 %v588
    %799 = vmatprep.subr.bf16.mxu0 %v593
    %800 = vmatpush1.bf16.msra.mxu0 %v592
    %801 = vmatprep.subr.bf16.mxu0 %v597
    %802 = vmatpush1.bf16.msra.mxu0 %v596
    %803 = vmatprep.subr.bf16.mxu0 0
    %804 = vmatpush1.bf16.msra.mxu0 0
    %805 = vmatprep.subr.bf16.mxu0 0
    %806 = vmatpush1.bf16.msra.mxu0 0
    %807 = vmatprep.subr.bf16.mxu0 0
    %808 = vmatpush1.bf16.msra.mxu0 0
    %809 = vmatprep.subr.bf16.mxu0 0
    %810 = vmatpush1.bf16.msra.mxu0 0
    %811 = vmatprep.subr.bf16.mxu0 0
    %812 = vmatpush1.bf16.msra.mxu0 0
    %813 = vmatprep.subr.bf16.mxu0 0
    %814 = vmatpush1.bf16.msra.mxu0 0
    %815 = vmatprep.subr.bf16.mxu0 0
    %816 = vmatpush1.bf16.msra.mxu0 0
    %817 = vmatprep.subr.bf16.mxu0 0
    %818 = vmatpush1.bf16.msra.mxu0 0
    %819 = vmatprep.mubr.bf16.mxu0 0
    %820 = vmatmul.mubr.bf16.gmra.mrb[0].mxu0 %v745
    %v821 = vpop.f32.mrb[0].mxu0
    %v822 = vadd.f32 0.0, %v821
    %v823 = vpop.f32.mrb[0].mxu0
    %v824 = vadd.f32 0.0, %v823
    %v825 = vpop.f32.mrb[0].mxu0
    %v826 = vpop.f32.mrb[0].mxu0
    %827 = vdwg.mxu0
    %v828 = vadd.f32 %v741, %v781
    %v829 = vadd.f32 %v742, %v783
    %v830 = vadd.f32 %v743, %v822
    %v831 = vadd.f32 %v744, %v824
    %v832 = vxor.u32 %v828, 2147483648
    %v833 = vmul.f32 %v832, 1.442695
    %v834 = vpow.pop %v833
    %v835 = vadd.f32 %v834, 1.0
    %v836 = vrcp.pop %v835
    %v837 = vmul.f32 1.0, %v836
    %v838 = vxor.u32 %v829, 2147483648
    %v839 = vmul.f32 %v838, 1.442695
    %v840 = vpow.pop %v839
    %v841 = vadd.f32 %v840, 1.0
    %v842 = vrcp.pop %v841
    %v843 = vmul.f32 1.0, %v842
    %v844 = vtanh.pop %v830
    %v845 = vxor.u32 %v831, 2147483648
    %v846 = vmul.f32 %v845, 1.442695
    %v847 = vpow.pop %v846
    %v848 = vadd.f32 %v847, 1.0
    %v849 = vrcp.pop %v848
    %v850 = vmul.f32 1.0, %v849
    %v851 = vmul.f32 %v843, %v737
    %v852 = vmul.f32 %v837, %v844
    %v853 = vadd.f32 %v851, %v852
    %v854 = vtanh.pop %v853
    %v855 = vmul.f32 %v850, %v854
    %v856 = vpack.c.bf16 0.0, 0.0
    %v857 = vld [vmem:[#allocation8] sm:$0xff]
    %v858 = vld [vmem:[#allocation8 + $0x8] sm:$0xff]
    %v859 = vld [vmem:[#allocation8 + $0x10] sm:$0xff]
    %v860 = vld [vmem:[#allocation8 + $0x18] sm:$0xff]
    %v861 = vld [vmem:[#allocation8 + $0x20] sm:$0xff]
    %v862 = vld [vmem:[#allocation8 + $0x28] sm:$0xff]
    %v863 = vld [vmem:[#allocation8 + $0x30] sm:$0xff]
    %v864 = vld [vmem:[#allocation8 + $0x38] sm:$0xff]
    %v865 = vld [vmem:[#allocation8 + $0x40] sm:$0xff]
    %v866 = vld [vmem:[#allocation8 + $0x48] sm:$0xff]
    %v867 = vld [vmem:[#allocation8 + $0x50] sm:$0xff]
    %v868 = vld [vmem:[#allocation8 + $0x58] sm:$0xff]
    %v869 = vld [vmem:[#allocation8 + $0x60] sm:$0xff]
    %v870 = vld [vmem:[#allocation8 + $0x68] sm:$0xff]
    %v871 = vld [vmem:[#allocation8 + $0x70] sm:$0xff]
    %v872 = vld [vmem:[#allocation8 + $0x78] sm:$0xff]
    %v873 = vld [vmem:[#allocation8 + $0x80] sm:$0xff]
    %v874 = vld [vmem:[#allocation8 + $0x88] sm:$0xff]
    %v875 = vld [vmem:[#allocation8 + $0x90] sm:$0xff]
    %v876 = vld [vmem:[#allocation8 + $0x98] sm:$0xff]
    %v877 = vld [vmem:[#allocation8 + $0xa0] sm:$0xff]
    %v878 = vld [vmem:[#allocation8 + $0xa8] sm:$0xff]
    %v879 = vld [vmem:[#allocation8 + $0xb0] sm:$0xff]
    %v880 = vld [vmem:[#allocation8 + $0xb8] sm:$0xff]
    %v881 = vld [vmem:[#allocation8 + $0xc0] sm:$0xff]
    %v882 = vld [vmem:[#allocation8 + $0xc8] sm:$0xff]
    %v883 = vld [vmem:[#allocation8 + $0xd0] sm:$0xff]
    %v884 = vld [vmem:[#allocation8 + $0xd8] sm:$0xff]
    %v885 = vld [vmem:[#allocation8 + $0xe0] sm:$0xff]
    %v886 = vld [vmem:[#allocation8 + $0xe8] sm:$0xff]
    %v887 = vld [vmem:[#allocation8 + $0xf0] sm:$0xff]
    %v888 = vld [vmem:[#allocation8 + $0xf8] sm:$0xff]
    %v889 = vld [vmem:[#allocation8 + $0x100] sm:$0xff]
    %v890 = vld [vmem:[#allocation8 + $0x108] sm:$0xff]
    %v891 = vld [vmem:[#allocation8 + $0x110] sm:$0xff]
    %v892 = vld [vmem:[#allocation8 + $0x118] sm:$0xff]
    %v893 = vld [vmem:[#allocation8 + $0x120] sm:$0xff]
    %v894 = vld [vmem:[#allocation8 + $0x128] sm:$0xff]
    %v895 = vld [vmem:[#allocation8 + $0x130] sm:$0xff]
    %v896 = vld [vmem:[#allocation8 + $0x138] sm:$0xff]
    %v897 = vld [vmem:[#allocation8 + $0x140] sm:$0xff]
    %v898 = vld [vmem:[#allocation8 + $0x148] sm:$0xff]
    %v899 = vld [vmem:[#allocation8 + $0x150] sm:$0xff]
    %v900 = vld [vmem:[#allocation8 + $0x158] sm:$0xff]
    %v901 = vld [vmem:[#allocation8 + $0x160] sm:$0xff]
    %v902 = vld [vmem:[#allocation8 + $0x168] sm:$0xff]
    %v903 = vld [vmem:[#allocation8 + $0x170] sm:$0xff]
    %v904 = vld [vmem:[#allocation8 + $0x178] sm:$0xff]
    %v905 = vld [vmem:[#allocation8 + $0x180] sm:$0xff]
    %v906 = vld [vmem:[#allocation8 + $0x188] sm:$0xff]
    %v907 = vld [vmem:[#allocation8 + $0x190] sm:$0xff]
    %v908 = vld [vmem:[#allocation8 + $0x198] sm:$0xff]
    %v909 = vld [vmem:[#allocation8 + $0x1a0] sm:$0xff]
    %v910 = vld [vmem:[#allocation8 + $0x1a8] sm:$0xff]
    %v911 = vld [vmem:[#allocation8 + $0x1b0] sm:$0xff]
    %v912 = vld [vmem:[#allocation8 + $0x1b8] sm:$0xff]
    %v913 = vld [vmem:[#allocation8 + $0x1c0] sm:$0xff]
    %v914 = vld [vmem:[#allocation8 + $0x1c8] sm:$0xff]
    %v915 = vld [vmem:[#allocation8 + $0x1d0] sm:$0xff]
    %v916 = vld [vmem:[#allocation8 + $0x1d8] sm:$0xff]
    %v917 = vld [vmem:[#allocation8 + $0x1e0] sm:$0xff]
    %v918 = vld [vmem:[#allocation8 + $0x1e8] sm:$0xff]
    %v919 = vld [vmem:[#allocation8 + $0x1f0] sm:$0xff]
    %v920 = vld [vmem:[#allocation8 + $0x1f8] sm:$0xff]
    %s921 = scalar_lea.vmem %s4, 4
    %v922 = vld [vmem:[%s921] sm:$0xf]
    %v924 = vlaneseq
    %v925 = vshrl.u32 %v924, 7
    %v926 = vsub.s32 0, %v925
    %v927 = vrot.slane %v922, %v926
    %v928 = vlaneseq
    %v929 = vshrl.u32 %v928, 7
    %v930 = vsub.s32 1, %v929
    %v931 = vrot.slane %v922, %v930
    %v932 = vlaneseq
    %v933 = vshrl.u32 %v932, 7
    %v934 = vsub.s32 2, %v933
    %v935 = vrot.slane %v922, %v934
    %v936 = vlaneseq
    %v937 = vshrl.u32 %v936, 7
    %v938 = vsub.s32 3, %v937
    %v939 = vrot.slane %v922, %v938
    %v1008 = vunpack.c.l.b16 %v857
    %v1009 = vunpack.c.h.b16 %v857
    %v1010 = vunpack.c.l.b16 %v858
    %v1011 = vunpack.c.h.b16 %v858
    %v1012 = vunpack.c.l.b16 %v859
    %v1013 = vunpack.c.h.b16 %v859
    %v1014 = vunpack.c.l.b16 %v860
    %v1015 = vunpack.c.h.b16 %v860
    %v1016 = vunpack.c.l.b16 %v861
    %v1017 = vunpack.c.h.b16 %v861
    %v1018 = vunpack.c.l.b16 %v862
    %v1019 = vunpack.c.h.b16 %v862
    %v1020 = vunpack.c.l.b16 %v863
    %v1021 = vunpack.c.h.b16 %v863
    %v1022 = vunpack.c.l.b16 %v864
    %v1023 = vunpack.c.h.b16 %v864
    %v1024 = vunpack.c.l.b16 %v865
    %v1025 = vunpack.c.h.b16 %v865
    %v1026 = vunpack.c.l.b16 %v866
    %v1027 = vunpack.c.h.b16 %v866
    %v1028 = vunpack.c.l.b16 %v867
    %v1029 = vunpack.c.h.b16 %v867
    %v1030 = vunpack.c.l.b16 %v868
    %v1031 = vunpack.c.h.b16 %v868
    %v1032 = vunpack.c.l.b16 %v869
    %v1033 = vunpack.c.h.b16 %v869
    %v1034 = vunpack.c.l.b16 %v870
    %v1035 = vunpack.c.h.b16 %v870
    %v1036 = vunpack.c.l.b16 %v871
    %v1037 = vunpack.c.h.b16 %v871
    %v1038 = vunpack.c.l.b16 %v872
    %v1039 = vunpack.c.h.b16 %v872
    %v1040 = vunpack.c.l.b16 %v873
    %v1041 = vunpack.c.h.b16 %v873
    %v1042 = vunpack.c.l.b16 %v874
    %v1043 = vunpack.c.h.b16 %v874
    %v1044 = vunpack.c.l.b16 %v875
    %v1045 = vunpack.c.h.b16 %v875
    %v1046 = vunpack.c.l.b16 %v876
    %v1047 = vunpack.c.h.b16 %v876
    %v1048 = vunpack.c.l.b16 %v877
    %v1049 = vunpack.c.h.b16 %v877
    %v1050 = vunpack.c.l.b16 %v878
    %v1051 = vunpack.c.h.b16 %v878
    %v1052 = vunpack.c.l.b16 %v879
    %v1053 = vunpack.c.h.b16 %v879
    %v1054 = vunpack.c.l.b16 %v880
    %v1055 = vunpack.c.h.b16 %v880
    %v1056 = vunpack.c.l.b16 %v881
    %v1057 = vunpack.c.h.b16 %v881
    %v1058 = vunpack.c.l.b16 %v882
    %v1059 = vunpack.c.h.b16 %v882
    %v1060 = vunpack.c.l.b16 %v883
    %v1061 = vunpack.c.h.b16 %v883
    %v1062 = vunpack.c.l.b16 %v884
    %v1063 = vunpack.c.h.b16 %v884
    %v1064 = vunpack.c.l.b16 %v885
    %v1065 = vunpack.c.h.b16 %v885
    %v1066 = vunpack.c.l.b16 %v886
    %v1067 = vunpack.c.h.b16 %v886
    %v1068 = vunpack.c.l.b16 %v887
    %v1069 = vunpack.c.h.b16 %v887
    %v1070 = vunpack.c.l.b16 %v888
    %v1071 = vunpack.c.h.b16 %v888
    %v1072 = vunpack.c.l.b16 %v889
    %v1073 = vunpack.c.h.b16 %v889
    %v1074 = vunpack.c.l.b16 %v890
    %v1075 = vunpack.c.h.b16 %v890
    %v1076 = vunpack.c.l.b16 %v891
    %v1077 = vunpack.c.h.b16 %v891
    %v1078 = vunpack.c.l.b16 %v892
    %v1079 = vunpack.c.h.b16 %v892
    %v1080 = vunpack.c.l.b16 %v893
    %v1081 = vunpack.c.h.b16 %v893
    %v1082 = vunpack.c.l.b16 %v894
    %v1083 = vunpack.c.h.b16 %v894
    %v1084 = vunpack.c.l.b16 %v895
    %v1085 = vunpack.c.h.b16 %v895
    %v1086 = vunpack.c.l.b16 %v896
    %v1087 = vunpack.c.h.b16 %v896
    %v1088 = vunpack.c.l.b16 %v897
    %v1089 = vunpack.c.h.b16 %v897
    %v1090 = vunpack.c.l.b16 %v898
    %v1091 = vunpack.c.h.b16 %v898
    %v1092 = vunpack.c.l.b16 %v899
    %v1093 = vunpack.c.h.b16 %v899
    %v1094 = vunpack.c.l.b16 %v900
    %v1095 = vunpack.c.h.b16 %v900
    %v1096 = vunpack.c.l.b16 %v901
    %v1097 = vunpack.c.h.b16 %v901
    %v1098 = vunpack.c.l.b16 %v902
    %v1099 = vunpack.c.h.b16 %v902
    %v1100 = vunpack.c.l.b16 %v903
    %v1101 = vunpack.c.h.b16 %v903
    %v1102 = vunpack.c.l.b16 %v904
    %v1103 = vunpack.c.h.b16 %v904
    %v1104 = vunpack.c.l.b16 %v905
    %v1105 = vunpack.c.h.b16 %v905
    %v1106 = vunpack.c.l.b16 %v906
    %v1107 = vunpack.c.h.b16 %v906
    %v1108 = vunpack.c.l.b16 %v907
    %v1109 = vunpack.c.h.b16 %v907
    %v1110 = vunpack.c.l.b16 %v908
    %v1111 = vunpack.c.h.b16 %v908
    %v1112 = vunpack.c.l.b16 %v909
    %v1113 = vunpack.c.h.b16 %v909
    %v1114 = vunpack.c.l.b16 %v910
    %v1115 = vunpack.c.h.b16 %v910
    %v1116 = vunpack.c.l.b16 %v911
    %v1117 = vunpack.c.h.b16 %v911
    %v1118 = vunpack.c.l.b16 %v912
    %v1119 = vunpack.c.h.b16 %v912
    %v1120 = vunpack.c.l.b16 %v913
    %v1121 = vunpack.c.h.b16 %v913
    %v1122 = vunpack.c.l.b16 %v914
    %v1123 = vunpack.c.h.b16 %v914
    %v1124 = vunpack.c.l.b16 %v915
    %v1125 = vunpack.c.h.b16 %v915
    %v1126 = vunpack.c.l.b16 %v916
    %v1127 = vunpack.c.h.b16 %v916
    %v1128 = vunpack.c.l.b16 %v917
    %v1129 = vunpack.c.h.b16 %v917
    %v1130 = vunpack.c.l.b16 %v918
    %v1131 = vunpack.c.h.b16 %v918
    %v1132 = vunpack.c.l.b16 %v919
    %v1133 = vunpack.c.h.b16 %v919
    %v1134 = vunpack.c.l.b16 %v920
    %v1135 = vunpack.c.h.b16 %v920
    %v1136 = vpack.c.b16 %v1012, %v1008
    %v1137 = vpack.c.b16 %v1013, %v1009
    %v1138 = vpack.c.b16 %v1014, %v1010
    %v1139 = vpack.c.b16 %v1015, %v1011
    %v1140 = vpack.c.b16 %v1020, %v1016
    %v1141 = vpack.c.b16 %v1021, %v1017
    %v1142 = vpack.c.b16 %v1022, %v1018
    %v1143 = vpack.c.b16 %v1023, %v1019
    %v1144 = vpack.c.b16 %v1028, %v1024
    %v1145 = vpack.c.b16 %v1029, %v1025
    %v1146 = vpack.c.b16 %v1030, %v1026
    %v1147 = vpack.c.b16 %v1031, %v1027
    %v1148 = vpack.c.b16 %v1036, %v1032
    %v1149 = vpack.c.b16 %v1037, %v1033
    %v1150 = vpack.c.b16 %v1038, %v1034
    %v1151 = vpack.c.b16 %v1039, %v1035
    %v1152 = vpack.c.b16 %v1044, %v1040
    %v1153 = vpack.c.b16 %v1045, %v1041
    %v1154 = vpack.c.b16 %v1046, %v1042
    %v1155 = vpack.c.b16 %v1047, %v1043
    %v1156 = vpack.c.b16 %v1052, %v1048
    %v1157 = vpack.c.b16 %v1053, %v1049
    %v1158 = vpack.c.b16 %v1054, %v1050
    %v1159 = vpack.c.b16 %v1055, %v1051
    %v1160 = vpack.c.b16 %v1060, %v1056
    %v1161 = vpack.c.b16 %v1061, %v1057
    %v1162 = vpack.c.b16 %v1062, %v1058
    %v1163 = vpack.c.b16 %v1063, %v1059
    %v1164 = vpack.c.b16 %v1068, %v1064
    %v1165 = vpack.c.b16 %v1069, %v1065
    %v1166 = vpack.c.b16 %v1070, %v1066
    %v1167 = vpack.c.b16 %v1071, %v1067
    %v1168 = vpack.c.b16 %v1076, %v1072
    %v1169 = vpack.c.b16 %v1077, %v1073
    %v1170 = vpack.c.b16 %v1078, %v1074
    %v1171 = vpack.c.b16 %v1079, %v1075
    %v1172 = vpack.c.b16 %v1084, %v1080
    %v1173 = vpack.c.b16 %v1085, %v1081
    %v1174 = vpack.c.b16 %v1086, %v1082
    %v1175 = vpack.c.b16 %v1087, %v1083
    %v1176 = vpack.c.b16 %v1092, %v1088
    %v1177 = vpack.c.b16 %v1093, %v1089
    %v1178 = vpack.c.b16 %v1094, %v1090
    %v1179 = vpack.c.b16 %v1095, %v1091
    %v1180 = vpack.c.b16 %v1100, %v1096
    %v1181 = vpack.c.b16 %v1101, %v1097
    %v1182 = vpack.c.b16 %v1102, %v1098
    %v1183 = vpack.c.b16 %v1103, %v1099
    %v1184 = vpack.c.b16 %v1108, %v1104
    %v1185 = vpack.c.b16 %v1109, %v1105
    %v1186 = vpack.c.b16 %v1110, %v1106
    %v1187 = vpack.c.b16 %v1111, %v1107
    %v1188 = vpack.c.b16 %v1116, %v1112
    %v1189 = vpack.c.b16 %v1117, %v1113
    %v1190 = vpack.c.b16 %v1118, %v1114
    %v1191 = vpack.c.b16 %v1119, %v1115
    %v1192 = vpack.c.b16 %v1124, %v1120
    %v1193 = vpack.c.b16 %v1125, %v1121
    %v1194 = vpack.c.b16 %v1126, %v1122
    %v1195 = vpack.c.b16 %v1127, %v1123
    %v1196 = vpack.c.b16 %v1132, %v1128
    %v1197 = vpack.c.b16 %v1133, %v1129
    %v1198 = vpack.c.b16 %v1134, %v1130
    %v1199 = vpack.c.b16 %v1135, %v1131
    %1264 = vmatprep.subr.bf16.mxu0 %v1137
    %1265 = vmatpush1.bf16.msra.mxu0 %v1136
    %1266 = vmatprep.subr.bf16.mxu0 %v1141
    %1267 = vmatpush1.bf16.msra.mxu0 %v1140
    %1268 = vmatprep.subr.bf16.mxu0 %v1145
    %1269 = vmatpush1.bf16.msra.mxu0 %v1144
    %1270 = vmatprep.subr.bf16.mxu0 %v1149
    %1271 = vmatpush1.bf16.msra.mxu0 %v1148
    %1272 = vmatprep.subr.bf16.mxu0 %v1153
    %1273 = vmatpush1.bf16.msra.mxu0 %v1152
    %1274 = vmatprep.subr.bf16.mxu0 %v1157
    %1275 = vmatpush1.bf16.msra.mxu0 %v1156
    %1276 = vmatprep.subr.bf16.mxu0 %v1161
    %1277 = vmatpush1.bf16.msra.mxu0 %v1160
    %1278 = vmatprep.subr.bf16.mxu0 %v1165
    %1279 = vmatpush1.bf16.msra.mxu0 %v1164
    %1280 = vmatprep.subr.bf16.mxu0 %v1169
    %1281 = vmatpush1.bf16.msra.mxu0 %v1168
    %1282 = vmatprep.subr.bf16.mxu0 %v1173
    %1283 = vmatpush1.bf16.msra.mxu0 %v1172
    %1284 = vmatprep.subr.bf16.mxu0 %v1177
    %1285 = vmatpush1.bf16.msra.mxu0 %v1176
    %1286 = vmatprep.subr.bf16.mxu0 %v1181
    %1287 = vmatpush1.bf16.msra.mxu0 %v1180
    %1288 = vmatprep.subr.bf16.mxu0 %v1185
    %1289 = vmatpush1.bf16.msra.mxu0 %v1184
    %1290 = vmatprep.subr.bf16.mxu0 %v1189
    %1291 = vmatpush1.bf16.msra.mxu0 %v1188
    %1292 = vmatprep.subr.bf16.mxu0 %v1193
    %1293 = vmatpush1.bf16.msra.mxu0 %v1192
    %1294 = vmatprep.subr.bf16.mxu0 %v1197
    %1295 = vmatpush1.bf16.msra.mxu0 %v1196
    %1296 = vmatprep.mubr.bf16.mxu0 %v856
    %1297 = vmatmul.mubr.bf16.gmra.mrb[0].mxu0 %v745
    %v1298 = vpop.f32.mrb[0].mxu0
    %v1299 = vadd.f32 %v927, %v1298
    %v1300 = vpop.f32.mrb[0].mxu0
    %v1301 = vadd.f32 %v931, %v1300
    %v1302 = vpop.f32.mrb[0].mxu0
    %v1303 = vpop.f32.mrb[0].mxu0
    %1304 = vdwg.mxu0
    %1305 = vmatprep.subr.bf16.mxu0 %v1139
    %1306 = vmatpush1.bf16.msra.mxu0 %v1138
    %1307 = vmatprep.subr.bf16.mxu0 %v1143
    %1308 = vmatpush1.bf16.msra.mxu0 %v1142
    %1309 = vmatprep.subr.bf16.mxu0 %v1147
    %1310 = vmatpush1.bf16.msra.mxu0 %v1146
    %1311 = vmatprep.subr.bf16.mxu0 %v1151
    %1312 = vmatpush1.bf16.msra.mxu0 %v1150
    %1313 = vmatprep.subr.bf16.mxu0 %v1155
    %1314 = vmatpush1.bf16.msra.mxu0 %v1154
    %1315 = vmatprep.subr.bf16.mxu0 %v1159
    %1316 = vmatpush1.bf16.msra.mxu0 %v1158
    %1317 = vmatprep.subr.bf16.mxu0 %v1163
    %1318 = vmatpush1.bf16.msra.mxu0 %v1162
    %1319 = vmatprep.subr.bf16.mxu0 %v1167
    %1320 = vmatpush1.bf16.msra.mxu0 %v1166
    %1321 = vmatprep.subr.bf16.mxu0 %v1171
    %1322 = vmatpush1.bf16.msra.mxu0 %v1170
    %1323 = vmatprep.subr.bf16.mxu0 %v1175
    %1324 = vmatpush1.bf16.msra.mxu0 %v1174
    %1325 = vmatprep.subr.bf16.mxu0 %v1179
    %1326 = vmatpush1.bf16.msra.mxu0 %v1178
    %1327 = vmatprep.subr.bf16.mxu0 %v1183
    %1328 = vmatpush1.bf16.msra.mxu0 %v1182
    %1329 = vmatprep.subr.bf16.mxu0 %v1187
    %1330 = vmatpush1.bf16.msra.mxu0 %v1186
    %1331 = vmatprep.subr.bf16.mxu0 %v1191
    %1332 = vmatpush1.bf16.msra.mxu0 %v1190
    %1333 = vmatprep.subr.bf16.mxu0 %v1195
    %1334 = vmatpush1.bf16.msra.mxu0 %v1194
    %1335 = vmatprep.subr.bf16.mxu0 %v1199
    %1336 = vmatpush1.bf16.msra.mxu0 %v1198
    %1337 = vmatprep.mubr.bf16.mxu0 %v856
    %1338 = vmatmul.mubr.bf16.gmra.mrb[0].mxu0 %v745
    %v1339 = vpop.f32.mrb[0].mxu0
    %v1340 = vadd.f32 %v935, %v1339
    %v1341 = vpop.f32.mrb[0].mxu0
    %v1342 = vadd.f32 %v939, %v1341
    %v1343 = vpop.f32.mrb[0].mxu0
    %v1344 = vpop.f32.mrb[0].mxu0
    %1345 = vdwg.mxu0
    %v1346 = vxor.u32 %v1299, 2147483648
    %v1347 = vmul.f32 %v1346, 1.442695
    %v1348 = vpow.pop %v1347
    %v1349 = vadd.f32 %v1348, 1.0
    %v1350 = vrcp.pop %v1349
    %v1351 = vmul.f32 1.0, %v1350
    %v1352 = vxor.u32 %v1301, 2147483648
    %v1353 = vmul.f32 %v1352, 1.442695
    %v1354 = vpow.pop %v1353
    %v1355 = vadd.f32 %v1354, 1.0
    %v1356 = vrcp.pop %v1355
    %v1357 = vmul.f32 1.0, %v1356
    %v1358 = vtanh.pop %v1340
    %v1359 = vxor.u32 %v1342, 2147483648
    %v1360 = vmul.f32 %v1359, 1.442695
    %v1361 = vpow.pop %v1360
    %v1362 = vadd.f32 %v1361, 1.0
    %v1363 = vrcp.pop %v1362
    %v1364 = vmul.f32 1.0, %v1363
    %v1365 = vmul.f32 %v1357, 0.0
    %v1366 = vmul.f32 %v1351, %v1358
    %v1367 = vadd.f32 %v1365, %v1366
    %v1368 = vtanh.pop %v1367
    %v1369 = vmul.f32 %v1364, %v1368
    %s1370 = scalar_lea.vmem [#allocation2], 64
    %v1371 = vld [vmem:[%s1370] sm:$0xff]
    %v1372 = vld [vmem:[%s1370 + $0x8] sm:$0xff]
    %v1373 = vld [vmem:[%s1370 + $0x10] sm:$0xff]
    %v1374 = vld [vmem:[%s1370 + $0x18] sm:$0xff]
    %v1375 = vpack.c.bf16 %v855, %v855
    %1376 = vmatprep.subr.bf16.mxu0 %v567
    %1377 = vmatpush1.bf16.msra.mxu0 %v566
    %1378 = vmatprep.subr.bf16.mxu0 %v571
    %1379 = vmatpush1.bf16.msra.mxu0 %v570
    %1380 = vmatprep.subr.bf16.mxu0 %v575
    %1381 = vmatpush1.bf16.msra.mxu0 %v574
    %1382 = vmatprep.subr.bf16.mxu0 %v579
    %1383 = vmatpush1.bf16.msra.mxu0 %v578
    %1384 = vmatprep.subr.bf16.mxu0 %v583
    %1385 = vmatpush1.bf16.msra.mxu0 %v582
    %1386 = vmatprep.subr.bf16.mxu0 %v587
    %1387 = vmatpush1.bf16.msra.mxu0 %v586
    %1388 = vmatprep.subr.bf16.mxu0 %v591
    %1389 = vmatpush1.bf16.msra.mxu0 %v590
    %1390 = vmatprep.subr.bf16.mxu0 %v595
    %1391 = vmatpush1.bf16.msra.mxu0 %v594
    %1392 = vmatprep.subr.bf16.mxu0 0
    %1393 = vmatpush1.bf16.msra.mxu0 0
    %1394 = vmatprep.subr.bf16.mxu0 0
    %1395 = vmatpush1.bf16.msra.mxu0 0
    %1396 = vmatprep.subr.bf16.mxu0 0
    %1397 = vmatpush1.bf16.msra.mxu0 0
    %1398 = vmatprep.subr.bf16.mxu0 0
    %1399 = vmatpush1.bf16.msra.mxu0 0
    %1400 = vmatprep.subr.bf16.mxu0 0
    %1401 = vmatpush1.bf16.msra.mxu0 0
    %1402 = vmatprep.subr.bf16.mxu0 0
    %1403 = vmatpush1.bf16.msra.mxu0 0
    %1404 = vmatprep.subr.bf16.mxu0 0
    %1405 = vmatpush1.bf16.msra.mxu0 0
    %1406 = vmatprep.subr.bf16.mxu0 0
    %1407 = vmatpush1.bf16.msra.mxu0 0
    %1408 = vmatprep.mubr.bf16.mxu0 0
    %1409 = vmatmul.mubr.bf16.gmra.mrb[0].mxu0 %v1375
    %v1410 = vpop.f32.mrb[0].mxu0
    %v1411 = vadd.f32 0.0, %v1410
    %v1412 = vpop.f32.mrb[0].mxu0
    %v1413 = vadd.f32 0.0, %v1412
    %v1414 = vpop.f32.mrb[0].mxu0
    %v1415 = vpop.f32.mrb[0].mxu0
    %1416 = vdwg.mxu0
    %1417 = vmatprep.subr.bf16.mxu0 %v569
    %1418 = vmatpush1.bf16.msra.mxu0 %v568
    %1419 = vmatprep.subr.bf16.mxu0 %v573
    %1420 = vmatpush1.bf16.msra.mxu0 %v572
    %1421 = vmatprep.subr.bf16.mxu0 %v577
    %1422 = vmatpush1.bf16.msra.mxu0 %v576
    %1423 = vmatprep.subr.bf16.mxu0 %v581
    %1424 = vmatpush1.bf16.msra.mxu0 %v580
    %1425 = vmatprep.subr.bf16.mxu0 %v585
    %1426 = vmatpush1.bf16.msra.mxu0 %v584
    %1427 = vmatprep.subr.bf16.mxu0 %v589
    %1428 = vmatpush1.bf16.msra.mxu0 %v588
    %1429 = vmatprep.subr.bf16.mxu0 %v593
    %1430 = vmatpush1.bf16.msra.mxu0 %v592
    %1431 = vmatprep.subr.bf16.mxu0 %v597
    %1432 = vmatpush1.bf16.msra.mxu0 %v596
    %1433 = vmatprep.subr.bf16.mxu0 0
    %1434 = vmatpush1.bf16.msra.mxu0 0
    %1435 = vmatprep.subr.bf16.mxu0 0
    %1436 = vmatpush1.bf16.msra.mxu0 0
    %1437 = vmatprep.subr.bf16.mxu0 0
    %1438 = vmatpush1.bf16.msra.mxu0 0
    %1439 = vmatprep.subr.bf16.mxu0 0
    %1440 = vmatpush1.bf16.msra.mxu0 0
    %1441 = vmatprep.subr.bf16.mxu0 0
    %1442 = vmatpush1.bf16.msra.mxu0 0
    %1443 = vmatprep.subr.bf16.mxu0 0
    %1444 = vmatpush1.bf16.msra.mxu0 0
    %1445 = vmatprep.subr.bf16.mxu0 0
    %1446 = vmatpush1.bf16.msra.mxu0 0
    %1447 = vmatprep.subr.bf16.mxu0 0
    %1448 = vmatpush1.bf16.msra.mxu0 0
    %1449 = vmatprep.mubr.bf16.mxu0 0
    %1450 = vmatmul.mubr.bf16.gmra.mrb[0].mxu0 %v1375
    %v1451 = vpop.f32.mrb[0].mxu0
    %v1452 = vadd.f32 0.0, %v1451
    %v1453 = vpop.f32.mrb[0].mxu0
    %v1454 = vadd.f32 0.0, %v1453
    %v1455 = vpop.f32.mrb[0].mxu0
    %v1456 = vpop.f32.mrb[0].mxu0
    %1457 = vdwg.mxu0
    %v1458 = vadd.f32 %v1371, %v1411
    %v1459 = vadd.f32 %v1372, %v1413
    %v1460 = vadd.f32 %v1373, %v1452
    %v1461 = vadd.f32 %v1374, %v1454
    %v1462 = vxor.u32 %v1458, 2147483648
    %v1463 = vmul.f32 %v1462, 1.442695
    %v1464 = vpow.pop %v1463
    %v1465 = vadd.f32 %v1464, 1.0
    %v1466 = vrcp.pop %v1465
    %v1467 = vmul.f32 1.0, %v1466
    %v1468 = vxor.u32 %v1459, 2147483648
    %v1469 = vmul.f32 %v1468, 1.442695
    %v1470 = vpow.pop %v1469
    %v1471 = vadd.f32 %v1470, 1.0
    %v1472 = vrcp.pop %v1471
    %v1473 = vmul.f32 1.0, %v1472
    %v1474 = vtanh.pop %v1460
    %v1475 = vxor.u32 %v1461, 2147483648
    %v1476 = vmul.f32 %v1475, 1.442695
    %v1477 = vpow.pop %v1476
    %v1478 = vadd.f32 %v1477, 1.0
    %v1479 = vrcp.pop %v1478
    %v1480 = vmul.f32 1.0, %v1479
    %v1481 = vmul.f32 %v1473, %v853
    %v1482 = vmul.f32 %v1467, %v1474
    %v1483 = vadd.f32 %v1481, %v1482
    %v1484 = vtanh.pop %v1483
    %v1485 = vmul.f32 %v1480, %v1484
    %v1486 = vpack.c.bf16 %v1369, %v1369
    %1487 = vmatprep.subr.bf16.mxu0 %v1137
    %1488 = vmatpush1.bf16.msra.mxu0 %v1136
    %1489 = vmatprep.subr.bf16.mxu0 %v1141
    %1490 = vmatpush1.bf16.msra.mxu0 %v1140
    %1491 = vmatprep.subr.bf16.mxu0 %v1145
    %1492 = vmatpush1.bf16.msra.mxu0 %v1144
    %1493 = vmatprep.subr.bf16.mxu0 %v1149
    %1494 = vmatpush1.bf16.msra.mxu0 %v1148
    %1495 = vmatprep.subr.bf16.mxu0 %v1153
    %1496 = vmatpush1.bf16.msra.mxu0 %v1152
    %1497 = vmatprep.subr.bf16.mxu0 %v1157
    %1498 = vmatpush1.bf16.msra.mxu0 %v1156
    %1499 = vmatprep.subr.bf16.mxu0 %v1161
    %1500 = vmatpush1.bf16.msra.mxu0 %v1160
    %1501 = vmatprep.subr.bf16.mxu0 %v1165
    %1502 = vmatpush1.bf16.msra.mxu0 %v1164
    %1503 = vmatprep.subr.bf16.mxu0 %v1169
    %1504 = vmatpush1.bf16.msra.mxu0 %v1168
    %1505 = vmatprep.subr.bf16.mxu0 %v1173
    %1506 = vmatpush1.bf16.msra.mxu0 %v1172
    %1507 = vmatprep.subr.bf16.mxu0 %v1177
    %1508 = vmatpush1.bf16.msra.mxu0 %v1176
    %1509 = vmatprep.subr.bf16.mxu0 %v1181
    %1510 = vmatpush1.bf16.msra.mxu0 %v1180
    %1511 = vmatprep.subr.bf16.mxu0 %v1185
    %1512 = vmatpush1.bf16.msra.mxu0 %v1184
    %1513 = vmatprep.subr.bf16.mxu0 %v1189
    %1514 = vmatpush1.bf16.msra.mxu0 %v1188
    %1515 = vmatprep.subr.bf16.mxu0 %v1193
    %1516 = vmatpush1.bf16.msra.mxu0 %v1192
    %1517 = vmatprep.subr.bf16.mxu0 %v1197
    %1518 = vmatpush1.bf16.msra.mxu0 %v1196
    %1519 = vmatprep.mubr.bf16.mxu0 %v1486
    %1520 = vmatmul.mubr.bf16.gmra.mrb[0].mxu0 %v1375
    %v1521 = vpop.f32.mrb[0].mxu0
    %v1522 = vadd.f32 %v927, %v1521
    %v1523 = vpop.f32.mrb[0].mxu0
    %v1524 = vadd.f32 %v931, %v1523
    %v1525 = vpop.f32.mrb[0].mxu0
    %v1526 = vpop.f32.mrb[0].mxu0
    %1527 = vdwg.mxu0
    %1528 = vmatprep.subr.bf16.mxu0 %v1139
    %1529 = vmatpush1.bf16.msra.mxu0 %v1138
    %1530 = vmatprep.subr.bf16.mxu0 %v1143
    %1531 = vmatpush1.bf16.msra.mxu0 %v1142
    %1532 = vmatprep.subr.bf16.mxu0 %v1147
    %1533 = vmatpush1.bf16.msra.mxu0 %v1146
    %1534 = vmatprep.subr.bf16.mxu0 %v1151
    %1535 = vmatpush1.bf16.msra.mxu0 %v1150
    %1536 = vmatprep.subr.bf16.mxu0 %v1155
    %1537 = vmatpush1.bf16.msra.mxu0 %v1154
    %1538 = vmatprep.subr.bf16.mxu0 %v1159
    %1539 = vmatpush1.bf16.msra.mxu0 %v1158
    %1540 = vmatprep.subr.bf16.mxu0 %v1163
    %1541 = vmatpush1.bf16.msra.mxu0 %v1162
    %1542 = vmatprep.subr.bf16.mxu0 %v1167
    %1543 = vmatpush1.bf16.msra.mxu0 %v1166
    %1544 = vmatprep.subr.bf16.mxu0 %v1171
    %1545 = vmatpush1.bf16.msra.mxu0 %v1170
    %1546 = vmatprep.subr.bf16.mxu0 %v1175
    %1547 = vmatpush1.bf16.msra.mxu0 %v1174
    %1548 = vmatprep.subr.bf16.mxu0 %v1179
    %1549 = vmatpush1.bf16.msra.mxu0 %v1178
    %1550 = vmatprep.subr.bf16.mxu0 %v1183
    %1551 = vmatpush1.bf16.msra.mxu0 %v1182
    %1552 = vmatprep.subr.bf16.mxu0 %v1187
    %1553 = vmatpush1.bf16.msra.mxu0 %v1186
    %1554 = vmatprep.subr.bf16.mxu0 %v1191
    %1555 = vmatpush1.bf16.msra.mxu0 %v1190
    %1556 = vmatprep.subr.bf16.mxu0 %v1195
    %1557 = vmatpush1.bf16.msra.mxu0 %v1194
    %1558 = vmatprep.subr.bf16.mxu0 %v1199
    %1559 = vmatpush1.bf16.msra.mxu0 %v1198
    %1560 = vmatprep.mubr.bf16.mxu0 %v1486
    %1561 = vmatmul.mubr.bf16.gmra.mrb[0].mxu0 %v1375
    %v1562 = vpop.f32.mrb[0].mxu0
    %v1563 = vadd.f32 %v935, %v1562
    %v1564 = vpop.f32.mrb[0].mxu0
    %v1565 = vadd.f32 %v939, %v1564
    %v1566 = vpop.f32.mrb[0].mxu0
    %v1567 = vpop.f32.mrb[0].mxu0
    %1568 = vdwg.mxu0
    %v1569 = vxor.u32 %v1522, 2147483648
    %v1570 = vmul.f32 %v1569, 1.442695
    %v1571 = vpow.pop %v1570
    %v1572 = vadd.f32 %v1571, 1.0
    %v1573 = vrcp.pop %v1572
    %v1574 = vmul.f32 1.0, %v1573
    %v1575 = vxor.u32 %v1524, 2147483648
    %v1576 = vmul.f32 %v1575, 1.442695
    %v1577 = vpow.pop %v1576
    %v1578 = vadd.f32 %v1577, 1.0
    %v1579 = vrcp.pop %v1578
    %v1580 = vmul.f32 1.0, %v1579
    %v1581 = vtanh.pop %v1563
    %v1582 = vxor.u32 %v1565, 2147483648
    %v1583 = vmul.f32 %v1582, 1.442695
    %v1584 = vpow.pop %v1583
    %v1585 = vadd.f32 %v1584, 1.0
    %v1586 = vrcp.pop %v1585
    %v1587 = vmul.f32 1.0, %v1586
    %v1588 = vmul.f32 %v1580, %v1367
    %v1589 = vmul.f32 %v1574, %v1581
    %v1590 = vadd.f32 %v1588, %v1589
    %v1591 = vtanh.pop %v1590
    %v1592 = vmul.f32 %v1587, %v1591
    %s1593 = scalar_lea.vmem [#allocation8], 512
    %v1594 = vld [vmem:[%s1593] sm:$0xff]
    %v1595 = vld [vmem:[%s1593 + $0x8] sm:$0xff]
    %v1596 = vld [vmem:[%s1593 + $0x10] sm:$0xff]
    %v1597 = vld [vmem:[%s1593 + $0x18] sm:$0xff]
    %v1598 = vld [vmem:[%s1593 + $0x20] sm:$0xff]
    %v1599 = vld [vmem:[%s1593 + $0x28] sm:$0xff]
    %v1600 = vld [vmem:[%s1593 + $0x30] sm:$0xff]
    %v1601 = vld [vmem:[%s1593 + $0x38] sm:$0xff]
    %v1602 = vld [vmem:[%s1593 + $0x40] sm:$0xff]
    %v1603 = vld [vmem:[%s1593 + $0x48] sm:$0xff]
    %v1604 = vld [vmem:[%s1593 + $0x50] sm:$0xff]
    %v1605 = vld [vmem:[%s1593 + $0x58] sm:$0xff]
    %v1606 = vld [vmem:[%s1593 + $0x60] sm:$0xff]
    %v1607 = vld [vmem:[%s1593 + $0x68] sm:$0xff]
    %v1608 = vld [vmem:[%s1593 + $0x70] sm:$0xff]
    %v1609 = vld [vmem:[%s1593 + $0x78] sm:$0xff]
    %v1610 = vld [vmem:[%s1593 + $0x80] sm:$0xff]
    %v1611 = vld [vmem:[%s1593 + $0x88] sm:$0xff]
    %v1612 = vld [vmem:[%s1593 + $0x90] sm:$0xff]
    %v1613 = vld [vmem:[%s1593 + $0x98] sm:$0xff]
    %v1614 = vld [vmem:[%s1593 + $0xa0] sm:$0xff]
    %v1615 = vld [vmem:[%s1593 + $0xa8] sm:$0xff]
    %v1616 = vld [vmem:[%s1593 + $0xb0] sm:$0xff]
    %v1617 = vld [vmem:[%s1593 + $0xb8] sm:$0xff]
    %v1618 = vld [vmem:[%s1593 + $0xc0] sm:$0xff]
    %v1619 = vld [vmem:[%s1593 + $0xc8] sm:$0xff]
    %v1620 = vld [vmem:[%s1593 + $0xd0] sm:$0xff]
    %v1621 = vld [vmem:[%s1593 + $0xd8] sm:$0xff]
    %v1622 = vld [vmem:[%s1593 + $0xe0] sm:$0xff]
    %v1623 = vld [vmem:[%s1593 + $0xe8] sm:$0xff]
    %v1624 = vld [vmem:[%s1593 + $0xf0] sm:$0xff]
    %v1625 = vld [vmem:[%s1593 + $0xf8] sm:$0xff]
    %v1626 = vld [vmem:[%s1593 + $0x100] sm:$0xff]
    %v1627 = vld [vmem:[%s1593 + $0x108] sm:$0xff]
    %v1628 = vld [vmem:[%s1593 + $0x110] sm:$0xff]
    %v1629 = vld [vmem:[%s1593 + $0x118] sm:$0xff]
    %v1630 = vld [vmem:[%s1593 + $0x120] sm:$0xff]
    %v1631 = vld [vmem:[%s1593 + $0x128] sm:$0xff]
    %v1632 = vld [vmem:[%s1593 + $0x130] sm:$0xff]
    %v1633 = vld [vmem:[%s1593 + $0x138] sm:$0xff]
    %v1634 = vld [vmem:[%s1593 + $0x140] sm:$0xff]
    %v1635 = vld [vmem:[%s1593 + $0x148] sm:$0xff]
    %v1636 = vld [vmem:[%s1593 + $0x150] sm:$0xff]
    %v1637 = vld [vmem:[%s1593 + $0x158] sm:$0xff]
    %v1638 = vld [vmem:[%s1593 + $0x160] sm:$0xff]
    %v1639 = vld [vmem:[%s1593 + $0x168] sm:$0xff]
    %v1640 = vld [vmem:[%s1593 + $0x170] sm:$0xff]
    %v1641 = vld [vmem:[%s1593 + $0x178] sm:$0xff]
    %v1642 = vld [vmem:[%s1593 + $0x180] sm:$0xff]
    %v1643 = vld [vmem:[%s1593 + $0x188] sm:$0xff]
    %v1644 = vld [vmem:[%s1593 + $0x190] sm:$0xff]
    %v1645 = vld [vmem:[%s1593 + $0x198] sm:$0xff]
    %v1646 = vld [vmem:[%s1593 + $0x1a0] sm:$0xff]
    %v1647 = vld [vmem:[%s1593 + $0x1a8] sm:$0xff]
    %v1648 = vld [vmem:[%s1593 + $0x1b0] sm:$0xff]
    %v1649 = vld [vmem:[%s1593 + $0x1b8] sm:$0xff]
    %v1650 = vld [vmem:[%s1593 + $0x1c0] sm:$0xff]
    %v1651 = vld [vmem:[%s1593 + $0x1c8] sm:$0xff]
    %v1652 = vld [vmem:[%s1593 + $0x1d0] sm:$0xff]
    %v1653 = vld [vmem:[%s1593 + $0x1d8] sm:$0xff]
    %v1654 = vld [vmem:[%s1593 + $0x1e0] sm:$0xff]
    %v1655 = vld [vmem:[%s1593 + $0x1e8] sm:$0xff]
    %v1656 = vld [vmem:[%s1593 + $0x1f0] sm:$0xff]
    %v1657 = vld [vmem:[%s1593 + $0x1f8] sm:$0xff]
    %s1658 = scalar_lea.vmem %s4, 8
    %v1659 = vld [vmem:[%s1658] sm:$0xf]
    %v1661 = vlaneseq
    %v1662 = vshrl.u32 %v1661, 7
    %v1663 = vsub.s32 0, %v1662
    %v1664 = vrot.slane %v1659, %v1663
    %v1665 = vlaneseq
    %v1666 = vshrl.u32 %v1665, 7
    %v1667 = vsub.s32 1, %v1666
    %v1668 = vrot.slane %v1659, %v1667
    %v1669 = vlaneseq
    %v1670 = vshrl.u32 %v1669, 7
    %v1671 = vsub.s32 2, %v1670
    %v1672 = vrot.slane %v1659, %v1671
    %v1673 = vlaneseq
    %v1674 = vshrl.u32 %v1673, 7
    %v1675 = vsub.s32 3, %v1674
    %v1676 = vrot.slane %v1659, %v1675
    %v1745 = vunpack.c.l.b16 %v1594
    %v1746 = vunpack.c.h.b16 %v1594
    %v1747 = vunpack.c.l.b16 %v1595
    %v1748 = vunpack.c.h.b16 %v1595
    %v1749 = vunpack.c.l.b16 %v1596
    %v1750 = vunpack.c.h.b16 %v1596
    %v1751 = vunpack.c.l.b16 %v1597
    %v1752 = vunpack.c.h.b16 %v1597
    %v1753 = vunpack.c.l.b16 %v1598
    %v1754 = vunpack.c.h.b16 %v1598
    %v1755 = vunpack.c.l.b16 %v1599
    %v1756 = vunpack.c.h.b16 %v1599
    %v1757 = vunpack.c.l.b16 %v1600
    %v1758 = vunpack.c.h.b16 %v1600
    %v1759 = vunpack.c.l.b16 %v1601
    %v1760 = vunpack.c.h.b16 %v1601
    %v1761 = vunpack.c.l.b16 %v1602
    %v1762 = vunpack.c.h.b16 %v1602
    %v1763 = vunpack.c.l.b16 %v1603
    %v1764 = vunpack.c.h.b16 %v1603
    %v1765 = vunpack.c.l.b16 %v1604
    %v1766 = vunpack.c.h.b16 %v1604
    %v1767 = vunpack.c.l.b16 %v1605
    %v1768 = vunpack.c.h.b16 %v1605
    %v1769 = vunpack.c.l.b16 %v1606
    %v1770 = vunpack.c.h.b16 %v1606
    %v1771 = vunpack.c.l.b16 %v1607
    %v1772 = vunpack.c.h.b16 %v1607
    %v1773 = vunpack.c.l.b16 %v1608
    %v1774 = vunpack.c.h.b16 %v1608
    %v1775 = vunpack.c.l.b16 %v1609
    %v1776 = vunpack.c.h.b16 %v1609
    %v1777 = vunpack.c.l.b16 %v1610
    %v1778 = vunpack.c.h.b16 %v1610
    %v1779 = vunpack.c.l.b16 %v1611
    %v1780 = vunpack.c.h.b16 %v1611
    %v1781 = vunpack.c.l.b16 %v1612
    %v1782 = vunpack.c.h.b16 %v1612
    %v1783 = vunpack.c.l.b16 %v1613
    %v1784 = vunpack.c.h.b16 %v1613
    %v1785 = vunpack.c.l.b16 %v1614
    %v1786 = vunpack.c.h.b16 %v1614
    %v1787 = vunpack.c.l.b16 %v1615
    %v1788 = vunpack.c.h.b16 %v1615
    %v1789 = vunpack.c.l.b16 %v1616
    %v1790 = vunpack.c.h.b16 %v1616
    %v1791 = vunpack.c.l.b16 %v1617
    %v1792 = vunpack.c.h.b16 %v1617
    %v1793 = vunpack.c.l.b16 %v1618
    %v1794 = vunpack.c.h.b16 %v1618
    %v1795 = vunpack.c.l.b16 %v1619
    %v1796 = vunpack.c.h.b16 %v1619
    %v1797 = vunpack.c.l.b16 %v1620
    %v1798 = vunpack.c.h.b16 %v1620
    %v1799 = vunpack.c.l.b16 %v1621
    %v1800 = vunpack.c.h.b16 %v1621
    %v1801 = vunpack.c.l.b16 %v1622
    %v1802 = vunpack.c.h.b16 %v1622
    %v1803 = vunpack.c.l.b16 %v1623
    %v1804 = vunpack.c.h.b16 %v1623
    %v1805 = vunpack.c.l.b16 %v1624
    %v1806 = vunpack.c.h.b16 %v1624
    %v1807 = vunpack.c.l.b16 %v1625
    %v1808 = vunpack.c.h.b16 %v1625
    %v1809 = vunpack.c.l.b16 %v1626
    %v1810 = vunpack.c.h.b16 %v1626
    %v1811 = vunpack.c.l.b16 %v1627
    %v1812 = vunpack.c.h.b16 %v1627
    %v1813 = vunpack.c.l.b16 %v1628
    %v1814 = vunpack.c.h.b16 %v1628
    %v1815 = vunpack.c.l.b16 %v1629
    %v1816 = vunpack.c.h.b16 %v1629
    %v1817 = vunpack.c.l.b16 %v1630
    %v1818 = vunpack.c.h.b16 %v1630
    %v1819 = vunpack.c.l.b16 %v1631
    %v1820 = vunpack.c.h.b16 %v1631
    %v1821 = vunpack.c.l.b16 %v1632
    %v1822 = vunpack.c.h.b16 %v1632
    %v1823 = vunpack.c.l.b16 %v1633
    %v1824 = vunpack.c.h.b16 %v1633
    %v1825 = vunpack.c.l.b16 %v1634
    %v1826 = vunpack.c.h.b16 %v1634
    %v1827 = vunpack.c.l.b16 %v1635
    %v1828 = vunpack.c.h.b16 %v1635
    %v1829 = vunpack.c.l.b16 %v1636
    %v1830 = vunpack.c.h.b16 %v1636
    %v1831 = vunpack.c.l.b16 %v1637
    %v1832 = vunpack.c.h.b16 %v1637
    %v1833 = vunpack.c.l.b16 %v1638
    %v1834 = vunpack.c.h.b16 %v1638
    %v1835 = vunpack.c.l.b16 %v1639
    %v1836 = vunpack.c.h.b16 %v1639
    %v1837 = vunpack.c.l.b16 %v1640
    %v1838 = vunpack.c.h.b16 %v1640
    %v1839 = vunpack.c.l.b16 %v1641
    %v1840 = vunpack.c.h.b16 %v1641
    %v1841 = vunpack.c.l.b16 %v1642
    %v1842 = vunpack.c.h.b16 %v1642
    %v1843 = vunpack.c.l.b16 %v1643
    %v1844 = vunpack.c.h.b16 %v1643
    %v1845 = vunpack.c.l.b16 %v1644
    %v1846 = vunpack.c.h.b16 %v1644
    %v1847 = vunpack.c.l.b16 %v1645
    %v1848 = vunpack.c.h.b16 %v1645
    %v1849 = vunpack.c.l.b16 %v1646
    %v1850 = vunpack.c.h.b16 %v1646
    %v1851 = vunpack.c.l.b16 %v1647
    %v1852 = vunpack.c.h.b16 %v1647
    %v1853 = vunpack.c.l.b16 %v1648
    %v1854 = vunpack.c.h.b16 %v1648
    %v1855 = vunpack.c.l.b16 %v1649
    %v1856 = vunpack.c.h.b16 %v1649
    %v1857 = vunpack.c.l.b16 %v1650
    %v1858 = vunpack.c.h.b16 %v1650
    %v1859 = vunpack.c.l.b16 %v1651
    %v1860 = vunpack.c.h.b16 %v1651
    %v1861 = vunpack.c.l.b16 %v1652
    %v1862 = vunpack.c.h.b16 %v1652
    %v1863 = vunpack.c.l.b16 %v1653
    %v1864 = vunpack.c.h.b16 %v1653
    %v1865 = vunpack.c.l.b16 %v1654
    %v1866 = vunpack.c.h.b16 %v1654
    %v1867 = vunpack.c.l.b16 %v1655
    %v1868 = vunpack.c.h.b16 %v1655
    %v1869 = vunpack.c.l.b16 %v1656
    %v1870 = vunpack.c.h.b16 %v1656
    %v1871 = vunpack.c.l.b16 %v1657
    %v1872 = vunpack.c.h.b16 %v1657
    %v1873 = vpack.c.b16 %v1749, %v1745
    %v1874 = vpack.c.b16 %v1750, %v1746
    %v1875 = vpack.c.b16 %v1751, %v1747
    %v1876 = vpack.c.b16 %v1752, %v1748
    %v1877 = vpack.c.b16 %v1757, %v1753
    %v1878 = vpack.c.b16 %v1758, %v1754
    %v1879 = vpack.c.b16 %v1759, %v1755
    %v1880 = vpack.c.b16 %v1760, %v1756
    %v1881 = vpack.c.b16 %v1765, %v1761
    %v1882 = vpack.c.b16 %v1766, %v1762
    %v1883 = vpack.c.b16 %v1767, %v1763
    %v1884 = vpack.c.b16 %v1768, %v1764
    %v1885 = vpack.c.b16 %v1773, %v1769
    %v1886 = vpack.c.b16 %v1774, %v1770
    %v1887 = vpack.c.b16 %v1775, %v1771
    %v1888 = vpack.c.b16 %v1776, %v1772
    %v1889 = vpack.c.b16 %v1781, %v1777
    %v1890 = vpack.c.b16 %v1782, %v1778
    %v1891 = vpack.c.b16 %v1783, %v1779
    %v1892 = vpack.c.b16 %v1784, %v1780
    %v1893 = vpack.c.b16 %v1789, %v1785
    %v1894 = vpack.c.b16 %v1790, %v1786
    %v1895 = vpack.c.b16 %v1791, %v1787
    %v1896 = vpack.c.b16 %v1792, %v1788
    %v1897 = vpack.c.b16 %v1797, %v1793
    %v1898 = vpack.c.b16 %v1798, %v1794
    %v1899 = vpack.c.b16 %v1799, %v1795
    %v1900 = vpack.c.b16 %v1800, %v1796
    %v1901 = vpack.c.b16 %v1805, %v1801
    %v1902 = vpack.c.b16 %v1806, %v1802
    %v1903 = vpack.c.b16 %v1807, %v1803
    %v1904 = vpack.c.b16 %v1808, %v1804
    %v1905 = vpack.c.b16 %v1813, %v1809
    %v1906 = vpack.c.b16 %v1814, %v1810
    %v1907 = vpack.c.b16 %v1815, %v1811
    %v1908 = vpack.c.b16 %v1816, %v1812
    %v1909 = vpack.c.b16 %v1821, %v1817
    %v1910 = vpack.c.b16 %v1822, %v1818
    %v1911 = vpack.c.b16 %v1823, %v1819
    %v1912 = vpack.c.b16 %v1824, %v1820
    %v1913 = vpack.c.b16 %v1829, %v1825
    %v1914 = vpack.c.b16 %v1830, %v1826
    %v1915 = vpack.c.b16 %v1831, %v1827
    %v1916 = vpack.c.b16 %v1832, %v1828
    %v1917 = vpack.c.b16 %v1837, %v1833
    %v1918 = vpack.c.b16 %v1838, %v1834
    %v1919 = vpack.c.b16 %v1839, %v1835
    %v1920 = vpack.c.b16 %v1840, %v1836
    %v1921 = vpack.c.b16 %v1845, %v1841
    %v1922 = vpack.c.b16 %v1846, %v1842
    %v1923 = vpack.c.b16 %v1847, %v1843
    %v1924 = vpack.c.b16 %v1848, %v1844
    %v1925 = vpack.c.b16 %v1853, %v1849
    %v1926 = vpack.c.b16 %v1854, %v1850
    %v1927 = vpack.c.b16 %v1855, %v1851
    %v1928 = vpack.c.b16 %v1856, %v1852
    %v1929 = vpack.c.b16 %v1861, %v1857
    %v1930 = vpack.c.b16 %v1862, %v1858
    %v1931 = vpack.c.b16 %v1863, %v1859
    %v1932 = vpack.c.b16 %v1864, %v1860
    %v1933 = vpack.c.b16 %v1869, %v1865
    %v1934 = vpack.c.b16 %v1870, %v1866
    %v1935 = vpack.c.b16 %v1871, %v1867
    %v1936 = vpack.c.b16 %v1872, %v1868
    %2001 = vmatprep.subr.bf16.mxu0 %v1874
    %2002 = vmatpush1.bf16.msra.mxu0 %v1873
    %2003 = vmatprep.subr.bf16.mxu0 %v1878
    %2004 = vmatpush1.bf16.msra.mxu0 %v1877
    %2005 = vmatprep.subr.bf16.mxu0 %v1882
    %2006 = vmatpush1.bf16.msra.mxu0 %v1881
    %2007 = vmatprep.subr.bf16.mxu0 %v1886
    %2008 = vmatpush1.bf16.msra.mxu0 %v1885
    %2009 = vmatprep.subr.bf16.mxu0 %v1890
    %2010 = vmatpush1.bf16.msra.mxu0 %v1889
    %2011 = vmatprep.subr.bf16.mxu0 %v1894
    %2012 = vmatpush1.bf16.msra.mxu0 %v1893
    %2013 = vmatprep.subr.bf16.mxu0 %v1898
    %2014 = vmatpush1.bf16.msra.mxu0 %v1897
    %2015 = vmatprep.subr.bf16.mxu0 %v1902
    %2016 = vmatpush1.bf16.msra.mxu0 %v1901
    %2017 = vmatprep.subr.bf16.mxu0 %v1906
    %2018 = vmatpush1.bf16.msra.mxu0 %v1905
    %2019 = vmatprep.subr.bf16.mxu0 %v1910
    %2020 = vmatpush1.bf16.msra.mxu0 %v1909
    %2021 = vmatprep.subr.bf16.mxu0 %v1914
    %2022 = vmatpush1.bf16.msra.mxu0 %v1913
    %2023 = vmatprep.subr.bf16.mxu0 %v1918
    %2024 = vmatpush1.bf16.msra.mxu0 %v1917
    %2025 = vmatprep.subr.bf16.mxu0 %v1922
    %2026 = vmatpush1.bf16.msra.mxu0 %v1921
    %2027 = vmatprep.subr.bf16.mxu0 %v1926
    %2028 = vmatpush1.bf16.msra.mxu0 %v1925
    %2029 = vmatprep.subr.bf16.mxu0 %v1930
    %2030 = vmatpush1.bf16.msra.mxu0 %v1929
    %2031 = vmatprep.subr.bf16.mxu0 %v1934
    %2032 = vmatpush1.bf16.msra.mxu0 %v1933
    %2033 = vmatprep.mubr.bf16.mxu0 %v856
    %2034 = vmatmul.mubr.bf16.gmra.mrb[0].mxu0 %v1486
    %v2035 = vpop.f32.mrb[0].mxu0
    %v2036 = vadd.f32 %v1664, %v2035
    %v2037 = vpop.f32.mrb[0].mxu0
    %v2038 = vadd.f32 %v1668, %v2037
    %v2039 = vpop.f32.mrb[0].mxu0
    %v2040 = vpop.f32.mrb[0].mxu0
    %2041 = vdwg.mxu0
    %2042 = vmatprep.subr.bf16.mxu0 %v1876
    %2043 = vmatpush1.bf16.msra.mxu0 %v1875
    %2044 = vmatprep.subr.bf16.mxu0 %v1880
    %2045 = vmatpush1.bf16.msra.mxu0 %v1879
    %2046 = vmatprep.subr.bf16.mxu0 %v1884
    %2047 = vmatpush1.bf16.msra.mxu0 %v1883
    %2048 = vmatprep.subr.bf16.mxu0 %v1888
    %2049 = vmatpush1.bf16.msra.mxu0 %v1887
    %2050 = vmatprep.subr.bf16.mxu0 %v1892
    %2051 = vmatpush1.bf16.msra.mxu0 %v1891
    %2052 = vmatprep.subr.bf16.mxu0 %v1896
    %2053 = vmatpush1.bf16.msra.mxu0 %v1895
    %2054 = vmatprep.subr.bf16.mxu0 %v1900
    %2055 = vmatpush1.bf16.msra.mxu0 %v1899
    %2056 = vmatprep.subr.bf16.mxu0 %v1904
    %2057 = vmatpush1.bf16.msra.mxu0 %v1903
    %2058 = vmatprep.subr.bf16.mxu0 %v1908
    %2059 = vmatpush1.bf16.msra.mxu0 %v1907
    %2060 = vmatprep.subr.bf16.mxu0 %v1912
    %2061 = vmatpush1.bf16.msra.mxu0 %v1911
    %2062 = vmatprep.subr.bf16.mxu0 %v1916
    %2063 = vmatpush1.bf16.msra.mxu0 %v1915
    %2064 = vmatprep.subr.bf16.mxu0 %v1920
    %2065 = vmatpush1.bf16.msra.mxu0 %v1919
    %2066 = vmatprep.subr.bf16.mxu0 %v1924
    %2067 = vmatpush1.bf16.msra.mxu0 %v1923
    %2068 = vmatprep.subr.bf16.mxu0 %v1928
    %2069 = vmatpush1.bf16.msra.mxu0 %v1927
    %2070 = vmatprep.subr.bf16.mxu0 %v1932
    %2071 = vmatpush1.bf16.msra.mxu0 %v1931
    %2072 = vmatprep.subr.bf16.mxu0 %v1936
    %2073 = vmatpush1.bf16.msra.mxu0 %v1935
    %2074 = vmatprep.mubr.bf16.mxu0 %v856
    %2075 = vmatmul.mubr.bf16.gmra.mrb[0].mxu0 %v1486
    %v2076 = vpop.f32.mrb[0].mxu0
    %v2077 = vadd.f32 %v1672, %v2076
    %v2078 = vpop.f32.mrb[0].mxu0
    %v2079 = vadd.f32 %v1676, %v2078
    %v2080 = vpop.f32.mrb[0].mxu0
    %v2081 = vpop.f32.mrb[0].mxu0
    %2082 = vdwg.mxu0
    %v2083 = vxor.u32 %v2036, 2147483648
    %v2084 = vmul.f32 %v2083, 1.442695
    %v2085 = vpow.pop %v2084
    %v2086 = vadd.f32 %v2085, 1.0
    %v2087 = vrcp.pop %v2086
    %v2088 = vmul.f32 1.0, %v2087
    %v2089 = vxor.u32 %v2038, 2147483648
    %v2090 = vmul.f32 %v2089, 1.442695
    %v2091 = vpow.pop %v2090
    %v2092 = vadd.f32 %v2091, 1.0
    %v2093 = vrcp.pop %v2092
    %v2094 = vmul.f32 1.0, %v2093
    %v2095 = vtanh.pop %v2077
    %v2096 = vxor.u32 %v2079, 2147483648
    %v2097 = vmul.f32 %v2096, 1.442695
    %v2098 = vpow.pop %v2097
    %v2099 = vadd.f32 %v2098, 1.0
    %v2100 = vrcp.pop %v2099
    %v2101 = vmul.f32 1.0, %v2100
    %v2102 = vmul.f32 %v2094, 0.0
    %v2103 = vmul.f32 %v2088, %v2095
    %v2104 = vadd.f32 %v2102, %v2103
    %v2105 = vtanh.pop %v2104
    %v2106 = vmul.f32 %v2101, %v2105
    %s2107 = scalar_lea.vmem [#allocation2], 96
    %v2108 = vld [vmem:[%s2107] sm:$0xff]
    %v2109 = vld [vmem:[%s2107 + $0x8] sm:$0xff]
    %v2110 = vld [vmem:[%s2107 + $0x10] sm:$0xff]
    %v2111 = vld [vmem:[%s2107 + $0x18] sm:$0xff]
    %v2112 = vpack.c.bf16 %v1485, %v1485
    %2113 = vmatprep.subr.bf16.mxu0 %v567
    %2114 = vmatpush1.bf16.msra.mxu0 %v566
    %2115 = vmatprep.subr.bf16.mxu0 %v571
    %2116 = vmatpush1.bf16.msra.mxu0 %v570
    %2117 = vmatprep.subr.bf16.mxu0 %v575
    %2118 = vmatpush1.bf16.msra.mxu0 %v574
    %2119 = vmatprep.subr.bf16.mxu0 %v579
    %2120 = vmatpush1.bf16.msra.mxu0 %v578
    %2121 = vmatprep.subr.bf16.mxu0 %v583
    %2122 = vmatpush1.bf16.msra.mxu0 %v582
    %2123 = vmatprep.subr.bf16.mxu0 %v587
    %2124 = vmatpush1.bf16.msra.mxu0 %v586
    %2125 = vmatprep.subr.bf16.mxu0 %v591
    %2126 = vmatpush1.bf16.msra.mxu0 %v590
    %2127 = vmatprep.subr.bf16.mxu0 %v595
    %2128 = vmatpush1.bf16.msra.mxu0 %v594
    %2129 = vmatprep.subr.bf16.mxu0 0
    %2130 = vmatpush1.bf16.msra.mxu0 0
    %2131 = vmatprep.subr.bf16.mxu0 0
    %2132 = vmatpush1.bf16.msra.mxu0 0
    %2133 = vmatprep.subr.bf16.mxu0 0
    %2134 = vmatpush1.bf16.msra.mxu0 0
    %2135 = vmatprep.subr.bf16.mxu0 0
    %2136 = vmatpush1.bf16.msra.mxu0 0
    %2137 = vmatprep.subr.bf16.mxu0 0
    %2138 = vmatpush1.bf16.msra.mxu0 0
    %2139 = vmatprep.subr.bf16.mxu0 0
    %2140 = vmatpush1.bf16.msra.mxu0 0
    %2141 = vmatprep.subr.bf16.mxu0 0
    %2142 = vmatpush1.bf16.msra.mxu0 0
    %2143 = vmatprep.subr.bf16.mxu0 0
    %2144 = vmatpush1.bf16.msra.mxu0 0
    %2145 = vmatprep.mubr.bf16.mxu0 0
    %2146 = vmatmul.mubr.bf16.gmra.mrb[0].mxu0 %v2112
    %v2147 = vpop.f32.mrb[0].mxu0
    %v2148 = vadd.f32 0.0, %v2147
    %v2149 = vpop.f32.mrb[0].mxu0
    %v2150 = vadd.f32 0.0, %v2149
    %v2151 = vpop.f32.mrb[0].mxu0
    %v2152 = vpop.f32.mrb[0].mxu0
    %2153 = vdwg.mxu0
    %2154 = vmatprep.subr.bf16.mxu0 %v569
    %2155 = vmatpush1.bf16.msra.mxu0 %v568
    %2156 = vmatprep.subr.bf16.mxu0 %v573
    %2157 = vmatpush1.bf16.msra.mxu0 %v572
    %2158 = vmatprep.subr.bf16.mxu0 %v577
    %2159 = vmatpush1.bf16.msra.mxu0 %v576
    %2160 = vmatprep.subr.bf16.mxu0 %v581
    %2161 = vmatpush1.bf16.msra.mxu0 %v580
    %2162 = vmatprep.subr.bf16.mxu0 %v585
    %2163 = vmatpush1.bf16.msra.mxu0 %v584
    %2164 = vmatprep.subr.bf16.mxu0 %v589
    %2165 = vmatpush1.bf16.msra.mxu0 %v588
    %2166 = vmatprep.subr.bf16.mxu0 %v593
    %2167 = vmatpush1.bf16.msra.mxu0 %v592
    %2168 = vmatprep.subr.bf16.mxu0 %v597
    %2169 = vmatpush1.bf16.msra.mxu0 %v596
    %2170 = vmatprep.subr.bf16.mxu0 0
    %2171 = vmatpush1.bf16.msra.mxu0 0
    %2172 = vmatprep.subr.bf16.mxu0 0
    %2173 = vmatpush1.bf16.msra.mxu0 0
    %2174 = vmatprep.subr.bf16.mxu0 0
    %2175 = vmatpush1.bf16.msra.mxu0 0
    %2176 = vmatprep.subr.bf16.mxu0 0
    %2177 = vmatpush1.bf16.msra.mxu0 0
    %2178 = vmatprep.subr.bf16.mxu0 0
    %2179 = vmatpush1.bf16.msra.mxu0 0
    %2180 = vmatprep.subr.bf16.mxu0 0
    %2181 = vmatpush1.bf16.msra.mxu0 0
    %2182 = vmatprep.subr.bf16.mxu0 0
    %2183 = vmatpush1.bf16.msra.mxu0 0
    %2184 = vmatprep.subr.bf16.mxu0 0
    %2185 = vmatpush1.bf16.msra.mxu0 0
    %2186 = vmatprep.mubr.bf16.mxu0 0
    %2187 = vmatmul.mubr.bf16.gmra.mrb[0].mxu0 %v2112
    %v2188 = vpop.f32.mrb[0].mxu0
    %v2189 = vadd.f32 0.0, %v2188
    %v2190 = vpop.f32.mrb[0].mxu0
    %v2191 = vadd.f32 0.0, %v2190
    %v2192 = vpop.f32.mrb[0].mxu0
    %v2193 = vpop.f32.mrb[0].mxu0
    %2194 = vdwg.mxu0
    %v2195 = vadd.f32 %v2108, %v2148
    %v2196 = vadd.f32 %v2109, %v2150
    %v2197 = vadd.f32 %v2110, %v2189
    %v2198 = vadd.f32 %v2111, %v2191
    %v2199 = vxor.u32 %v2195, 2147483648
    %v2200 = vmul.f32 %v2199, 1.442695
    %v2201 = vpow.pop %v2200
    %v2202 = vadd.f32 %v2201, 1.0
    %v2203 = vrcp.pop %v2202
    %v2204 = vmul.f32 1.0, %v2203
    %v2205 = vxor.u32 %v2196, 2147483648
    %v2206 = vmul.f32 %v2205, 1.442695
    %v2207 = vpow.pop %v2206
    %v2208 = vadd.f32 %v2207, 1.0
    %v2209 = vrcp.pop %v2208
    %v2210 = vmul.f32 1.0, %v2209
    %v2211 = vtanh.pop %v2197
    %v2212 = vxor.u32 %v2198, 2147483648
    %v2213 = vmul.f32 %v2212, 1.442695
    %v2214 = vpow.pop %v2213
    %v2215 = vadd.f32 %v2214, 1.0
    %v2216 = vrcp.pop %v2215
    %v2217 = vmul.f32 1.0, %v2216
    %v2218 = vmul.f32 %v2210, %v1483
    %v2219 = vmul.f32 %v2204, %v2211
    %v2220 = vadd.f32 %v2218, %v2219
    %v2221 = vtanh.pop %v2220
    %v2222 = vmul.f32 %v2217, %v2221
    %v2223 = vpack.c.bf16 %v1592, %v1592
    %2224 = vmatprep.subr.bf16.mxu0 %v1137
    %2225 = vmatpush1.bf16.msra.mxu0 %v1136
    %2226 = vmatprep.subr.bf16.mxu0 %v1141
    %2227 = vmatpush1.bf16.msra.mxu0 %v1140
    %2228 = vmatprep.subr.bf16.mxu0 %v1145
    %2229 = vmatpush1.bf16.msra.mxu0 %v1144
    %2230 = vmatprep.subr.bf16.mxu0 %v1149
    %2231 = vmatpush1.bf16.msra.mxu0 %v1148
    %2232 = vmatprep.subr.bf16.mxu0 %v1153
    %2233 = vmatpush1.bf16.msra.mxu0 %v1152
    %2234 = vmatprep.subr.bf16.mxu0 %v1157
    %2235 = vmatpush1.bf16.msra.mxu0 %v1156
    %2236 = vmatprep.subr.bf16.mxu0 %v1161
    %2237 = vmatpush1.bf16.msra.mxu0 %v1160
    %2238 = vmatprep.subr.bf16.mxu0 %v1165
    %2239 = vmatpush1.bf16.msra.mxu0 %v1164
    %2240 = vmatprep.subr.bf16.mxu0 %v1169
    %2241 = vmatpush1.bf16.msra.mxu0 %v1168
    %2242 = vmatprep.subr.bf16.mxu0 %v1173
    %2243 = vmatpush1.bf16.msra.mxu0 %v1172
    %2244 = vmatprep.subr.bf16.mxu0 %v1177
    %2245 = vmatpush1.bf16.msra.mxu0 %v1176
    %2246 = vmatprep.subr.bf16.mxu0 %v1181
    %2247 = vmatpush1.bf16.msra.mxu0 %v1180
    %2248 = vmatprep.subr.bf16.mxu0 %v1185
    %2249 = vmatpush1.bf16.msra.mxu0 %v1184
    %2250 = vmatprep.subr.bf16.mxu0 %v1189
    %2251 = vmatpush1.bf16.msra.mxu0 %v1188
    %2252 = vmatprep.subr.bf16.mxu0 %v1193
    %2253 = vmatpush1.bf16.msra.mxu0 %v1192
    %2254 = vmatprep.subr.bf16.mxu0 %v1197
    %2255 = vmatpush1.bf16.msra.mxu0 %v1196
    %2256 = vmatprep.mubr.bf16.mxu0 %v2223
    %2257 = vmatmul.mubr.bf16.gmra.mrb[0].mxu0 %v2112
    %v2258 = vpop.f32.mrb[0].mxu0
    %v2259 = vadd.f32 %v927, %v2258
    %v2260 = vpop.f32.mrb[0].mxu0
    %v2261 = vadd.f32 %v931, %v2260
    %v2262 = vpop.f32.mrb[0].mxu0
    %v2263 = vpop.f32.mrb[0].mxu0
    %2264 = vdwg.mxu0
    %2265 = vmatprep.subr.bf16.mxu0 %v1139
    %2266 = vmatpush1.bf16.msra.mxu0 %v1138
    %2267 = vmatprep.subr.bf16.mxu0 %v1143
    %2268 = vmatpush1.bf16.msra.mxu0 %v1142
    %2269 = vmatprep.subr.bf16.mxu0 %v1147
    %2270 = vmatpush1.bf16.msra.mxu0 %v1146
    %2271 = vmatprep.subr.bf16.mxu0 %v1151
    %2272 = vmatpush1.bf16.msra.mxu0 %v1150
    %2273 = vmatprep.subr.bf16.mxu0 %v1155
    %2274 = vmatpush1.bf16.msra.mxu0 %v1154
    %2275 = vmatprep.subr.bf16.mxu0 %v1159
    %2276 = vmatpush1.bf16.msra.mxu0 %v1158
    %2277 = vmatprep.subr.bf16.mxu0 %v1163
    %2278 = vmatpush1.bf16.msra.mxu0 %v1162
    %2279 = vmatprep.subr.bf16.mxu0 %v1167
    %2280 = vmatpush1.bf16.msra.mxu0 %v1166
    %2281 = vmatprep.subr.bf16.mxu0 %v1171
    %2282 = vmatpush1.bf16.msra.mxu0 %v1170
    %2283 = vmatprep.subr.bf16.mxu0 %v1175
    %2284 = vmatpush1.bf16.msra.mxu0 %v1174
    %2285 = vmatprep.subr.bf16.mxu0 %v1179
    %2286 = vmatpush1.bf16.msra.mxu0 %v1178
    %2287 = vmatprep.subr.bf16.mxu0 %v1183
    %2288 = vmatpush1.bf16.msra.mxu0 %v1182
    %2289 = vmatprep.subr.bf16.mxu0 %v1187
    %2290 = vmatpush1.bf16.msra.mxu0 %v1186
    %2291 = vmatprep.subr.bf16.mxu0 %v1191
    %2292 = vmatpush1.bf16.msra.mxu0 %v1190
    %2293 = vmatprep.subr.bf16.mxu0 %v1195
    %2294 = vmatpush1.bf16.msra.mxu0 %v1194
    %2295 = vmatprep.subr.bf16.mxu0 %v1199
    %2296 = vmatpush1.bf16.msra.mxu0 %v1198
    %2297 = vmatprep.mubr.bf16.mxu0 %v2223
    %2298 = vmatmul.mubr.bf16.gmra.mrb[0].mxu0 %v2112
    %v2299 = vpop.f32.mrb[0].mxu0
    %v2300 = vadd.f32 %v935, %v2299
    %v2301 = vpop.f32.mrb[0].mxu0
    %v2302 = vadd.f32 %v939, %v2301
    %v2303 = vpop.f32.mrb[0].mxu0
    %v2304 = vpop.f32.mrb[0].mxu0
    %2305 = vdwg.mxu0
    %v2306 = vxor.u32 %v2259, 2147483648
    %v2307 = vmul.f32 %v2306, 1.442695
    %v2308 = vpow.pop %v2307
    %v2309 = vadd.f32 %v2308, 1.0
    %v2310 = vrcp.pop %v2309
    %v2311 = vmul.f32 1.0, %v2310
    %v2312 = vxor.u32 %v2261, 2147483648
    %v2313 = vmul.f32 %v2312, 1.442695
    %v2314 = vpow.pop %v2313
    %v2315 = vadd.f32 %v2314, 1.0
    %v2316 = vrcp.pop %v2315
    %v2317 = vmul.f32 1.0, %v2316
    %v2318 = vtanh.pop %v2300
    %v2319 = vxor.u32 %v2302, 2147483648
    %v2320 = vmul.f32 %v2319, 1.442695
    %v2321 = vpow.pop %v2320
    %v2322 = vadd.f32 %v2321, 1.0
    %v2323 = vrcp.pop %v2322
    %v2324 = vmul.f32 1.0, %v2323
    %v2325 = vmul.f32 %v2317, %v1590
    %v2326 = vmul.f32 %v2311, %v2318
    %v2327 = vadd.f32 %v2325, %v2326
    %v2328 = vtanh.pop %v2327
    %v2329 = vmul.f32 %v2324, %v2328
    %v2330 = vpack.c.bf16 %v2106, %v2106
    %2331 = vmatprep.subr.bf16.mxu0 %v1874
    %2332 = vmatpush1.bf16.msra.mxu0 %v1873
    %2333 = vmatprep.subr.bf16.mxu0 %v1878
    %2334 = vmatpush1.bf16.msra.mxu0 %v1877
    %2335 = vmatprep.subr.bf16.mxu0 %v1882
    %2336 = vmatpush1.bf16.msra.mxu0 %v1881
    %2337 = vmatprep.subr.bf16.mxu0 %v1886
    %2338 = vmatpush1.bf16.msra.mxu0 %v1885
    %2339 = vmatprep.subr.bf16.mxu0 %v1890
    %2340 = vmatpush1.bf16.msra.mxu0 %v1889
    %2341 = vmatprep.subr.bf16.mxu0 %v1894
    %2342 = vmatpush1.bf16.msra.mxu0 %v1893
    %2343 = vmatprep.subr.bf16.mxu0 %v1898
    %2344 = vmatpush1.bf16.msra.mxu0 %v1897
    %2345 = vmatprep.subr.bf16.mxu0 %v1902
    %2346 = vmatpush1.bf16.msra.mxu0 %v1901
    %2347 = vmatprep.subr.bf16.mxu0 %v1906
    %2348 = vmatpush1.bf16.msra.mxu0 %v1905
    %2349 = vmatprep.subr.bf16.mxu0 %v1910
    %2350 = vmatpush1.bf16.msra.mxu0 %v1909
    %2351 = vmatprep.subr.bf16.mxu0 %v1914
    %2352 = vmatpush1.bf16.msra.mxu0 %v1913
    %2353 = vmatprep.subr.bf16.mxu0 %v1918
    %2354 = vmatpush1.bf16.msra.mxu0 %v1917
    %2355 = vmatprep.subr.bf16.mxu0 %v1922
    %2356 = vmatpush1.bf16.msra.mxu0 %v1921
    %2357 = vmatprep.subr.bf16.mxu0 %v1926
    %2358 = vmatpush1.bf16.msra.mxu0 %v1925
    %2359 = vmatprep.subr.bf16.mxu0 %v1930
    %2360 = vmatpush1.bf16.msra.mxu0 %v1929
    %2361 = vmatprep.subr.bf16.mxu0 %v1934
    %2362 = vmatpush1.bf16.msra.mxu0 %v1933
    %2363 = vmatprep.mubr.bf16.mxu0 %v2330
    %2364 = vmatmul.mubr.bf16.gmra.mrb[0].mxu0 %v2223
    %v2365 = vpop.f32.mrb[0].mxu0
    %v2366 = vadd.f32 %v1664, %v2365
    %v2367 = vpop.f32.mrb[0].mxu0
    %v2368 = vadd.f32 %v1668, %v2367
    %v2369 = vpop.f32.mrb[0].mxu0
    %v2370 = vpop.f32.mrb[0].mxu0
    %2371 = vdwg.mxu0
    %2372 = vmatprep.subr.bf16.mxu0 %v1876
    %2373 = vmatpush1.bf16.msra.mxu0 %v1875
    %2374 = vmatprep.subr.bf16.mxu0 %v1880
    %2375 = vmatpush1.bf16.msra.mxu0 %v1879
    %2376 = vmatprep.subr.bf16.mxu0 %v1884
    %2377 = vmatpush1.bf16.msra.mxu0 %v1883
    %2378 = vmatprep.subr.bf16.mxu0 %v1888
    %2379 = vmatpush1.bf16.msra.mxu0 %v1887
    %2380 = vmatprep.subr.bf16.mxu0 %v1892
    %2381 = vmatpush1.bf16.msra.mxu0 %v1891
    %2382 = vmatprep.subr.bf16.mxu0 %v1896
    %2383 = vmatpush1.bf16.msra.mxu0 %v1895
    %2384 = vmatprep.subr.bf16.mxu0 %v1900
    %2385 = vmatpush1.bf16.msra.mxu0 %v1899
    %2386 = vmatprep.subr.bf16.mxu0 %v1904
    %2387 = vmatpush1.bf16.msra.mxu0 %v1903
    %2388 = vmatprep.subr.bf16.mxu0 %v1908
    %2389 = vmatpush1.bf16.msra.mxu0 %v1907
    %2390 = vmatprep.subr.bf16.mxu0 %v1912
    %2391 = vmatpush1.bf16.msra.mxu0 %v1911
    %2392 = vmatprep.subr.bf16.mxu0 %v1916
    %2393 = vmatpush1.bf16.msra.mxu0 %v1915
    %2394 = vmatprep.subr.bf16.mxu0 %v1920
    %2395 = vmatpush1.bf16.msra.mxu0 %v1919
    %2396 = vmatprep.subr.bf16.mxu0 %v1924
    %2397 = vmatpush1.bf16.msra.mxu0 %v1923
    %2398 = vmatprep.subr.bf16.mxu0 %v1928
    %2399 = vmatpush1.bf16.msra.mxu0 %v1927
    %2400 = vmatprep.subr.bf16.mxu0 %v1932
    %2401 = vmatpush1.bf16.msra.mxu0 %v1931
    %2402 = vmatprep.subr.bf16.mxu0 %v1936
    %2403 = vmatpush1.bf16.msra.mxu0 %v1935
    %2404 = vmatprep.mubr.bf16.mxu0 %v2330
    %2405 = vmatmul.mubr.bf16.gmra.mrb[0].mxu0 %v2223
    %v2406 = vpop.f32.mrb[0].mxu0
    %v2407 = vadd.f32 %v1672, %v2406
    %v2408 = vpop.f32.mrb[0].mxu0
    %v2409 = vadd.f32 %v1676, %v2408
    %v2410 = vpop.f32.mrb[0].mxu0
    %v2411 = vpop.f32.mrb[0].mxu0
    %2412 = vdwg.mxu0
    %v2413 = vxor.u32 %v2366, 2147483648
    %v2414 = vmul.f32 %v2413, 1.442695
    %v2415 = vpow.pop %v2414
    %v2416 = vadd.f32 %v2415, 1.0
    %v2417 = vrcp.pop %v2416
    %v2418 = vmul.f32 1.0, %v2417
    %v2419 = vxor.u32 %v2368, 2147483648
    %v2420 = vmul.f32 %v2419, 1.442695
    %v2421 = vpow.pop %v2420
    %v2422 = vadd.f32 %v2421, 1.0
    %v2423 = vrcp.pop %v2422
    %v2424 = vmul.f32 1.0, %v2423
    %v2425 = vtanh.pop %v2407
    %v2426 = vxor.u32 %v2409, 2147483648
    %v2427 = vmul.f32 %v2426, 1.442695
    %v2428 = vpow.pop %v2427
    %v2429 = vadd.f32 %v2428, 1.0
    %v2430 = vrcp.pop %v2429
    %v2431 = vmul.f32 1.0, %v2430
    %v2432 = vmul.f32 %v2424, %v2104
    %v2433 = vmul.f32 %v2418, %v2425
    %v2434 = vadd.f32 %v2432, %v2433
    %v2435 = vtanh.pop %v2434
    %v2436 = vmul.f32 %v2431, %v2435
    %s2437 = scalar_lea.vmem [#allocation2], 128
    %v2438 = vld [vmem:[%s2437] sm:$0xff]
    %v2439 = vld [vmem:[%s2437 + $0x8] sm:$0xff]
    %v2440 = vld [vmem:[%s2437 + $0x10] sm:$0xff]
    %v2441 = vld [vmem:[%s2437 + $0x18] sm:$0xff]
    %v2442 = vpack.c.bf16 %v2222, %v2222
    %2443 = vmatprep.subr.bf16.mxu0 %v567
    %2444 = vmatpush1.bf16.msra.mxu0 %v566
    %2445 = vmatprep.subr.bf16.mxu0 %v571
    %2446 = vmatpush1.bf16.msra.mxu0 %v570
    %2447 = vmatprep.subr.bf16.mxu0 %v575
    %2448 = vmatpush1.bf16.msra.mxu0 %v574
    %2449 = vmatprep.subr.bf16.mxu0 %v579
    %2450 = vmatpush1.bf16.msra.mxu0 %v578
    %2451 = vmatprep.subr.bf16.mxu0 %v583
    %2452 = vmatpush1.bf16.msra.mxu0 %v582
    %2453 = vmatprep.subr.bf16.mxu0 %v587
    %2454 = vmatpush1.bf16.msra.mxu0 %v586
    %2455 = vmatprep.subr.bf16.mxu0 %v591
    %2456 = vmatpush1.bf16.msra.mxu0 %v590
    %2457 = vmatprep.subr.bf16.mxu0 %v595
    %2458 = vmatpush1.bf16.msra.mxu0 %v594
    %2459 = vmatprep.subr.bf16.mxu0 0
    %2460 = vmatpush1.bf16.msra.mxu0 0
    %2461 = vmatprep.subr.bf16.mxu0 0
    %2462 = vmatpush1.bf16.msra.mxu0 0
    %2463 = vmatprep.subr.bf16.mxu0 0
    %2464 = vmatpush1.bf16.msra.mxu0 0
    %2465 = vmatprep.subr.bf16.mxu0 0
    %2466 = vmatpush1.bf16.msra.mxu0 0
    %2467 = vmatprep.subr.bf16.mxu0 0
    %2468 = vmatpush1.bf16.msra.mxu0 0
    %2469 = vmatprep.subr.bf16.mxu0 0
    %2470 = vmatpush1.bf16.msra.mxu0 0
    %2471 = vmatprep.subr.bf16.mxu0 0
    %2472 = vmatpush1.bf16.msra.mxu0 0
    %2473 = vmatprep.subr.bf16.mxu0 0
    %2474 = vmatpush1.bf16.msra.mxu0 0
    %2475 = vmatprep.mubr.bf16.mxu0 0
    %2476 = vmatmul.mubr.bf16.gmra.mrb[0].mxu0 %v2442
    %v2477 = vpop.f32.mrb[0].mxu0
    %v2478 = vadd.f32 0.0, %v2477
    %v2479 = vpop.f32.mrb[0].mxu0
    %v2480 = vadd.f32 0.0, %v2479
    %v2481 = vpop.f32.mrb[0].mxu0
    %v2482 = vpop.f32.mrb[0].mxu0
    %2483 = vdwg.mxu0
    %2484 = vmatprep.subr.bf16.mxu0 %v569
    %2485 = vmatpush1.bf16.msra.mxu0 %v568
    %2486 = vmatprep.subr.bf16.mxu0 %v573
    %2487 = vmatpush1.bf16.msra.mxu0 %v572
    %2488 = vmatprep.subr.bf16.mxu0 %v577
    %2489 = vmatpush1.bf16.msra.mxu0 %v576
    %2490 = vmatprep.subr.bf16.mxu0 %v581
    %2491 = vmatpush1.bf16.msra.mxu0 %v580
    %2492 = vmatprep.subr.bf16.mxu0 %v585
    %2493 = vmatpush1.bf16.msra.mxu0 %v584
    %2494 = vmatprep.subr.bf16.mxu0 %v589
    %2495 = vmatpush1.bf16.msra.mxu0 %v588
    %2496 = vmatprep.subr.bf16.mxu0 %v593
    %2497 = vmatpush1.bf16.msra.mxu0 %v592
    %2498 = vmatprep.subr.bf16.mxu0 %v597
    %2499 = vmatpush1.bf16.msra.mxu0 %v596
    %2500 = vmatprep.subr.bf16.mxu0 0
    %2501 = vmatpush1.bf16.msra.mxu0 0
    %2502 = vmatprep.subr.bf16.mxu0 0
    %2503 = vmatpush1.bf16.msra.mxu0 0
    %2504 = vmatprep.subr.bf16.mxu0 0
    %2505 = vmatpush1.bf16.msra.mxu0 0
    %2506 = vmatprep.subr.bf16.mxu0 0
    %2507 = vmatpush1.bf16.msra.mxu0 0
    %2508 = vmatprep.subr.bf16.mxu0 0
    %2509 = vmatpush1.bf16.msra.mxu0 0
    %2510 = vmatprep.subr.bf16.mxu0 0
    %2511 = vmatpush1.bf16.msra.mxu0 0
    %2512 = vmatprep.subr.bf16.mxu0 0
    %2513 = vmatpush1.bf16.msra.mxu0 0
    %2514 = vmatprep.subr.bf16.mxu0 0
    %2515 = vmatpush1.bf16.msra.mxu0 0
    %2516 = vmatprep.mubr.bf16.mxu0 0
    %2517 = vmatmul.mubr.bf16.gmra.mrb[0].mxu0 %v2442
    %v2518 = vpop.f32.mrb[0].mxu0
    %v2519 = vadd.f32 0.0, %v2518
    %v2520 = vpop.f32.mrb[0].mxu0
    %v2521 = vadd.f32 0.0, %v2520
    %v2522 = vpop.f32.mrb[0].mxu0
    %v2523 = vpop.f32.mrb[0].mxu0
    %2524 = vdwg.mxu0
    %v2525 = vadd.f32 %v2438, %v2478
    %v2526 = vadd.f32 %v2439, %v2480
    %v2527 = vadd.f32 %v2440, %v2519
    %v2528 = vadd.f32 %v2441, %v2521
    %v2529 = vxor.u32 %v2525, 2147483648
    %v2530 = vmul.f32 %v2529, 1.442695
    %v2531 = vpow.pop %v2530
    %v2532 = vadd.f32 %v2531, 1.0
    %v2533 = vrcp.pop %v2532
    %v2534 = vmul.f32 1.0, %v2533
    %v2535 = vxor.u32 %v2526, 2147483648
    %v2536 = vmul.f32 %v2535, 1.442695
    %v2537 = vpow.pop %v2536
    %v2538 = vadd.f32 %v2537, 1.0
    %v2539 = vrcp.pop %v2538
    %v2540 = vmul.f32 1.0, %v2539
    %v2541 = vtanh.pop %v2527
    %v2542 = vxor.u32 %v2528, 2147483648
    %v2543 = vmul.f32 %v2542, 1.442695
    %v2544 = vpow.pop %v2543
    %v2545 = vadd.f32 %v2544, 1.0
    %v2546 = vrcp.pop %v2545
    %v2547 = vmul.f32 1.0, %v2546
    %v2548 = vmul.f32 %v2540, %v2220
    %v2549 = vmul.f32 %v2534, %v2541
    %v2550 = vadd.f32 %v2548, %v2549
    %v2551 = vtanh.pop %v2550
    %v2552 = vmul.f32 %v2547, %v2551
    %v2553 = vpack.c.bf16 %v2329, %v2329
    %2554 = vmatprep.subr.bf16.mxu0 %v1137
    %2555 = vmatpush1.bf16.msra.mxu0 %v1136
    %2556 = vmatprep.subr.bf16.mxu0 %v1141
    %2557 = vmatpush1.bf16.msra.mxu0 %v1140
    %2558 = vmatprep.subr.bf16.mxu0 %v1145
    %2559 = vmatpush1.bf16.msra.mxu0 %v1144
    %2560 = vmatprep.subr.bf16.mxu0 %v1149
    %2561 = vmatpush1.bf16.msra.mxu0 %v1148
    %2562 = vmatprep.subr.bf16.mxu0 %v1153
    %2563 = vmatpush1.bf16.msra.mxu0 %v1152
    %2564 = vmatprep.subr.bf16.mxu0 %v1157
    %2565 = vmatpush1.bf16.msra.mxu0 %v1156
    %2566 = vmatprep.subr.bf16.mxu0 %v1161
    %2567 = vmatpush1.bf16.msra.mxu0 %v1160
    %2568 = vmatprep.subr.bf16.mxu0 %v1165
    %2569 = vmatpush1.bf16.msra.mxu0 %v1164
    %2570 = vmatprep.subr.bf16.mxu0 %v1169
    %2571 = vmatpush1.bf16.msra.mxu0 %v1168
    %2572 = vmatprep.subr.bf16.mxu0 %v1173
    %2573 = vmatpush1.bf16.msra.mxu0 %v1172
    %2574 = vmatprep.subr.bf16.mxu0 %v1177
    %2575 = vmatpush1.bf16.msra.mxu0 %v1176
    %2576 = vmatprep.subr.bf16.mxu0 %v1181
    %2577 = vmatpush1.bf16.msra.mxu0 %v1180
    %2578 = vmatprep.subr.bf16.mxu0 %v1185
    %2579 = vmatpush1.bf16.msra.mxu0 %v1184
    %2580 = vmatprep.subr.bf16.mxu0 %v1189
    %2581 = vmatpush1.bf16.msra.mxu0 %v1188
    %2582 = vmatprep.subr.bf16.mxu0 %v1193
    %2583 = vmatpush1.bf16.msra.mxu0 %v1192
    %2584 = vmatprep.subr.bf16.mxu0 %v1197
    %2585 = vmatpush1.bf16.msra.mxu0 %v1196
    %2586 = vmatprep.mubr.bf16.mxu0 %v2553
    %2587 = vmatmul.mubr.bf16.gmra.mrb[0].mxu0 %v2442
    %v2588 = vpop.f32.mrb[0].mxu0
    %v2589 = vadd.f32 %v927, %v2588
    %v2590 = vpop.f32.mrb[0].mxu0
    %v2591 = vadd.f32 %v931, %v2590
    %v2592 = vpop.f32.mrb[0].mxu0
    %v2593 = vpop.f32.mrb[0].mxu0
    %2594 = vdwg.mxu0
    %2595 = vmatprep.subr.bf16.mxu0 %v1139
    %2596 = vmatpush1.bf16.msra.mxu0 %v1138
    %2597 = vmatprep.subr.bf16.mxu0 %v1143
    %2598 = vmatpush1.bf16.msra.mxu0 %v1142
    %2599 = vmatprep.subr.bf16.mxu0 %v1147
    %2600 = vmatpush1.bf16.msra.mxu0 %v1146
    %2601 = vmatprep.subr.bf16.mxu0 %v1151
    %2602 = vmatpush1.bf16.msra.mxu0 %v1150
    %2603 = vmatprep.subr.bf16.mxu0 %v1155
    %2604 = vmatpush1.bf16.msra.mxu0 %v1154
    %2605 = vmatprep.subr.bf16.mxu0 %v1159
    %2606 = vmatpush1.bf16.msra.mxu0 %v1158
    %2607 = vmatprep.subr.bf16.mxu0 %v1163
    %2608 = vmatpush1.bf16.msra.mxu0 %v1162
    %2609 = vmatprep.subr.bf16.mxu0 %v1167
    %2610 = vmatpush1.bf16.msra.mxu0 %v1166
    %2611 = vmatprep.subr.bf16.mxu0 %v1171
    %2612 = vmatpush1.bf16.msra.mxu0 %v1170
    %2613 = vmatprep.subr.bf16.mxu0 %v1175
    %2614 = vmatpush1.bf16.msra.mxu0 %v1174
    %2615 = vmatprep.subr.bf16.mxu0 %v1179
    %2616 = vmatpush1.bf16.msra.mxu0 %v1178
    %2617 = vmatprep.subr.bf16.mxu0 %v1183
    %2618 = vmatpush1.bf16.msra.mxu0 %v1182
    %2619 = vmatprep.subr.bf16.mxu0 %v1187
    %2620 = vmatpush1.bf16.msra.mxu0 %v1186
    %2621 = vmatprep.subr.bf16.mxu0 %v1191
    %2622 = vmatpush1.bf16.msra.mxu0 %v1190
    %2623 = vmatprep.subr.bf16.mxu0 %v1195
    %2624 = vmatpush1.bf16.msra.mxu0 %v1194
    %2625 = vmatprep.subr.bf16.mxu0 %v1199
    %2626 = vmatpush1.bf16.msra.mxu0 %v1198
    %2627 = vmatprep.mubr.bf16.mxu0 %v2553
    %2628 = vmatmul.mubr.bf16.gmra.mrb[0].mxu0 %v2442
    %v2629 = vpop.f32.mrb[0].mxu0
    %v2630 = vadd.f32 %v935, %v2629
    %v2631 = vpop.f32.mrb[0].mxu0
    %v2632 = vadd.f32 %v939, %v2631
    %v2633 = vpop.f32.mrb[0].mxu0
    %v2634 = vpop.f32.mrb[0].mxu0
    %2635 = vdwg.mxu0
    %v2636 = vxor.u32 %v2589, 2147483648
    %v2637 = vmul.f32 %v2636, 1.442695
    %v2638 = vpow.pop %v2637
    %v2639 = vadd.f32 %v2638, 1.0
    %v2640 = vrcp.pop %v2639
    %v2641 = vmul.f32 1.0, %v2640
    %v2642 = vxor.u32 %v2591, 2147483648
    %v2643 = vmul.f32 %v2642, 1.442695
    %v2644 = vpow.pop %v2643
    %v2645 = vadd.f32 %v2644, 1.0
    %v2646 = vrcp.pop %v2645
    %v2647 = vmul.f32 1.0, %v2646
    %v2648 = vtanh.pop %v2630
    %v2649 = vxor.u32 %v2632, 2147483648
    %v2650 = vmul.f32 %v2649, 1.442695
    %v2651 = vpow.pop %v2650
    %v2652 = vadd.f32 %v2651, 1.0
    %v2653 = vrcp.pop %v2652
    %v2654 = vmul.f32 1.0, %v2653
    %v2655 = vmul.f32 %v2647, %v2327
    %v2656 = vmul.f32 %v2641, %v2648
    %v2657 = vadd.f32 %v2655, %v2656
    %v2658 = vtanh.pop %v2657
    %v2659 = vmul.f32 %v2654, %v2658
    %v2660 = vpack.c.bf16 %v2436, %v2436
    %2661 = vmatprep.subr.bf16.mxu0 %v1874
    %2662 = vmatpush1.bf16.msra.mxu0 %v1873
    %2663 = vmatprep.subr.bf16.mxu0 %v1878
    %2664 = vmatpush1.bf16.msra.mxu0 %v1877
    %2665 = vmatprep.subr.bf16.mxu0 %v1882
    %2666 = vmatpush1.bf16.msra.mxu0 %v1881
    %2667 = vmatprep.subr.bf16.mxu0 %v1886
    %2668 = vmatpush1.bf16.msra.mxu0 %v1885
    %2669 = vmatprep.subr.bf16.mxu0 %v1890
    %2670 = vmatpush1.bf16.msra.mxu0 %v1889
    %2671 = vmatprep.subr.bf16.mxu0 %v1894
    %2672 = vmatpush1.bf16.msra.mxu0 %v1893
    %2673 = vmatprep.subr.bf16.mxu0 %v1898
    %2674 = vmatpush1.bf16.msra.mxu0 %v1897
    %2675 = vmatprep.subr.bf16.mxu0 %v1902
    %2676 = vmatpush1.bf16.msra.mxu0 %v1901
    %2677 = vmatprep.subr.bf16.mxu0 %v1906
    %2678 = vmatpush1.bf16.msra.mxu0 %v1905
    %2679 = vmatprep.subr.bf16.mxu0 %v1910
    %2680 = vmatpush1.bf16.msra.mxu0 %v1909
    %2681 = vmatprep.subr.bf16.mxu0 %v1914
    %2682 = vmatpush1.bf16.msra.mxu0 %v1913
    %2683 = vmatprep.subr.bf16.mxu0 %v1918
    %2684 = vmatpush1.bf16.msra.mxu0 %v1917
    %2685 = vmatprep.subr.bf16.mxu0 %v1922
    %2686 = vmatpush1.bf16.msra.mxu0 %v1921
    %2687 = vmatprep.subr.bf16.mxu0 %v1926
    %2688 = vmatpush1.bf16.msra.mxu0 %v1925
    %2689 = vmatprep.subr.bf16.mxu0 %v1930
    %2690 = vmatpush1.bf16.msra.mxu0 %v1929
    %2691 = vmatprep.subr.bf16.mxu0 %v1934
    %2692 = vmatpush1.bf16.msra.mxu0 %v1933
    %2693 = vmatprep.mubr.bf16.mxu0 %v2660
    %2694 = vmatmul.mubr.bf16.gmra.mrb[0].mxu0 %v2553
    %v2695 = vpop.f32.mrb[0].mxu0
    %v2696 = vadd.f32 %v1664, %v2695
    %v2697 = vpop.f32.mrb[0].mxu0
    %v2698 = vadd.f32 %v1668, %v2697
    %v2699 = vpop.f32.mrb[0].mxu0
    %v2700 = vpop.f32.mrb[0].mxu0
    %2701 = vdwg.mxu0
    %2702 = vmatprep.subr.bf16.mxu0 %v1876
    %2703 = vmatpush1.bf16.msra.mxu0 %v1875
    %2704 = vmatprep.subr.bf16.mxu0 %v1880
    %2705 = vmatpush1.bf16.msra.mxu0 %v1879
    %2706 = vmatprep.subr.bf16.mxu0 %v1884
    %2707 = vmatpush1.bf16.msra.mxu0 %v1883
    %2708 = vmatprep.subr.bf16.mxu0 %v1888
    %2709 = vmatpush1.bf16.msra.mxu0 %v1887
    %2710 = vmatprep.subr.bf16.mxu0 %v1892
    %2711 = vmatpush1.bf16.msra.mxu0 %v1891
    %2712 = vmatprep.subr.bf16.mxu0 %v1896
    %2713 = vmatpush1.bf16.msra.mxu0 %v1895
    %2714 = vmatprep.subr.bf16.mxu0 %v1900
    %2715 = vmatpush1.bf16.msra.mxu0 %v1899
    %2716 = vmatprep.subr.bf16.mxu0 %v1904
    %2717 = vmatpush1.bf16.msra.mxu0 %v1903
    %2718 = vmatprep.subr.bf16.mxu0 %v1908
    %2719 = vmatpush1.bf16.msra.mxu0 %v1907
    %2720 = vmatprep.subr.bf16.mxu0 %v1912
    %2721 = vmatpush1.bf16.msra.mxu0 %v1911
    %2722 = vmatprep.subr.bf16.mxu0 %v1916
    %2723 = vmatpush1.bf16.msra.mxu0 %v1915
    %2724 = vmatprep.subr.bf16.mxu0 %v1920
    %2725 = vmatpush1.bf16.msra.mxu0 %v1919
    %2726 = vmatprep.subr.bf16.mxu0 %v1924
    %2727 = vmatpush1.bf16.msra.mxu0 %v1923
    %2728 = vmatprep.subr.bf16.mxu0 %v1928
    %2729 = vmatpush1.bf16.msra.mxu0 %v1927
    %2730 = vmatprep.subr.bf16.mxu0 %v1932
    %2731 = vmatpush1.bf16.msra.mxu0 %v1931
    %2732 = vmatprep.subr.bf16.mxu0 %v1936
    %2733 = vmatpush1.bf16.msra.mxu0 %v1935
    %2734 = vmatprep.mubr.bf16.mxu0 %v2660
    %2735 = vmatmul.mubr.bf16.gmra.mrb[0].mxu0 %v2553
    %v2736 = vpop.f32.mrb[0].mxu0
    %v2737 = vadd.f32 %v1672, %v2736
    %v2738 = vpop.f32.mrb[0].mxu0
    %v2739 = vadd.f32 %v1676, %v2738
    %v2740 = vpop.f32.mrb[0].mxu0
    %v2741 = vpop.f32.mrb[0].mxu0
    %2742 = vdwg.mxu0
    %v2743 = vxor.u32 %v2696, 2147483648
    %v2744 = vmul.f32 %v2743, 1.442695
    %v2745 = vpow.pop %v2744
    %v2746 = vadd.f32 %v2745, 1.0
    %v2747 = vrcp.pop %v2746
    %v2748 = vmul.f32 1.0, %v2747
    %v2749 = vxor.u32 %v2698, 2147483648
    %v2750 = vmul.f32 %v2749, 1.442695
    %v2751 = vpow.pop %v2750
    %v2752 = vadd.f32 %v2751, 1.0
    %v2753 = vrcp.pop %v2752
    %v2754 = vmul.f32 1.0, %v2753
    %v2755 = vtanh.pop %v2737
    %v2756 = vxor.u32 %v2739, 2147483648
    %v2757 = vmul.f32 %v2756, 1.442695
    %v2758 = vpow.pop %v2757
    %v2759 = vadd.f32 %v2758, 1.0
    %v2760 = vrcp.pop %v2759
    %v2761 = vmul.f32 1.0, %v2760
    %v2762 = vmul.f32 %v2754, %v2434
    %v2763 = vmul.f32 %v2748, %v2755
    %v2764 = vadd.f32 %v2762, %v2763
    %v2765 = vtanh.pop %v2764
    %v2766 = vmul.f32 %v2761, %v2765
    %v2767 = vpack.c.bf16 %v2552, %v2552
    %v2768 = vpack.c.bf16 %v2659, %v2659
    %2769 = vmatprep.subr.bf16.mxu0 %v1137
    %2770 = vmatpush1.bf16.msra.mxu0 %v1136
    %2771 = vmatprep.subr.bf16.mxu0 %v1141
    %2772 = vmatpush1.bf16.msra.mxu0 %v1140
    %2773 = vmatprep.subr.bf16.mxu0 %v1145
    %2774 = vmatpush1.bf16.msra.mxu0 %v1144
    %2775 = vmatprep.subr.bf16.mxu0 %v1149
    %2776 = vmatpush1.bf16.msra.mxu0 %v1148
    %2777 = vmatprep.subr.bf16.mxu0 %v1153
    %2778 = vmatpush1.bf16.msra.mxu0 %v1152
    %2779 = vmatprep.subr.bf16.mxu0 %v1157
    %2780 = vmatpush1.bf16.msra.mxu0 %v1156
    %2781 = vmatprep.subr.bf16.mxu0 %v1161
    %2782 = vmatpush1.bf16.msra.mxu0 %v1160
    %2783 = vmatprep.subr.bf16.mxu0 %v1165
    %2784 = vmatpush1.bf16.msra.mxu0 %v1164
    %2785 = vmatprep.subr.bf16.mxu0 %v1169
    %2786 = vmatpush1.bf16.msra.mxu0 %v1168
    %2787 = vmatprep.subr.bf16.mxu0 %v1173
    %2788 = vmatpush1.bf16.msra.mxu0 %v1172
    %2789 = vmatprep.subr.bf16.mxu0 %v1177
    %2790 = vmatpush1.bf16.msra.mxu0 %v1176
    %2791 = vmatprep.subr.bf16.mxu0 %v1181
    %2792 = vmatpush1.bf16.msra.mxu0 %v1180
    %2793 = vmatprep.subr.bf16.mxu0 %v1185
    %2794 = vmatpush1.bf16.msra.mxu0 %v1184
    %2795 = vmatprep.subr.bf16.mxu0 %v1189
    %2796 = vmatpush1.bf16.msra.mxu0 %v1188
    %2797 = vmatprep.subr.bf16.mxu0 %v1193
    %2798 = vmatpush1.bf16.msra.mxu0 %v1192
    %2799 = vmatprep.subr.bf16.mxu0 %v1197
    %2800 = vmatpush1.bf16.msra.mxu0 %v1196
    %2801 = vmatprep.mubr.bf16.mxu0 %v2768
    %2802 = vmatmul.mubr.bf16.gmra.mrb[0].mxu0 %v2767
    %v2803 = vpop.f32.mrb[0].mxu0
    %v2804 = vadd.f32 %v927, %v2803
    %v2805 = vpop.f32.mrb[0].mxu0
    %v2806 = vadd.f32 %v931, %v2805
    %v2807 = vpop.f32.mrb[0].mxu0
    %v2808 = vpop.f32.mrb[0].mxu0
    %2809 = vdwg.mxu0
    %2810 = vmatprep.subr.bf16.mxu0 %v1139
    %2811 = vmatpush1.bf16.msra.mxu0 %v1138
    %2812 = vmatprep.subr.bf16.mxu0 %v1143
    %2813 = vmatpush1.bf16.msra.mxu0 %v1142
    %2814 = vmatprep.subr.bf16.mxu0 %v1147
    %2815 = vmatpush1.bf16.msra.mxu0 %v1146
    %2816 = vmatprep.subr.bf16.mxu0 %v1151
    %2817 = vmatpush1.bf16.msra.mxu0 %v1150
    %2818 = vmatprep.subr.bf16.mxu0 %v1155
    %2819 = vmatpush1.bf16.msra.mxu0 %v1154
    %2820 = vmatprep.subr.bf16.mxu0 %v1159
    %2821 = vmatpush1.bf16.msra.mxu0 %v1158
    %2822 = vmatprep.subr.bf16.mxu0 %v1163
    %2823 = vmatpush1.bf16.msra.mxu0 %v1162
    %2824 = vmatprep.subr.bf16.mxu0 %v1167
    %2825 = vmatpush1.bf16.msra.mxu0 %v1166
    %2826 = vmatprep.subr.bf16.mxu0 %v1171
    %2827 = vmatpush1.bf16.msra.mxu0 %v1170
    %2828 = vmatprep.subr.bf16.mxu0 %v1175
    %2829 = vmatpush1.bf16.msra.mxu0 %v1174
    %2830 = vmatprep.subr.bf16.mxu0 %v1179
    %2831 = vmatpush1.bf16.msra.mxu0 %v1178
    %2832 = vmatprep.subr.bf16.mxu0 %v1183
    %2833 = vmatpush1.bf16.msra.mxu0 %v1182
    %2834 = vmatprep.subr.bf16.mxu0 %v1187
    %2835 = vmatpush1.bf16.msra.mxu0 %v1186
    %2836 = vmatprep.subr.bf16.mxu0 %v1191
    %2837 = vmatpush1.bf16.msra.mxu0 %v1190
    %2838 = vmatprep.subr.bf16.mxu0 %v1195
    %2839 = vmatpush1.bf16.msra.mxu0 %v1194
    %2840 = vmatprep.subr.bf16.mxu0 %v1199
    %2841 = vmatpush1.bf16.msra.mxu0 %v1198
    %2842 = vmatprep.mubr.bf16.mxu0 %v2768
    %2843 = vmatmul.mubr.bf16.gmra.mrb[0].mxu0 %v2767
    %v2844 = vpop.f32.mrb[0].mxu0
    %v2845 = vadd.f32 %v935, %v2844
    %v2846 = vpop.f32.mrb[0].mxu0
    %v2847 = vadd.f32 %v939, %v2846
    %v2848 = vpop.f32.mrb[0].mxu0
    %v2849 = vpop.f32.mrb[0].mxu0
    %2850 = vdwg.mxu0
    %v2851 = vxor.u32 %v2804, 2147483648
    %v2852 = vmul.f32 %v2851, 1.442695
    %v2853 = vpow.pop %v2852
    %v2854 = vadd.f32 %v2853, 1.0
    %v2855 = vrcp.pop %v2854
    %v2856 = vmul.f32 1.0, %v2855
    %v2857 = vxor.u32 %v2806, 2147483648
    %v2858 = vmul.f32 %v2857, 1.442695
    %v2859 = vpow.pop %v2858
    %v2860 = vadd.f32 %v2859, 1.0
    %v2861 = vrcp.pop %v2860
    %v2862 = vmul.f32 1.0, %v2861
    %v2863 = vtanh.pop %v2845
    %v2864 = vxor.u32 %v2847, 2147483648
    %v2865 = vmul.f32 %v2864, 1.442695
    %v2866 = vpow.pop %v2865
    %v2867 = vadd.f32 %v2866, 1.0
    %v2868 = vrcp.pop %v2867
    %v2869 = vmul.f32 1.0, %v2868
    %v2870 = vmul.f32 %v2862, %v2657
    %v2871 = vmul.f32 %v2856, %v2863
    %v2872 = vadd.f32 %v2870, %v2871
    %v2873 = vtanh.pop %v2872
    %v2874 = vmul.f32 %v2869, %v2873
    %v2875 = vpack.c.bf16 %v2766, %v2766
    %2876 = vmatprep.subr.bf16.mxu0 %v1874
    %2877 = vmatpush1.bf16.msra.mxu0 %v1873
    %2878 = vmatprep.subr.bf16.mxu0 %v1878
    %2879 = vmatpush1.bf16.msra.mxu0 %v1877
    %2880 = vmatprep.subr.bf16.mxu0 %v1882
    %2881 = vmatpush1.bf16.msra.mxu0 %v1881
    %2882 = vmatprep.subr.bf16.mxu0 %v1886
    %2883 = vmatpush1.bf16.msra.mxu0 %v1885
    %2884 = vmatprep.subr.bf16.mxu0 %v1890
    %2885 = vmatpush1.bf16.msra.mxu0 %v1889
    %2886 = vmatprep.subr.bf16.mxu0 %v1894
    %2887 = vmatpush1.bf16.msra.mxu0 %v1893
    %2888 = vmatprep.subr.bf16.mxu0 %v1898
    %2889 = vmatpush1.bf16.msra.mxu0 %v1897
    %2890 = vmatprep.subr.bf16.mxu0 %v1902
    %2891 = vmatpush1.bf16.msra.mxu0 %v1901
    %2892 = vmatprep.subr.bf16.mxu0 %v1906
    %2893 = vmatpush1.bf16.msra.mxu0 %v1905
    %2894 = vmatprep.subr.bf16.mxu0 %v1910
    %2895 = vmatpush1.bf16.msra.mxu0 %v1909
    %2896 = vmatprep.subr.bf16.mxu0 %v1914
    %2897 = vmatpush1.bf16.msra.mxu0 %v1913
    %2898 = vmatprep.subr.bf16.mxu0 %v1918
    %2899 = vmatpush1.bf16.msra.mxu0 %v1917
    %2900 = vmatprep.subr.bf16.mxu0 %v1922
    %2901 = vmatpush1.bf16.msra.mxu0 %v1921
    %2902 = vmatprep.subr.bf16.mxu0 %v1926
    %2903 = vmatpush1.bf16.msra.mxu0 %v1925
    %2904 = vmatprep.subr.bf16.mxu0 %v1930
    %2905 = vmatpush1.bf16.msra.mxu0 %v1929
    %2906 = vmatprep.subr.bf16.mxu0 %v1934
    %2907 = vmatpush1.bf16.msra.mxu0 %v1933
    %2908 = vmatprep.mubr.bf16.mxu0 %v2875
    %2909 = vmatmul.mubr.bf16.gmra.mrb[0].mxu0 %v2768
    %v2910 = vpop.f32.mrb[0].mxu0
    %v2911 = vadd.f32 %v1664, %v2910
    %v2912 = vpop.f32.mrb[0].mxu0
    %v2913 = vadd.f32 %v1668, %v2912
    %v2914 = vpop.f32.mrb[0].mxu0
    %v2915 = vpop.f32.mrb[0].mxu0
    %2916 = vdwg.mxu0
    %2917 = vmatprep.subr.bf16.mxu0 %v1876
    %2918 = vmatpush1.bf16.msra.mxu0 %v1875
    %2919 = vmatprep.subr.bf16.mxu0 %v1880
    %2920 = vmatpush1.bf16.msra.mxu0 %v1879
    %2921 = vmatprep.subr.bf16.mxu0 %v1884
    %2922 = vmatpush1.bf16.msra.mxu0 %v1883
    %2923 = vmatprep.subr.bf16.mxu0 %v1888
    %2924 = vmatpush1.bf16.msra.mxu0 %v1887
    %2925 = vmatprep.subr.bf16.mxu0 %v1892
    %2926 = vmatpush1.bf16.msra.mxu0 %v1891
    %2927 = vmatprep.subr.bf16.mxu0 %v1896
    %2928 = vmatpush1.bf16.msra.mxu0 %v1895
    %2929 = vmatprep.subr.bf16.mxu0 %v1900
    %2930 = vmatpush1.bf16.msra.mxu0 %v1899
    %2931 = vmatprep.subr.bf16.mxu0 %v1904
    %2932 = vmatpush1.bf16.msra.mxu0 %v1903
    %2933 = vmatprep.subr.bf16.mxu0 %v1908
    %2934 = vmatpush1.bf16.msra.mxu0 %v1907
    %2935 = vmatprep.subr.bf16.mxu0 %v1912
    %2936 = vmatpush1.bf16.msra.mxu0 %v1911
    %2937 = vmatprep.subr.bf16.mxu0 %v1916
    %2938 = vmatpush1.bf16.msra.mxu0 %v1915
    %2939 = vmatprep.subr.bf16.mxu0 %v1920
    %2940 = vmatpush1.bf16.msra.mxu0 %v1919
    %2941 = vmatprep.subr.bf16.mxu0 %v1924
    %2942 = vmatpush1.bf16.msra.mxu0 %v1923
    %2943 = vmatprep.subr.bf16.mxu0 %v1928
    %2944 = vmatpush1.bf16.msra.mxu0 %v1927
    %2945 = vmatprep.subr.bf16.mxu0 %v1932
    %2946 = vmatpush1.bf16.msra.mxu0 %v1931
    %2947 = vmatprep.subr.bf16.mxu0 %v1936
    %2948 = vmatpush1.bf16.msra.mxu0 %v1935
    %2949 = vmatprep.mubr.bf16.mxu0 %v2875
    %2950 = vmatmul.mubr.bf16.gmra.mrb[0].mxu0 %v2768
    %v2951 = vpop.f32.mrb[0].mxu0
    %v2952 = vadd.f32 %v1672, %v2951
    %v2953 = vpop.f32.mrb[0].mxu0
    %v2954 = vadd.f32 %v1676, %v2953
    %v2955 = vpop.f32.mrb[0].mxu0
    %v2956 = vpop.f32.mrb[0].mxu0
    %2957 = vdwg.mxu0
    %v2958 = vxor.u32 %v2911, 2147483648
    %v2959 = vmul.f32 %v2958, 1.442695
    %v2960 = vpow.pop %v2959
    %v2961 = vadd.f32 %v2960, 1.0
    %v2962 = vrcp.pop %v2961
    %v2963 = vmul.f32 1.0, %v2962
    %v2964 = vxor.u32 %v2913, 2147483648
    %v2965 = vmul.f32 %v2964, 1.442695
    %v2966 = vpow.pop %v2965
    %v2967 = vadd.f32 %v2966, 1.0
    %v2968 = vrcp.pop %v2967
    %v2969 = vmul.f32 1.0, %v2968
    %v2970 = vtanh.pop %v2952
    %v2971 = vxor.u32 %v2954, 2147483648
    %v2972 = vmul.f32 %v2971, 1.442695
    %v2973 = vpow.pop %v2972
    %v2974 = vadd.f32 %v2973, 1.0
    %v2975 = vrcp.pop %v2974
    %v2976 = vmul.f32 1.0, %v2975
    %v2977 = vmul.f32 %v2969, %v2764
    %v2978 = vmul.f32 %v2963, %v2970
    %v2979 = vadd.f32 %v2977, %v2978
    %v2980 = vtanh.pop %v2979
    %v2981 = vmul.f32 %v2976, %v2980
    %v2982 = vpack.c.bf16 %v2874, %v2874
    %v2983 = vpack.c.bf16 %v2981, %v2981
    %2984 = vmatprep.subr.bf16.mxu0 %v1874
    %2985 = vmatpush1.bf16.msra.mxu0 %v1873
    %2986 = vmatprep.subr.bf16.mxu0 %v1878
    %2987 = vmatpush1.bf16.msra.mxu0 %v1877
    %2988 = vmatprep.subr.bf16.mxu0 %v1882
    %2989 = vmatpush1.bf16.msra.mxu0 %v1881
    %2990 = vmatprep.subr.bf16.mxu0 %v1886
    %2991 = vmatpush1.bf16.msra.mxu0 %v1885
    %2992 = vmatprep.subr.bf16.mxu0 %v1890
    %2993 = vmatpush1.bf16.msra.mxu0 %v1889
    %2994 = vmatprep.subr.bf16.mxu0 %v1894
    %2995 = vmatpush1.bf16.msra.mxu0 %v1893
    %2996 = vmatprep.subr.bf16.mxu0 %v1898
    %2997 = vmatpush1.bf16.msra.mxu0 %v1897
    %2998 = vmatprep.subr.bf16.mxu0 %v1902
    %2999 = vmatpush1.bf16.msra.mxu0 %v1901
    %3000 = vmatprep.subr.bf16.mxu0 %v1906
    %3001 = vmatpush1.bf16.msra.mxu0 %v1905
    %3002 = vmatprep.subr.bf16.mxu0 %v1910
    %3003 = vmatpush1.bf16.msra.mxu0 %v1909
    %3004 = vmatprep.subr.bf16.mxu0 %v1914
    %3005 = vmatpush1.bf16.msra.mxu0 %v1913
    %3006 = vmatprep.subr.bf16.mxu0 %v1918
    %3007 = vmatpush1.bf16.msra.mxu0 %v1917
    %3008 = vmatprep.subr.bf16.mxu0 %v1922
    %3009 = vmatpush1.bf16.msra.mxu0 %v1921
    %3010 = vmatprep.subr.bf16.mxu0 %v1926
    %3011 = vmatpush1.bf16.msra.mxu0 %v1925
    %3012 = vmatprep.subr.bf16.mxu0 %v1930
    %3013 = vmatpush1.bf16.msra.mxu0 %v1929
    %3014 = vmatprep.subr.bf16.mxu0 %v1934
    %3015 = vmatpush1.bf16.msra.mxu0 %v1933
    %3016 = vmatprep.mubr.bf16.mxu0 %v2983
    %3017 = vmatmul.mubr.bf16.gmra.mrb[0].mxu0 %v2982
    %v3018 = vpop.f32.mrb[0].mxu0
    %v3019 = vadd.f32 %v1664, %v3018
    %v3020 = vpop.f32.mrb[0].mxu0
    %v3021 = vadd.f32 %v1668, %v3020
    %v3022 = vpop.f32.mrb[0].mxu0
    %v3023 = vpop.f32.mrb[0].mxu0
    %3024 = vdwg.mxu0
    %3025 = vmatprep.subr.bf16.mxu0 %v1876
    %3026 = vmatpush1.bf16.msra.mxu0 %v1875
    %3027 = vmatprep.subr.bf16.mxu0 %v1880
    %3028 = vmatpush1.bf16.msra.mxu0 %v1879
    %3029 = vmatprep.subr.bf16.mxu0 %v1884
    %3030 = vmatpush1.bf16.msra.mxu0 %v1883
    %3031 = vmatprep.subr.bf16.mxu0 %v1888
    %3032 = vmatpush1.bf16.msra.mxu0 %v1887
    %3033 = vmatprep.subr.bf16.mxu0 %v1892
    %3034 = vmatpush1.bf16.msra.mxu0 %v1891
    %3035 = vmatprep.subr.bf16.mxu0 %v1896
    %3036 = vmatpush1.bf16.msra.mxu0 %v1895
    %3037 = vmatprep.subr.bf16.mxu0 %v1900
    %3038 = vmatpush1.bf16.msra.mxu0 %v1899
    %3039 = vmatprep.subr.bf16.mxu0 %v1904
    %3040 = vmatpush1.bf16.msra.mxu0 %v1903
    %3041 = vmatprep.subr.bf16.mxu0 %v1908
    %3042 = vmatpush1.bf16.msra.mxu0 %v1907
    %3043 = vmatprep.subr.bf16.mxu0 %v1912
    %3044 = vmatpush1.bf16.msra.mxu0 %v1911
    %3045 = vmatprep.subr.bf16.mxu0 %v1916
    %3046 = vmatpush1.bf16.msra.mxu0 %v1915
    %3047 = vmatprep.subr.bf16.mxu0 %v1920
    %3048 = vmatpush1.bf16.msra.mxu0 %v1919
    %3049 = vmatprep.subr.bf16.mxu0 %v1924
    %3050 = vmatpush1.bf16.msra.mxu0 %v1923
    %3051 = vmatprep.subr.bf16.mxu0 %v1928
    %3052 = vmatpush1.bf16.msra.mxu0 %v1927
    %3053 = vmatprep.subr.bf16.mxu0 %v1932
    %3054 = vmatpush1.bf16.msra.mxu0 %v1931
    %3055 = vmatprep.subr.bf16.mxu0 %v1936
    %3056 = vmatpush1.bf16.msra.mxu0 %v1935
    %3057 = vmatprep.mubr.bf16.mxu0 %v2983
    %3058 = vmatmul.mubr.bf16.gmra.mrb[0].mxu0 %v2982
    %v3059 = vpop.f32.mrb[0].mxu0
    %v3060 = vadd.f32 %v1672, %v3059
    %v3061 = vpop.f32.mrb[0].mxu0
    %v3062 = vadd.f32 %v1676, %v3061
    %v3063 = vpop.f32.mrb[0].mxu0
    %v3064 = vpop.f32.mrb[0].mxu0
    %3065 = vdwg.mxu0
    %v3066 = vxor.u32 %v3019, 2147483648
    %v3067 = vmul.f32 %v3066, 1.442695
    %v3068 = vpow.pop %v3067
    %v3069 = vadd.f32 %v3068, 1.0
    %v3070 = vrcp.pop %v3069
    %v3071 = vmul.f32 1.0, %v3070
    %v3072 = vxor.u32 %v3021, 2147483648
    %v3073 = vmul.f32 %v3072, 1.442695
    %v3074 = vpow.pop %v3073
    %v3075 = vadd.f32 %v3074, 1.0
    %v3076 = vrcp.pop %v3075
    %v3077 = vmul.f32 1.0, %v3076
    %v3078 = vtanh.pop %v3060
    %v3079 = vxor.u32 %v3062, 2147483648
    %v3080 = vmul.f32 %v3079, 1.442695
    %v3081 = vpow.pop %v3080
    %v3082 = vadd.f32 %v3081, 1.0
    %v3083 = vrcp.pop %v3082
    %v3084 = vmul.f32 1.0, %v3083
    %v3085 = vmul.f32 %v3077, %v2979
    %v3086 = vmul.f32 %v3071, %v3078
    %v3087 = vadd.f32 %v3085, %v3086
    %v3088 = vtanh.pop %v3087
    %v3089 = vmul.f32 %v3084, %v3088
    %v3090 = vld [vmem:[%s5] sm:$0x1]
    %v3092 = vlaneseq
    %v3093 = vshrl.u32 %v3092, 7
    %v3094 = vsub.s32 0, %v3093
    %v3095 = vrot.slane %v3090, %v3094
    %v3097 = vmul.f32 %v2106, %v3095
    %v3098 = vmul.f32 %v2436, %v3095
    %v3099 = vmul.f32 %v2766, %v3095
    %v3100 = vmul.f32 %v2981, %v3095
    %v3101 = vmul.f32 %v3089, %v3095
    %3102 = vadd.xlane.f32.xlu0 %v3097
    %v3103 = vpop.xlane.xlu0 %3102
    %3104 = vadd.xlane.f32.xlu0 %v3098
    %v3105 = vpop.xlane.xlu0 %3104
    %3106 = vadd.xlane.f32.xlu0 %v3099
    %v3107 = vpop.xlane.xlu0 %3106
    %3108 = vadd.xlane.f32.xlu0 %v3100
    %v3109 = vpop.xlane.xlu0 %3108
    %3110 = vadd.xlane.f32.xlu0 %v3101
    %v3111 = vpop.xlane.xlu0 %3110
    %v3112 = vld [vmem:[#allocation3] sm:$0x1]
    %v3114 = vlaneseq
    %v3115 = vshrl.u32 %v3114, 7
    %v3116 = vsub.s32 0, %v3115
    %v3117 = vrot.slane %v3112, %v3116
    %3118 = vset.pattern.permute.xlu0 0
    %3119 = vperm.xlu0 %3118, %v3117
    %v3120 = vpop.permute.xlu0 %3119
    %v3122 = vadd.f32 %v3103, %v3120
    %v3123 = vadd.f32 %v3105, %v3120
    %v3124 = vadd.f32 %v3107, %v3120
    %v3125 = vadd.f32 %v3109, %v3120
    %v3126 = vadd.f32 %v3111, %v3120
    %v3132 = vlaneseq
    %v3133 = vand.u32 %v3132, 127
    %v3134 = vlaneseq
    %v3135 = vshrl.u32 %v3134, 7
    %v3136 = vsub.s32 %v3133, %v3135
    %v3137 = vrot.slane %v3122, %v3136
    %v3138 = vlaneseq
    %v3139 = vshrl.u32 %v3138, 7
    %v3140 = vsub.s32 %v3133, %v3139
    %v3141 = vrot.slane %v3123, %v3140
    %v3142 = vlaneseq
    %v3143 = vshrl.u32 %v3142, 7
    %v3144 = vsub.s32 %v3133, %v3143
    %v3145 = vrot.slane %v3124, %v3144
    %v3146 = vlaneseq
    %v3147 = vshrl.u32 %v3146, 7
    %v3148 = vsub.s32 %v3133, %v3147
    %v3149 = vrot.slane %v3125, %v3148
    %v3150 = vlaneseq
    %v3151 = vshrl.u32 %v3150, 7
    %v3152 = vsub.s32 %v3133, %v3151
    %v3153 = vrot.slane %v3126, %v3152
    %vm3154 = vcmask 1041409
    %v3155 = vsel %vm3154, %v3141, %v3137
    %vm3156 = vcmask 1042434
    %v3157 = vsel %vm3156, %v3145, %v3155
    %vm3158 = vcmask 1043459
    %v3159 = vsel %vm3158, %v3149, %v3157
    %vm3160 = vcmask 1044484
    %v3161 = vsel %vm3160, %v3153, %v3159
    %vm3163 = vcmask 61440
    %3164 = vst.msk [vmem:[%s7] sm:$0x1f] %vm3163, %v3161
    // Predicated region
    $region42: #{lstm_forward.1} parent=1 // pred_check
      _
    $region43: #{lstm_forward.1} parent=1 // pred_check_branch
      %3166 = sbr.rel (0) target = $region45
    $region44: #{lstm_forward.1} parent=1 // pred_region
      _
    $region45: #{lstm_forward.1} parent=1 // pred_fallthru
      _
    // Predicated region
    $region46: #{lstm_forward.1} parent=1 // pred_check
      _
    $region47: #{lstm_forward.1} parent=1 // pred_check_branch
      %3168 = sbr.rel (0) target = $region49
    $region48: #{lstm_forward.1} parent=1 // pred_region
      _
    $region49: #{lstm_forward.1} parent=1 // pred_fallthru
      _
    %3169 = vsyncpa [#allocation5], 1
    %3170 = vsyncpa [#allocation7], 1

</llo_original>
